<compile_context>
chip_gen: v7x
topology: tpu7x:2x2x1
jax: 0.10.0
libtpu: 0.0.40
codegen_flags: <defaults>
</compile_context>

<pallas_src>
import math

import jax
import jax.numpy as jnp
from jax.experimental import pallas as pl
from jax.experimental.pallas import tpu as pltpu


def gnn_layer_kernel(p_ref, zu_ref, adj_ref, b_ref, o_ref):
    """fp32-output path: accumulate directly into the resident output block."""
    k = pl.program_id(1)

    @pl.when(k == 0)
    def _init():
        o_ref[...] = jnp.zeros_like(o_ref)

    # acc += P[:, k-tile] @ adj[k-tile, j-tile]   (fp32 MXU accumulation)
    o_ref[...] += jnp.dot(p_ref[...], adj_ref[...],
                          preferred_element_type=jnp.float32)

    @pl.when(k == pl.num_programs(1) - 1)
    def _finalize():
        # zu / bias do not depend on adj: added once per output node tile.
        o_ref[...] += zu_ref[...] + b_ref[...]


def gnn_layer_kernel_scratch(p_ref, zu_ref, adj_ref, b_ref, o_ref, acc_ref):
    """Non-fp32-output path: fp32 scratch accumulator, cast on finalize."""
    k = pl.program_id(1)

    @pl.when(k == 0)
    def _init():
        acc_ref[...] = jnp.zeros_like(acc_ref)

    acc_ref[...] += jnp.dot(p_ref[...], adj_ref[...],
                            preferred_element_type=jnp.float32)

    @pl.when(k == pl.num_programs(1) - 1)
    def _finalize():
        o_ref[...] = (acc_ref[...] + zu_ref[...] + b_ref[...]).astype(o_ref.dtype)


def _pick_tile(n, target):
    """Largest 128-multiple tile <= target that divides n (falls back to n)."""
    if n <= target:
        return n
    t = (target // 128) * 128
    while t >= 128:
        if n % t == 0:
            return t
        t -= 128
    # TODO(synk): add a masked partial-tile path for N with no 128-multiple
    # divisor instead of falling back to a full-array block.
    return n


def _select_tiles(n, tn, tk):
    if tn is None and tk is None and n <= 1024:
        # Small-N fast path: whole adj row-band in one reduction step; keep
        # 2 parallel node tiles when cleanly divisible so v7x's second
        # TensorCore is still used.
        tk_sel = n
        tn_sel = n // 2 if (n % 256 == 0) else n
        return tn_sel, tk_sel
    # Large-N defaults: ~1024 adj tiles hit ~86% of HBM roofline on v6e and
    # keep DMA rows long; v5e/v7x work too since the limit below is computed.
    tn_sel = _pick_tile(n, tn if tn is not None else 1024)
    tk_sel = _pick_tile(n, tk if tk is not None else 1024)
    return tn_sel, tk_sel


def _vmem_limit_bytes(tn, tk, out_d, adj_itemsize, p_itemsize, out_itemsize,
                      use_scratch):
    """Scoped-VMEM limit sized from the real tile footprint, not a blanket 48MiB."""
    need = (2 * tk * tn * adj_itemsize        # double-buffered adj tile
            + 2 * out_d * tk * p_itemsize     # double-buffered P tile
            + 2 * out_d * tn * 4              # double-buffered ZU tile (fp32)
            + 2 * out_d * tn * out_itemsize   # double-buffered output tile
            + 2 * out_d * 4)                  # bias
    if use_scratch:
        need += out_d * tn * 4
    # 2x headroom + compiler scratch; floor at the v5e scoped default, cap
    # well under v7x's 64 MiB physical VMEM.
    return int(min(max(2 * need + (8 << 20), 16 << 20), 48 << 20))


def gnn_layer(x, adj, weight_u, weight_v, bias, *, tn=None, tk=None,
              compute_dtype=jnp.bfloat16):
    in_d, n = x.shape
    out_d = weight_u.shape[1]
    assert adj.shape == (n, n)

    out_dtype = x.dtype
    if compute_dtype is None:
        compute_dtype = jnp.float32

    # --- Wrapper pre-projection (tiny; removes X / W from the kernel) -------
    x32 = x.astype(jnp.float32)
    hi = jax.lax.Precision.HIGHEST
    p = jnp.dot(weight_v.T.astype(jnp.float32), x32, precision=hi)   # (out_d, N)
    zu = jnp.dot(weight_u.T.astype(jnp.float32), x32, precision=hi)  # (out_d, N)
    bias2d = bias.reshape(out_d, 1).astype(jnp.float32)

    # Single cast (no double rounding) of the operands of the N^2 contraction.
    p = p.astype(compute_dtype)
    adj_c = adj.astype(compute_dtype)

    # --- Tiling / grid -------------------------------------------------------
    tn, tk = _select_tiles(n, tn, tk)
    assert n % tn == 0 and n % tk == 0, (n, tn, tk)
    grid = (n // tn, n // tk)

    use_scratch = jnp.dtype(out_dtype) != jnp.dtype(jnp.float32)
    kernel = gnn_layer_kernel_scratch if use_scratch else gnn_layer_kernel
    scratch_shapes = ([pltpu.VMEM((out_d, tn), jnp.float32)]
                      if use_scratch else [])

    vmem_limit = _vmem_limit_bytes(
        tn, tk, out_d,
        adj_itemsize=jnp.dtype(compute_dtype).itemsize,
        p_itemsize=jnp.dtype(compute_dtype).itemsize,
        out_itemsize=jnp.dtype(out_dtype).itemsize,
        use_scratch=use_scratch)

    return pl.pallas_call(
        kernel,
        out_shape=jax.ShapeDtypeStruct((out_d, n), out_dtype),
        grid_spec=pltpu.PrefetchScalarGridSpec(
            num_scalar_prefetch=0,
            grid=grid,
            in_specs=[
                # P[:, k-tile]  : small, feeds the MXU against adj.
                pl.BlockSpec((out_d, tk), lambda j, k: (0, k)),
                # ZU[:, j-tile] : only read in the finalize branch.
                pl.BlockSpec((out_d, tn), lambda j, k: (0, j)),
                # adj tile (tk, tn): the dominant HBM stream, double-buffered.
                pl.BlockSpec((tk, tn), lambda j, k: (k, j)),
                # Bias (out_d, 1): tiny, finalize-only.
                pl.BlockSpec((out_d, 1), lambda j, k: (0, 0)),
            ],
            out_specs=pl.BlockSpec((out_d, tn), lambda j, k: (0, j)),
            scratch_shapes=scratch_shapes,
        ),
        compiler_params=pltpu.CompilerParams(
            # Node-tile axis shards across TensorCores (v7x megacore);
            # the reduction axis stays serial and last.
            dimension_semantics=("parallel", "arbitrary"),
            vmem_limit_bytes=vmem_limit,
        ),
    )(p, zu, adj_c, bias2d)


def reference(x, adj, weight_u, weight_v, bias):
    zu = (weight_u.T @ x).T
    zv = (weight_v.T @ (x @ adj)).T
    hk = zu + zv + bias
    return hk.T


if __name__ == "__main__":
    # Make the fp32 reference matmuls true fp32 so the exact-path comparison
    # is well defined on TPU.
    jax.config.update("jax_default_matmul_precision", "highest")

    in_d, out_d, n_nodes = 32, 16, 512

    key = jax.random.PRNGKey(0)
    k_x, k_adj, k_wu, k_wv, k_b = jax.random.split(key, 5)

    # Deterministic parameter init matching the nn.Module __init__:
    # uniform(-std, std) with std = 1/sqrt(out_d)
    std = 1.0 / math.sqrt(out_d)
    weight_u = jax.random.uniform(k_wu, (in_d, out_d), jnp.float32, -std, std)
    weight_v = jax.random.uniform(k_wv, (in_d, out_d), jnp.float32, -std, std)
    bias = jax.random.uniform(k_b, (out_d,), jnp.float32, -std, std)

    # Inputs: X is (in_d, N) node-feature matrix, adj is (N, N).
    x = jax.random.normal(k_x, (in_d, n_nodes), jnp.float32)
    adj = jax.random.uniform(k_adj, (n_nodes, n_nodes), jnp.float32)

    ref = reference(x, adj, weight_u, weight_v, bias)

    # 1) Exact fp32 path, small-N fast path: grid (2, 1) — two parallel node
    #    tiles (megacore) and a single reduction step (no per-step overhead).
    out = gnn_layer(x, adj, weight_u, weight_v, bias, compute_dtype=jnp.float32)
    out = jax.block_until_ready(out)
    assert out.shape == (out_d, n_nodes)
    assert jnp.allclose(out, ref, atol=2e-4, rtol=1e-4), "fp32 fast path mismatch"

    # 2) Exact fp32 path with an explicit multi-step reduction grid (2, 4) to
    #    exercise the k-axis accumulation logic.
    out_tiled = gnn_layer(x, adj, weight_u, weight_v, bias, tn=256, tk=128,
                          compute_dtype=jnp.float32)
    out_tiled = jax.block_until_ready(out_tiled)
    assert jnp.allclose(out_tiled, ref, atol=2e-4, rtol=1e-4), "fp32 tiled mismatch"

    # 3) Default bf16-streaming path: adj / P cast once in the wrapper (half
    #    the HBM bytes on the dominant operand), fp32 MXU accumulation.
    out_bf16 = gnn_layer(x, adj, weight_u, weight_v, bias)
    out_bf16 = jax.block_until_ready(out_bf16)
    assert out_bf16.shape == (out_d, n_nodes)
    assert jnp.allclose(out_bf16, ref, atol=1.0, rtol=5e-2), "bf16 path mismatch"

    print("KERNEL_OK")
</pallas_src>

<mosaic_0001>
module attributes {stable_mosaic.version = 11 : i64} {
  func.func @gnn_layer_kernel(%arg0: i32, %arg1: i32, %arg2: memref<16x512xf32, #tpu.memory_space<vmem>>, %arg3: memref<16x256xf32, #tpu.memory_space<vmem>>, %arg4: memref<512x256xf32, #tpu.memory_space<vmem>>, %arg5: memref<16x1xf32, #tpu.memory_space<vmem>>, %arg6: memref<16x256xf32, #tpu.memory_space<vmem>>) attributes {dimension_semantics = [#tpu.dimension_semantics<parallel>, #tpu.dimension_semantics<arbitrary>], iteration_bounds = array<i64: 2, 1>, scalar_prefetch = 0 : i64, scratch_operands = 0 : i64, tpu.core_type = #tpu.core_type<tc>, window_params = [{transform_indices = @transform_0, window_bounds = array<i64: 16, 512>}, {transform_indices = @transform_1, window_bounds = array<i64: 16, 256>}, {transform_indices = @transform_2, window_bounds = array<i64: 512, 256>}, {pipeline_mode = #tpu.pipeline_mode<synchronous>, transform_indices = @transform_3, window_bounds = array<i64: 16, 1>}, {transform_indices = @transform_4, window_bounds = array<i64: 16, 256>}]} {
    %c0_i32 = arith.constant 0 : i32
    %0 = arith.cmpi eq, %arg1, %c0_i32 : i32
    %1 = arith.extui %0 : i1 to i32
    %c0_i32_0 = arith.constant 0 : i32
    %2 = arith.cmpi ne, %1, %c0_i32_0 : i32
    scf.if %2 {
      %cst_10 = arith.constant 0.000000e+00 : f32
      %12 = vector.broadcast %cst_10 : f32 to vector<16x256xf32>
      %c0_11 = arith.constant 0 : index
      %c0_12 = arith.constant 0 : index
      %13 = vector.load %arg6[%c0_11, %c0_12] : memref<16x256xf32, #tpu.memory_space<vmem>>, vector<16x256xf32>
      tpu.vector_store %arg6[%c0_11, %c0_12], %12 {strides = array<i32>} : memref<16x256xf32, #tpu.memory_space<vmem>>, vector<16x256xf32>,
    } else {
    }
    %c0 = arith.constant 0 : index
    %c0_1 = arith.constant 0 : index
    %3 = vector.load %arg6[%c0, %c0_1] : memref<16x256xf32, #tpu.memory_space<vmem>>, vector<16x256xf32>
    %c0_2 = arith.constant 0 : index
    %c0_3 = arith.constant 0 : index
    %4 = vector.load %arg2[%c0_2, %c0_3] : memref<16x512xf32, #tpu.memory_space<vmem>>, vector<16x512xf32>
    %c0_4 = arith.constant 0 : index
    %c0_5 = arith.constant 0 : index
    %5 = vector.load %arg4[%c0_4, %c0_5] : memref<512x256xf32, #tpu.memory_space<vmem>>, vector<512x256xf32>
    %cst = arith.constant dense<0.000000e+00> : vector<16x256xf32>
    %6 = tpu.matmul %4, %5, %cst {dimension_numbers = #tpu.dot_dimension_numbers<[1], [0], [0], [1], [0, 0, 1, 1], [], []>, precision = #tpu.contract_precision<fp32>} : vector<16x512xf32>, vector<512x256xf32>, vector<16x256xf32> -> vector<16x256xf32>
    %7 = arith.addf %3, %6 : vector<16x256xf32>
    %c0_6 = arith.constant 0 : index
    %c0_7 = arith.constant 0 : index
    %8 = vector.load %arg6[%c0_6, %c0_7] : memref<16x256xf32, #tpu.memory_space<vmem>>, vector<16x256xf32>
    tpu.vector_store %arg6[%c0_6, %c0_7], %7 {strides = array<i32>} : memref<16x256xf32, #tpu.memory_space<vmem>>, vector<16x256xf32>,
    %c0_i32_8 = arith.constant 0 : i32
    %9 = arith.cmpi eq, %arg1, %c0_i32_8 : i32
    %10 = arith.extui %9 : i1 to i32
    %c0_i32_9 = arith.constant 0 : i32
    %11 = arith.cmpi ne, %10, %c0_i32_9 : i32
    scf.if %11 {
      %c0_10 = arith.constant 0 : index
      %c0_11 = arith.constant 0 : index
      %12 = vector.load %arg6[%c0_10, %c0_11] : memref<16x256xf32, #tpu.memory_space<vmem>>, vector<16x256xf32>
      %c0_12 = arith.constant 0 : index
      %c0_13 = arith.constant 0 : index
      %13 = vector.load %arg3[%c0_12, %c0_13] : memref<16x256xf32, #tpu.memory_space<vmem>>, vector<16x256xf32>
      %c0_14 = arith.constant 0 : index
      %c0_15 = arith.constant 0 : index
      %14 = vector.load %arg5[%c0_14, %c0_15] : memref<16x1xf32, #tpu.memory_space<vmem>>, vector<16x1xf32>
      %15 = vector.broadcast %14 : vector<16x1xf32> to vector<16x256xf32>
      %16 = arith.addf %13, %15 : vector<16x256xf32>
      %17 = arith.addf %12, %16 : vector<16x256xf32>
      %c0_16 = arith.constant 0 : index
      %c0_17 = arith.constant 0 : index
      %18 = vector.load %arg6[%c0_16, %c0_17] : memref<16x256xf32, #tpu.memory_space<vmem>>, vector<16x256xf32>
      tpu.vector_store %arg6[%c0_16, %c0_17], %17 {strides = array<i32>} : memref<16x256xf32, #tpu.memory_space<vmem>>, vector<16x256xf32>,
    } else {
    }
    return
  }
  func.func @transform_0(%arg0: i32, %arg1: i32) -> (i32, i32) {
    %c0_i32 = arith.constant 0 : i32
    %c0_i32_0 = arith.constant 0 : i32
    return %c0_i32, %arg1 : i32, i32
  }
  func.func @transform_1(%arg0: i32, %arg1: i32) -> (i32, i32) {
    %c0_i32 = arith.constant 0 : i32
    %c0_i32_0 = arith.constant 0 : i32
    return %c0_i32, %arg0 : i32, i32
  }
  func.func @transform_2(%arg0: i32, %arg1: i32) -> (i32, i32) {
    %c0_i32 = arith.constant 0 : i32
    return %arg1, %arg0 : i32, i32
  }
  func.func @transform_3(%arg0: i32, %arg1: i32) -> (i32, i32) {
    %c0_i32 = arith.constant 0 : i32
    %c0_i32_0 = arith.constant 0 : i32
    %c0_i32_1 = arith.constant 0 : i32
    return %c0_i32, %c0_i32_0 : i32, i32
  }
  func.func @transform_4(%arg0: i32, %arg1: i32) -> (i32, i32) {
    %c0_i32 = arith.constant 0 : i32
    %c0_i32_0 = arith.constant 0 : i32
    return %c0_i32, %arg0 : i32, i32
  }
}

</mosaic_0001>

<llo_original>
// kernel: tpu_custom_call.1
$region0: #{tpu_custom_call.1}
  #allocation0 [shape = 'u32[]', space=smem, size = 0x4, offset = 0x4, fixed_abs, tag = 'smem constant byte address 0x4 - core index']
  #allocation1 [shape = 'u32[144,128]{1,0:T(1,128)}', space=vmem, size = 0x12000, scoped, tag = 'internal scratch']
  %s0 = inlined_call_operand.hbm [shape: f32[16,512], index: 0, kind: input, shape index: {}]
  %s1 = inlined_call_operand.hbm [shape: f32[16,512], index: 1, kind: input, shape index: {}]
  %s2 = inlined_call_operand.hbm [shape: f32[512,512], index: 2, kind: input, shape index: {}]
  %s3 = inlined_call_operand.vmem [shape: f32[16,1], index: 3, kind: input, shape index: {}]
  %s4 = inlined_call_operand.hbm [shape: f32[16,512], index: 4, kind: output, shape index: {}]
  %s5 = sld [smem:[#allocation0]]
  $region69: #{tpu_custom_call.1} parent=0
    _
  %s7 = ssub.s32 1, %s5
  %s8 = scalar_select 0, %s7, %s5
  $region1: #{tpu_custom_call.1} parent=0
    #allocation2 [shape = 'u8[32768]{0}', space=vmem, size = 0x8000, scoped, tag = 'input window, operand 0, single buffered']
    #allocation3 [shape = 's32[2]{0}', space=sflag, size = 0x8, scoped, tag = 'scoped memory for tpu_custom_call.1']
    #allocation4 [shape = 's32[2]{0}', space=sflag, size = 0x8, scoped, tag = 'scoped memory for tpu_custom_call.1']
    #allocation5 [shape = 'u8[32768]{0}', space=vmem, size = 0x8000, scoped, tag = 'input window, operand 1']
    #allocation6 [shape = 's32[2]{0}', space=sflag, size = 0x8, scoped, tag = 'scoped memory for tpu_custom_call.1']
    #allocation7 [shape = 'u8[1048576]{0}', space=vmem, size = 0x100000, scoped, tag = 'input window, operand 2']
    #allocation8 [shape = 'u8[32768]{0}', space=vmem, size = 0x8000, scoped, tag = 'output window, operand 0']
    %9 = vsyncpa [#allocation3], 0
    %10 = vsyncpa [#allocation6], 0
    %s11 = scalar_lea.sflag [#allocation6], 1
    %12 = vsyncpa %s11, 0
    %13 = vsyncpa [#allocation4], 0
    %s14 = scalar_lea.sflag [#allocation4], 1
    %15 = vsyncpa %s14, 0
    loop: start=0, step=1, limit=4
    $region2: #{tpu_custom_call.1} parent=1 // loop_pre_header
      _
    $region3: #{tpu_custom_call.1} parent=1 // loop_header
      %s17 = sphi 0, %s21
      %p18 = scmp.ge.s32.totalorder %s17, 4
      %s24 = sphi 0, %s36
      %s25 = sphi 0, %s32
      %s26 = sphi 0, %s24
      %s27 = sphi 0, %s25
      %s28 = sphi 0, %s26
      %s29 = sphi 0, %s27
      %s39 = sphi 0, %s41
      %s42 = sphi 0, %s39
      %s43 = sphi 0, %s42
      %s59 = sphi 0, %s43
      %s65 = sphi 0, %s67
      %s68 = sphi 0, %s65
      %s69 = sphi 0, %s68
      %s85 = sphi 0, %s69
      %s93 = sphi 0, %s95
      %s96 = sphi 0, %s93
      %s97 = sphi 0, %s96
      %s113 = sphi 0, %s97
      %s117 = sphi 0, %s117
      %s119 = sphi 0, %s117
      %s120 = sphi 0, %s119
      %s134 = sphi 0, %s120
      %s140 = sphi 0, %s142
      %s143 = sphi 0, %s140
      %s144 = sphi 0, %s143
      %s160 = sphi 0, %s144
    $region4: #{tpu_custom_call.1} parent=1 // loop_header_branch
      %20 = sbr.rel (%p18) target = $region8
    $region5: #{tpu_custom_call.1} parent=1 // loop_body
      %s22 = ssub.s32 %s17, 1
      %s23 = ssub.s32 %s17, 2
      %s30 = sadd.s32 1, %s25
      %p31 = scmp.ge.s32.totalorder %s30, 1
      %s32 = scalar_select %p31, 0, %s30
      %s33 = sadd.s32 1, %s24
      %s34 = scalar_select %p31, %s33, %s24
      %p35 = scmp.ge.s32.totalorder %s34, 2
      %s36 = scalar_select %p35, 0, %s34
      %s37 = ssub.s32 %s25, %s32
      %p38 = scmp.eq.s32.totalorder %s37, 0
      %s40 = sadd.s32 %s39, 1
      %s41 = scalar_select %p38, %s39, %s40
      %p44 = pneg %p38
      %p45 = scmp.eq.s32.totalorder %s17, 1
      %p46 = por %p44, %p45
      %p47 = scmp.ne.s32.totalorder %s39, %s42
      %p48 = scmp.eq.s32.totalorder %s17, 0
      %p49 = por %p47, %p48
      %p50 = scmp.ne.s32.totalorder %s39, %s42
      %p51 = scmp.eq.s32.totalorder %s22, 1
      %p52 = por %p50, %p51
      %p53 = scmp.ne.s32.totalorder %s42, %s43
      %p54 = scmp.eq.s32.totalorder %s22, 0
      %p55 = por %p53, %p54
      %p56 = scmp.ne.s32.totalorder %s42, %s43
      %p57 = scmp.eq.s32.totalorder %s23, 1
      %p58 = por %p56, %p57
      %p60 = scmp.ne.s32.totalorder %s43, %s59
      %p61 = scmp.eq.s32.totalorder %s23, 0
      %p62 = por %p60, %p61
      %s63 = ssub.s32 %s24, %s36
      %p64 = scmp.eq.s32.totalorder %s63, 0
      %s66 = sadd.s32 %s65, 1
      %s67 = scalar_select %p64, %s65, %s66
      %p70 = pneg %p64
      %p71 = scmp.eq.s32.totalorder %s17, 1
      %p72 = por %p70, %p71
      %p73 = scmp.ne.s32.totalorder %s65, %s68
      %p74 = scmp.eq.s32.totalorder %s17, 0
      %p75 = por %p73, %p74
      %p76 = scmp.ne.s32.totalorder %s65, %s68
      %p77 = scmp.eq.s32.totalorder %s22, 1
      %p78 = por %p76, %p77
      %p79 = scmp.ne.s32.totalorder %s68, %s69
      %p80 = scmp.eq.s32.totalorder %s22, 0
      %p81 = por %p79, %p80
      %p82 = scmp.ne.s32.totalorder %s68, %s69
      %p83 = scmp.eq.s32.totalorder %s23, 1
      %p84 = por %p82, %p83
      %p86 = scmp.ne.s32.totalorder %s69, %s85
      %p87 = scmp.eq.s32.totalorder %s23, 0
      %p88 = por %p86, %p87
      %s89 = ssub.s32 %s25, %s32
      %s90 = ssub.s32 %s24, %s36
      %s91 = sor.u32 %s89, %s90
      %p92 = scmp.eq.s32.totalorder %s91, 0
      %s94 = sadd.s32 %s93, 1
      %s95 = scalar_select %p92, %s93, %s94
      %p98 = pneg %p92
      %p99 = scmp.eq.s32.totalorder %s17, 1
      %p100 = por %p98, %p99
      %p101 = scmp.ne.s32.totalorder %s93, %s96
      %p102 = scmp.eq.s32.totalorder %s17, 0
      %p103 = por %p101, %p102
      %p104 = scmp.ne.s32.totalorder %s93, %s96
      %p105 = scmp.eq.s32.totalorder %s22, 1
      %p106 = por %p104, %p105
      %p107 = scmp.ne.s32.totalorder %s96, %s97
      %p108 = scmp.eq.s32.totalorder %s22, 0
      %p109 = por %p107, %p108
      %p110 = scmp.ne.s32.totalorder %s96, %s97
      %p111 = scmp.eq.s32.totalorder %s23, 1
      %p112 = por %p110, %p111
      %p114 = scmp.ne.s32.totalorder %s97, %s113
      %p115 = scmp.eq.s32.totalorder %s23, 0
      %p116 = por %p114, %p115
      %s118 = sadd.s32 %s117, 1
      %p121 = scmp.eq.s32.totalorder %s17, 1
      %p122 = scmp.ne.s32.totalorder %s117, %s119
      %p123 = scmp.eq.s32.totalorder %s17, 0
      %p124 = por %p122, %p123
      %p125 = scmp.ne.s32.totalorder %s117, %s119
      %p126 = scmp.eq.s32.totalorder %s22, 1
      %p127 = por %p125, %p126
      %p128 = scmp.ne.s32.totalorder %s119, %s120
      %p129 = scmp.eq.s32.totalorder %s22, 0
      %p130 = por %p128, %p129
      %p131 = scmp.ne.s32.totalorder %s119, %s120
      %p132 = scmp.eq.s32.totalorder %s23, 1
      %p133 = por %p131, %p132
      %p135 = scmp.ne.s32.totalorder %s120, %s134
      %p136 = scmp.eq.s32.totalorder %s23, 0
      %p137 = por %p135, %p136
      %s138 = ssub.s32 %s24, %s36
      %p139 = scmp.eq.s32.totalorder %s138, 0
      %s141 = sadd.s32 %s140, 1
      %s142 = scalar_select %p139, %s140, %s141
      %p145 = pneg %p139
      %p146 = scmp.eq.s32.totalorder %s17, 1
      %p147 = por %p145, %p146
      %p148 = scmp.ne.s32.totalorder %s140, %s143
      %p149 = scmp.eq.s32.totalorder %s17, 0
      %p150 = por %p148, %p149
      %p151 = scmp.ne.s32.totalorder %s140, %s143
      %p152 = scmp.eq.s32.totalorder %s22, 1
      %p153 = por %p151, %p152
      %p154 = scmp.ne.s32.totalorder %s143, %s144
      %p155 = scmp.eq.s32.totalorder %s22, 0
      %p156 = por %p154, %p155
      %p157 = scmp.ne.s32.totalorder %s143, %s144
      %p158 = scmp.eq.s32.totalorder %s23, 1
      %p159 = por %p157, %p158
      %p161 = scmp.ne.s32.totalorder %s144, %s160
      %p162 = scmp.eq.s32.totalorder %s23, 0
      %p163 = por %p161, %p162
      %p164 = scmp.le.s32.totalorder 1, %s17
      %p165 = scmp.lt.s32.totalorder %s17, 3
      %p166 = pnand %p164, %p165
      %p167 = pneg %p166
      // Predicated region
      $region9: #{tpu_custom_call.1} parent=5 // pred_check
        _
      $region10: #{tpu_custom_call.1} parent=5 // pred_check_branch
        %169 = sbr.rel (%p166) target = $region12
      $region11: #{tpu_custom_call.1} parent=5 // pred_region
        %s170 = ssub.s32 %s17, 1
        // Predicated region
        $region13: #{tpu_custom_call.1} parent=11 // pred_check
          %p171 = pneg %p55
        $region14: #{tpu_custom_call.1} parent=11 // pred_check_branch
          %173 = sbr.rel (%p171) target = $region16
        $region15: #{tpu_custom_call.1} parent=11 // pred_region
          %s174 = smul.u32 4, %s27
          %s176 = ssub.s32 1024, 1024
          %177 = vsyncadd [#allocation3], %s176
          %s178 = smul.addr %s174, 128
          %s179 = scalar_lea.hbm %s0, %s178
          %s180 = sshll.u32 [#allocation2], 4
          %s181 = int_to_ptr.vmem [resolvable:$true] %s180
          %186 = dma.hbm_to_vmem [thread:$0]  %s179, 1024, %s181, [#allocation3], 512, 512, 32
        $region16: #{tpu_custom_call.1} parent=11 // pred_fallthru
          _
        // Predicated region
        $region17: #{tpu_custom_call.1} parent=11 // pred_check
          %p187 = pneg %p130
        $region18: #{tpu_custom_call.1} parent=11 // pred_check_branch
          %189 = sbr.rel (%p187) target = $region20
        $region19: #{tpu_custom_call.1} parent=11 // pred_region
          _
        $region20: #{tpu_custom_call.1} parent=11 // pred_fallthru
          _
      $region12: #{tpu_custom_call.1} parent=5 // pred_fallthru
        _
      %p190 = scmp.lt.s32.totalorder %s17, 2
      // Predicated region
      $region21: #{tpu_custom_call.1} parent=5 // pred_check
        %p191 = pneg %p190
      $region22: #{tpu_custom_call.1} parent=5 // pred_check_branch
        %193 = sbr.rel (%p191) target = $region24
      $region23: #{tpu_custom_call.1} parent=5 // pred_region
        // Predicated region
        $region25: #{tpu_custom_call.1} parent=23 // pred_check
          %p194 = pneg %p75
        $region26: #{tpu_custom_call.1} parent=23 // pred_check_branch
          %196 = sbr.rel (%p194) target = $region28
        $region27: #{tpu_custom_call.1} parent=23 // pred_region
          %s197 = sand.u32 %s17, 1
          %s198 = scalar_lea.sflag [#allocation6], %s197
          %s199 = sand.u32 %s65, 1
          %s200 = smul.addr %s199, 32
          %s201 = scalar_lea.vmem [#allocation5], %s200
          %s202 = smul.u32 2, %s24
          %s204 = ssub.s32 512, 512
          %205 = vsyncadd %s198, %s204
          %s206 = smul.addr %s202, 128
          %s207 = scalar_lea.hbm %s1, %s206
          %s208 = sshll.u32 %s201, 4
          %s209 = int_to_ptr.vmem [resolvable:$true] %s208
          %214 = dma.hbm_to_vmem [thread:$0]  %s207, 512, %s209, %s198, 512, 256, 16
        $region28: #{tpu_custom_call.1} parent=23 // pred_fallthru
          _
        // Predicated region
        $region29: #{tpu_custom_call.1} parent=23 // pred_check
          %p215 = pneg %p103
        $region30: #{tpu_custom_call.1} parent=23 // pred_check_branch
          %217 = sbr.rel (%p215) target = $region32
        $region31: #{tpu_custom_call.1} parent=23 // pred_region
          %s218 = sand.u32 %s17, 1
          %s219 = scalar_lea.sflag [#allocation6], %s218
          %s220 = sand.u32 %s93, 1
          %s221 = smul.addr %s220, 1024
          %s222 = scalar_lea.vmem [#allocation7], %s221
          %s223 = smul.u32 64, %s25
          %s224 = smul.u32 2, %s24
          %s226 = ssub.s32 16384, 16384
          %227 = vsyncadd %s219, %s226
          %s228 = smul.addr %s223, 4
          %s229 = sadd.s32 %s224, %s228
          %s230 = smul.addr %s229, 128
          %s231 = scalar_lea.hbm %s2, %s230
          %s232 = sshll.u32 %s222, 4
          %s233 = int_to_ptr.vmem [resolvable:$true] %s232
          %238 = dma.hbm_to_vmem [thread:$0]  %s231, 16384, %s233, %s219, 512, 256, 16
        $region32: #{tpu_custom_call.1} parent=23 // pred_fallthru
          _
      $region24: #{tpu_custom_call.1} parent=5 // pred_fallthru
        _
      %p239 = scmp.le.s32.totalorder 1, %s17
      %p240 = scmp.lt.s32.totalorder %s17, 3
      %p241 = pnand %p239, %p240
      %p242 = pneg %p241
      // Predicated region
      $region33: #{tpu_custom_call.1} parent=5 // pred_check
        _
      $region34: #{tpu_custom_call.1} parent=5 // pred_check_branch
        %244 = sbr.rel (%p241) target = $region36
      $region35: #{tpu_custom_call.1} parent=5 // pred_region
        %s245 = ssub.s32 %s17, 1
        // Predicated region
        $region37: #{tpu_custom_call.1} parent=35 // pred_check
          %p246 = pneg %p55
        $region38: #{tpu_custom_call.1} parent=35 // pred_check_branch
          %248 = sbr.rel (%p246) target = $region40
        $region39: #{tpu_custom_call.1} parent=35 // pred_region
          %249 = dma.done [#allocation3], 1024
        $region40: #{tpu_custom_call.1} parent=35 // pred_fallthru
          _
        %s250 = sand.u32 %s22, 1
        %s251 = scalar_lea.sflag [#allocation6], %s250
        %s252 = sand.u32 %s68, 1
        %s253 = smul.addr %s252, 32
        %s254 = scalar_lea.vmem [#allocation5], %s253
        // Predicated region
        $region41: #{tpu_custom_call.1} parent=35 // pred_check
          %p255 = pneg %p81
        $region42: #{tpu_custom_call.1} parent=35 // pred_check_branch
          %257 = sbr.rel (%p255) target = $region44
        $region43: #{tpu_custom_call.1} parent=35 // pred_region
          %258 = dma.done %s251, 512
        $region44: #{tpu_custom_call.1} parent=35 // pred_fallthru
          _
        %s259 = sand.u32 %s22, 1
        %s260 = scalar_lea.sflag [#allocation6], %s259
        %s261 = sand.u32 %s96, 1
        %s262 = smul.addr %s261, 1024
        %s263 = scalar_lea.vmem [#allocation7], %s262
        // Predicated region
        $region45: #{tpu_custom_call.1} parent=35 // pred_check
          %p264 = pneg %p109
        $region46: #{tpu_custom_call.1} parent=35 // pred_check_branch
          %266 = sbr.rel (%p264) target = $region48
        $region47: #{tpu_custom_call.1} parent=35 // pred_region
          %267 = dma.done %s260, 16384
        $region48: #{tpu_custom_call.1} parent=35 // pred_fallthru
          _
        %p268 = pneg %p55
        %p269 = pneg %p52
        %s270 = sand.u32 %s22, 1
        %s271 = scalar_lea.sflag [#allocation6], %s270
        %s272 = sand.u32 %s68, 1
        %s273 = smul.addr %s272, 32
        %s274 = scalar_lea.vmem [#allocation5], %s273
        %p275 = pneg %p81
        %p276 = pneg %p78
        %s277 = sand.u32 %s22, 1
        %s278 = scalar_lea.sflag [#allocation6], %s277
        %s279 = sand.u32 %s96, 1
        %s280 = smul.addr %s279, 1024
        %s281 = scalar_lea.vmem [#allocation7], %s280
        %p282 = pneg %p109
        %p283 = pneg %p106
        %p284 = pneg %p130
        %p285 = pneg %p127
        %p286 = pneg %p156
        %p287 = pneg %p153
        %s288 = sand.u32 %s143, 1
        %s289 = scalar_lea.sflag [#allocation4], %s288
        %s290 = sand.u32 %s143, 1
        %s291 = smul.addr %s290, 32
        %s292 = scalar_lea.vmem [#allocation8], %s291
        %s293 = smul.u32 4, %s27
        %s294 = smul.u32 2, %s26
        %s295 = smul.u32 64, %s27
        %s296 = smul.u32 2, %s26
        %s297 = smul.u32 2, %s26
        %p298 = scmp.eq.s32.totalorder %s27, 0
        // Predicated region
        $region49: #{tpu_custom_call.1} parent=35 // pred_check
          %p299 = pneg %p298
        $region50: #{tpu_custom_call.1} parent=35 // pred_check_branch
          %301 = sbr.rel (%p299) target = $region52
        $region51: #{tpu_custom_call.1} parent=35 // pred_region
          %302 = vst [vmem:[%s292] sm:$0xff] 0.0
          %303 = vst [vmem:[%s292 + $0x8] sm:$0xff] 0.0
          %304 = vst [vmem:[%s292 + $0x10] sm:$0xff] 0.0
          %305 = vst [vmem:[%s292 + $0x18] sm:$0xff] 0.0
        $region52: #{tpu_custom_call.1} parent=35 // pred_fallthru
          _
        %v306 = vld [vmem:[%s292] sm:$0xff]
        %v307 = vld [vmem:[%s292 + $0x8] sm:$0xff]
        %v308 = vld [vmem:[%s292 + $0x10] sm:$0xff]
        %v309 = vld [vmem:[%s292 + $0x18] sm:$0xff]
        %v310 = vld [vmem:[#allocation2] sm:$0xff]
        %v311 = vld [vmem:[#allocation2 + $0x8] sm:$0xff]
        %v312 = vld [vmem:[#allocation2 + $0x10] sm:$0xff]
        %v313 = vld [vmem:[#allocation2 + $0x18] sm:$0xff]
        %v314 = vld [vmem:[#allocation2 + $0x20] sm:$0xff]
        %v315 = vld [vmem:[#allocation2 + $0x28] sm:$0xff]
        %v316 = vld [vmem:[#allocation2 + $0x30] sm:$0xff]
        %v317 = vld [vmem:[#allocation2 + $0x38] sm:$0xff]
        %v318 = vld [vmem:[%s263] sm:$0xff]
        %v319 = vld [vmem:[%s263 + $0x8] sm:$0xff]
        %v320 = vld [vmem:[%s263 + $0x10] sm:$0xff]
        %v321 = vld [vmem:[%s263 + $0x18] sm:$0xff]
        %v322 = vld [vmem:[%s263 + $0x20] sm:$0xff]
        %v323 = vld [vmem:[%s263 + $0x28] sm:$0xff]
        %v324 = vld [vmem:[%s263 + $0x30] sm:$0xff]
        %v325 = vld [vmem:[%s263 + $0x38] sm:$0xff]
        %v326 = vld [vmem:[%s263 + $0x40] sm:$0xff]
        %v327 = vld [vmem:[%s263 + $0x48] sm:$0xff]
        %v328 = vld [vmem:[%s263 + $0x50] sm:$0xff]
        %v329 = vld [vmem:[%s263 + $0x58] sm:$0xff]
        %v330 = vld [vmem:[%s263 + $0x60] sm:$0xff]
        %v331 = vld [vmem:[%s263 + $0x68] sm:$0xff]
        %v332 = vld [vmem:[%s263 + $0x70] sm:$0xff]
        %v333 = vld [vmem:[%s263 + $0x78] sm:$0xff]
        %v334 = vld [vmem:[%s263 + $0x80] sm:$0xff]
        %v335 = vld [vmem:[%s263 + $0x88] sm:$0xff]
        %v336 = vld [vmem:[%s263 + $0x90] sm:$0xff]
        %v337 = vld [vmem:[%s263 + $0x98] sm:$0xff]
        %v338 = vld [vmem:[%s263 + $0xa0] sm:$0xff]
        %v339 = vld [vmem:[%s263 + $0xa8] sm:$0xff]
        %v340 = vld [vmem:[%s263 + $0xb0] sm:$0xff]
        %v341 = vld [vmem:[%s263 + $0xb8] sm:$0xff]
        %v342 = vld [vmem:[%s263 + $0xc0] sm:$0xff]
        %v343 = vld [vmem:[%s263 + $0xc8] sm:$0xff]
        %v344 = vld [vmem:[%s263 + $0xd0] sm:$0xff]
        %v345 = vld [vmem:[%s263 + $0xd8] sm:$0xff]
        %v346 = vld [vmem:[%s263 + $0xe0] sm:$0xff]
        %v347 = vld [vmem:[%s263 + $0xe8] sm:$0xff]
        %v348 = vld [vmem:[%s263 + $0xf0] sm:$0xff]
        %v349 = vld [vmem:[%s263 + $0xf8] sm:$0xff]
        %v350 = vld [vmem:[%s263 + $0x100] sm:$0xff]
        %v351 = vld [vmem:[%s263 + $0x108] sm:$0xff]
        %v352 = vld [vmem:[%s263 + $0x110] sm:$0xff]
        %v353 = vld [vmem:[%s263 + $0x118] sm:$0xff]
        %v354 = vld [vmem:[%s263 + $0x120] sm:$0xff]
        %v355 = vld [vmem:[%s263 + $0x128] sm:$0xff]
        %v356 = vld [vmem:[%s263 + $0x130] sm:$0xff]
        %v357 = vld [vmem:[%s263 + $0x138] sm:$0xff]
        %v358 = vld [vmem:[%s263 + $0x140] sm:$0xff]
        %v359 = vld [vmem:[%s263 + $0x148] sm:$0xff]
        %v360 = vld [vmem:[%s263 + $0x150] sm:$0xff]
        %v361 = vld [vmem:[%s263 + $0x158] sm:$0xff]
        %v362 = vld [vmem:[%s263 + $0x160] sm:$0xff]
        %v363 = vld [vmem:[%s263 + $0x168] sm:$0xff]
        %v364 = vld [vmem:[%s263 + $0x170] sm:$0xff]
        %v365 = vld [vmem:[%s263 + $0x178] sm:$0xff]
        %v366 = vld [vmem:[%s263 + $0x180] sm:$0xff]
        %v367 = vld [vmem:[%s263 + $0x188] sm:$0xff]
        %v368 = vld [vmem:[%s263 + $0x190] sm:$0xff]
        %v369 = vld [vmem:[%s263 + $0x198] sm:$0xff]
        %v370 = vld [vmem:[%s263 + $0x1a0] sm:$0xff]
        %v371 = vld [vmem:[%s263 + $0x1a8] sm:$0xff]
        %v372 = vld [vmem:[%s263 + $0x1b0] sm:$0xff]
        %v373 = vld [vmem:[%s263 + $0x1b8] sm:$0xff]
        %v374 = vld [vmem:[%s263 + $0x1c0] sm:$0xff]
        %v375 = vld [vmem:[%s263 + $0x1c8] sm:$0xff]
        %v376 = vld [vmem:[%s263 + $0x1d0] sm:$0xff]
        %v377 = vld [vmem:[%s263 + $0x1d8] sm:$0xff]
        %v378 = vld [vmem:[%s263 + $0x1e0] sm:$0xff]
        %v379 = vld [vmem:[%s263 + $0x1e8] sm:$0xff]
        %v380 = vld [vmem:[%s263 + $0x1f0] sm:$0xff]
        %v381 = vld [vmem:[%s263 + $0x1f8] sm:$0xff]
        %v382 = vld [vmem:[%s263 + $0x200] sm:$0xff]
        %v383 = vld [vmem:[%s263 + $0x208] sm:$0xff]
        %v384 = vld [vmem:[%s263 + $0x210] sm:$0xff]
        %v385 = vld [vmem:[%s263 + $0x218] sm:$0xff]
        %v386 = vld [vmem:[%s263 + $0x220] sm:$0xff]
        %v387 = vld [vmem:[%s263 + $0x228] sm:$0xff]
        %v388 = vld [vmem:[%s263 + $0x230] sm:$0xff]
        %v389 = vld [vmem:[%s263 + $0x238] sm:$0xff]
        %v390 = vld [vmem:[%s263 + $0x240] sm:$0xff]
        %v391 = vld [vmem:[%s263 + $0x248] sm:$0xff]
        %v392 = vld [vmem:[%s263 + $0x250] sm:$0xff]
        %v393 = vld [vmem:[%s263 + $0x258] sm:$0xff]
        %v394 = vld [vmem:[%s263 + $0x260] sm:$0xff]
        %v395 = vld [vmem:[%s263 + $0x268] sm:$0xff]
        %v396 = vld [vmem:[%s263 + $0x270] sm:$0xff]
        %v397 = vld [vmem:[%s263 + $0x278] sm:$0xff]
        %v398 = vld [vmem:[%s263 + $0x280] sm:$0xff]
        %v399 = vld [vmem:[%s263 + $0x288] sm:$0xff]
        %v400 = vld [vmem:[%s263 + $0x290] sm:$0xff]
        %v401 = vld [vmem:[%s263 + $0x298] sm:$0xff]
        %v402 = vld [vmem:[%s263 + $0x2a0] sm:$0xff]
        %v403 = vld [vmem:[%s263 + $0x2a8] sm:$0xff]
        %v404 = vld [vmem:[%s263 + $0x2b0] sm:$0xff]
        %v405 = vld [vmem:[%s263 + $0x2b8] sm:$0xff]
        %v406 = vld [vmem:[%s263 + $0x2c0] sm:$0xff]
        %v407 = vld [vmem:[%s263 + $0x2c8] sm:$0xff]
        %v408 = vld [vmem:[%s263 + $0x2d0] sm:$0xff]
        %v409 = vld [vmem:[%s263 + $0x2d8] sm:$0xff]
        %v410 = vld [vmem:[%s263 + $0x2e0] sm:$0xff]
        %v411 = vld [vmem:[%s263 + $0x2e8] sm:$0xff]
        %v412 = vld [vmem:[%s263 + $0x2f0] sm:$0xff]
        %v413 = vld [vmem:[%s263 + $0x2f8] sm:$0xff]
        %v414 = vld [vmem:[%s263 + $0x300] sm:$0xff]
        %v415 = vld [vmem:[%s263 + $0x308] sm:$0xff]
        %v416 = vld [vmem:[%s263 + $0x310] sm:$0xff]
        %v417 = vld [vmem:[%s263 + $0x318] sm:$0xff]
        %v418 = vld [vmem:[%s263 + $0x320] sm:$0xff]
        %v419 = vld [vmem:[%s263 + $0x328] sm:$0xff]
        %v420 = vld [vmem:[%s263 + $0x330] sm:$0xff]
        %v421 = vld [vmem:[%s263 + $0x338] sm:$0xff]
        %v422 = vld [vmem:[%s263 + $0x340] sm:$0xff]
        %v423 = vld [vmem:[%s263 + $0x348] sm:$0xff]
        %v424 = vld [vmem:[%s263 + $0x350] sm:$0xff]
        %v425 = vld [vmem:[%s263 + $0x358] sm:$0xff]
        %v426 = vld [vmem:[%s263 + $0x360] sm:$0xff]
        %v427 = vld [vmem:[%s263 + $0x368] sm:$0xff]
        %v428 = vld [vmem:[%s263 + $0x370] sm:$0xff]
        %v429 = vld [vmem:[%s263 + $0x378] sm:$0xff]
        %v430 = vld [vmem:[%s263 + $0x380] sm:$0xff]
        %v431 = vld [vmem:[%s263 + $0x388] sm:$0xff]
        %v432 = vld [vmem:[%s263 + $0x390] sm:$0xff]
        %v433 = vld [vmem:[%s263 + $0x398] sm:$0xff]
        %v434 = vld [vmem:[%s263 + $0x3a0] sm:$0xff]
        %v435 = vld [vmem:[%s263 + $0x3a8] sm:$0xff]
        %v436 = vld [vmem:[%s263 + $0x3b0] sm:$0xff]
        %v437 = vld [vmem:[%s263 + $0x3b8] sm:$0xff]
        %v438 = vld [vmem:[%s263 + $0x3c0] sm:$0xff]
        %v439 = vld [vmem:[%s263 + $0x3c8] sm:$0xff]
        %v440 = vld [vmem:[%s263 + $0x3d0] sm:$0xff]
        %v441 = vld [vmem:[%s263 + $0x3d8] sm:$0xff]
        %v442 = vld [vmem:[%s263 + $0x3e0] sm:$0xff]
        %v443 = vld [vmem:[%s263 + $0x3e8] sm:$0xff]
        %v444 = vld [vmem:[%s263 + $0x3f0] sm:$0xff]
        %v445 = vld [vmem:[%s263 + $0x3f8] sm:$0xff]
        %v446 = vand.u32 %v319, 4294901760
        %447 = vmatprep.subr.mxu0 %v446
        %v448 = vand.u32 %v318, 4294901760
        %449 = vmatpush1.msra.mxu0 %v448
        %v450 = vand.u32 %v321, 4294901760
        %451 = vmatprep.subr.mxu0 %v450
        %v452 = vand.u32 %v320, 4294901760
        %453 = vmatpush1.msra.mxu0 %v452
        %v454 = vand.u32 %v323, 4294901760
        %455 = vmatprep.subr.mxu0 %v454
        %v456 = vand.u32 %v322, 4294901760
        %457 = vmatpush1.msra.mxu0 %v456
        %v458 = vand.u32 %v325, 4294901760
        %459 = vmatprep.subr.mxu0 %v458
        %v460 = vand.u32 %v324, 4294901760
        %461 = vmatpush1.msra.mxu0 %v460
        %v462 = vand.u32 %v327, 4294901760
        %463 = vmatprep.subr.mxu0 %v462
        %v464 = vand.u32 %v326, 4294901760
        %465 = vmatpush1.msra.mxu0 %v464
        %v466 = vand.u32 %v329, 4294901760
        %467 = vmatprep.subr.mxu0 %v466
        %v468 = vand.u32 %v328, 4294901760
        %469 = vmatpush1.msra.mxu0 %v468
        %v470 = vand.u32 %v331, 4294901760
        %471 = vmatprep.subr.mxu0 %v470
        %v472 = vand.u32 %v330, 4294901760
        %473 = vmatpush1.msra.mxu0 %v472
        %v474 = vand.u32 %v333, 4294901760
        %475 = vmatprep.subr.mxu0 %v474
        %v476 = vand.u32 %v332, 4294901760
        %477 = vmatpush1.msra.mxu0 %v476
        %v478 = vand.u32 %v335, 4294901760
        %479 = vmatprep.subr.mxu0 %v478
        %v480 = vand.u32 %v334, 4294901760
        %481 = vmatpush1.msra.mxu0 %v480
        %v482 = vand.u32 %v337, 4294901760
        %483 = vmatprep.subr.mxu0 %v482
        %v484 = vand.u32 %v336, 4294901760
        %485 = vmatpush1.msra.mxu0 %v484
        %v486 = vand.u32 %v339, 4294901760
        %487 = vmatprep.subr.mxu0 %v486
        %v488 = vand.u32 %v338, 4294901760
        %489 = vmatpush1.msra.mxu0 %v488
        %v490 = vand.u32 %v341, 4294901760
        %491 = vmatprep.subr.mxu0 %v490
        %v492 = vand.u32 %v340, 4294901760
        %493 = vmatpush1.msra.mxu0 %v492
        %v494 = vand.u32 %v343, 4294901760
        %495 = vmatprep.subr.mxu0 %v494
        %v496 = vand.u32 %v342, 4294901760
        %497 = vmatpush1.msra.mxu0 %v496
        %v498 = vand.u32 %v345, 4294901760
        %499 = vmatprep.subr.mxu0 %v498
        %v500 = vand.u32 %v344, 4294901760
        %501 = vmatpush1.msra.mxu0 %v500
        %v502 = vand.u32 %v347, 4294901760
        %503 = vmatprep.subr.mxu0 %v502
        %v504 = vand.u32 %v346, 4294901760
        %505 = vmatpush1.msra.mxu0 %v504
        %v506 = vand.u32 %v349, 4294901760
        %507 = vmatprep.subr.mxu0 %v506
        %v508 = vand.u32 %v348, 4294901760
        %509 = vmatpush1.msra.mxu0 %v508
        %v510 = vand.u32 %v351, 4294901760
        %511 = vmatprep.subr.mxu0 %v510
        %v512 = vand.u32 %v350, 4294901760
        %513 = vmatpush1.msra.mxu0 %v512
        %v514 = vand.u32 %v353, 4294901760
        %515 = vmatprep.subr.mxu0 %v514
        %v516 = vand.u32 %v352, 4294901760
        %517 = vmatpush1.msra.mxu0 %v516
        %v518 = vand.u32 %v355, 4294901760
        %519 = vmatprep.subr.mxu0 %v518
        %v520 = vand.u32 %v354, 4294901760
        %521 = vmatpush1.msra.mxu0 %v520
        %v522 = vand.u32 %v357, 4294901760
        %523 = vmatprep.subr.mxu0 %v522
        %v524 = vand.u32 %v356, 4294901760
        %525 = vmatpush1.msra.mxu0 %v524
        %v526 = vand.u32 %v359, 4294901760
        %527 = vmatprep.subr.mxu0 %v526
        %v528 = vand.u32 %v358, 4294901760
        %529 = vmatpush1.msra.mxu0 %v528
        %v530 = vand.u32 %v361, 4294901760
        %531 = vmatprep.subr.mxu0 %v530
        %v532 = vand.u32 %v360, 4294901760
        %533 = vmatpush1.msra.mxu0 %v532
        %v534 = vand.u32 %v363, 4294901760
        %535 = vmatprep.subr.mxu0 %v534
        %v536 = vand.u32 %v362, 4294901760
        %537 = vmatpush1.msra.mxu0 %v536
        %v538 = vand.u32 %v365, 4294901760
        %539 = vmatprep.subr.mxu0 %v538
        %v540 = vand.u32 %v364, 4294901760
        %541 = vmatpush1.msra.mxu0 %v540
        %v542 = vand.u32 %v367, 4294901760
        %543 = vmatprep.subr.mxu0 %v542
        %v544 = vand.u32 %v366, 4294901760
        %545 = vmatpush1.msra.mxu0 %v544
        %v546 = vand.u32 %v369, 4294901760
        %547 = vmatprep.subr.mxu0 %v546
        %v548 = vand.u32 %v368, 4294901760
        %549 = vmatpush1.msra.mxu0 %v548
        %v550 = vand.u32 %v371, 4294901760
        %551 = vmatprep.subr.mxu0 %v550
        %v552 = vand.u32 %v370, 4294901760
        %553 = vmatpush1.msra.mxu0 %v552
        %v554 = vand.u32 %v373, 4294901760
        %555 = vmatprep.subr.mxu0 %v554
        %v556 = vand.u32 %v372, 4294901760
        %557 = vmatpush1.msra.mxu0 %v556
        %v558 = vand.u32 %v375, 4294901760
        %559 = vmatprep.subr.mxu0 %v558
        %v560 = vand.u32 %v374, 4294901760
        %561 = vmatpush1.msra.mxu0 %v560
        %v562 = vand.u32 %v377, 4294901760
        %563 = vmatprep.subr.mxu0 %v562
        %v564 = vand.u32 %v376, 4294901760
        %565 = vmatpush1.msra.mxu0 %v564
        %v566 = vand.u32 %v379, 4294901760
        %567 = vmatprep.subr.mxu0 %v566
        %v568 = vand.u32 %v378, 4294901760
        %569 = vmatpush1.msra.mxu0 %v568
        %v570 = vand.u32 %v381, 4294901760
        %571 = vmatprep.subr.mxu0 %v570
        %v572 = vand.u32 %v380, 4294901760
        %573 = vmatpush1.msra.mxu0 %v572
        %v574 = vand.u32 %v311, 4294901760
        %v575 = vsub.f32 %v311, %v574
        %v576 = vand.u32 %v575, 4294901760
        %v577 = vsub.f32 %v575, %v576
        %v578 = vand.u32 %v577, 4294901760
        %579 = vmatprep.mubr.f32.mxu0 %v578
        %v580 = vand.u32 %v310, 4294901760
        %v581 = vsub.f32 %v310, %v580
        %v582 = vand.u32 %v581, 4294901760
        %v583 = vsub.f32 %v581, %v582
        %v584 = vand.u32 %v583, 4294901760
        %585 = vmatmul.mubr.f32.gmra.mrb[0].mxu0 %v584
        %v586 = vpop.f32.mrb[0].mxu0
        %v587 = vadd.f32 0.0, %v586
        %v588 = vpop.f32.mrb[0].mxu0
        %v589 = vadd.f32 0.0, %v588
        %v590 = vand.u32 %v315, 4294901760
        %v591 = vsub.f32 %v315, %v590
        %v592 = vand.u32 %v591, 4294901760
        %v593 = vsub.f32 %v591, %v592
        %v594 = vand.u32 %v593, 4294901760
        %595 = vmatprep.mubr.f32.mxu0 %v594
        %v596 = vand.u32 %v314, 4294901760
        %v597 = vsub.f32 %v314, %v596
        %v598 = vand.u32 %v597, 4294901760
        %v599 = vsub.f32 %v597, %v598
        %v600 = vand.u32 %v599, 4294901760
        %601 = vmatmul.mubr.f32.gmra.mrb[0].mxu0 %v600
        %v602 = vpop.f32.mrb[0].mxu0
        %v603 = vadd.f32 0.0, %v602
        %v604 = vpop.f32.mrb[0].mxu0
        %v605 = vadd.f32 0.0, %v604
        %606 = vdwg.mxu0
        %v607 = vand.u32 %v319, 4294901760
        %v608 = vsub.f32 %v319, %v607
        %v609 = vand.u32 %v608, 4294901760
        %v610 = vsub.f32 %v608, %v609
        %v611 = vand.u32 %v610, 4294901760
        %612 = vmatprep.subr.mxu0 %v611
        %v613 = vand.u32 %v318, 4294901760
        %v614 = vsub.f32 %v318, %v613
        %v615 = vand.u32 %v614, 4294901760
        %v616 = vsub.f32 %v614, %v615
        %v617 = vand.u32 %v616, 4294901760
        %618 = vmatpush1.msra.mxu0 %v617
        %v619 = vand.u32 %v321, 4294901760
        %v620 = vsub.f32 %v321, %v619
        %v621 = vand.u32 %v620, 4294901760
        %v622 = vsub.f32 %v620, %v621
        %v623 = vand.u32 %v622, 4294901760
        %624 = vmatprep.subr.mxu0 %v623
        %v625 = vand.u32 %v320, 4294901760
        %v626 = vsub.f32 %v320, %v625
        %v627 = vand.u32 %v626, 4294901760
        %v628 = vsub.f32 %v626, %v627
        %v629 = vand.u32 %v628, 4294901760
        %630 = vmatpush1.msra.mxu0 %v629
        %v631 = vand.u32 %v323, 4294901760
        %v632 = vsub.f32 %v323, %v631
        %v633 = vand.u32 %v632, 4294901760
        %v634 = vsub.f32 %v632, %v633
        %v635 = vand.u32 %v634, 4294901760
        %636 = vmatprep.subr.mxu0 %v635
        %v637 = vand.u32 %v322, 4294901760
        %v638 = vsub.f32 %v322, %v637
        %v639 = vand.u32 %v638, 4294901760
        %v640 = vsub.f32 %v638, %v639
        %v641 = vand.u32 %v640, 4294901760
        %642 = vmatpush1.msra.mxu0 %v641
        %v643 = vand.u32 %v325, 4294901760
        %v644 = vsub.f32 %v325, %v643
        %v645 = vand.u32 %v644, 4294901760
        %v646 = vsub.f32 %v644, %v645
        %v647 = vand.u32 %v646, 4294901760
        %648 = vmatprep.subr.mxu0 %v647
        %v649 = vand.u32 %v324, 4294901760
        %v650 = vsub.f32 %v324, %v649
        %v651 = vand.u32 %v650, 4294901760
        %v652 = vsub.f32 %v650, %v651
        %v653 = vand.u32 %v652, 4294901760
        %654 = vmatpush1.msra.mxu0 %v653
        %v655 = vand.u32 %v327, 4294901760
        %v656 = vsub.f32 %v327, %v655
        %v657 = vand.u32 %v656, 4294901760
        %v658 = vsub.f32 %v656, %v657
        %v659 = vand.u32 %v658, 4294901760
        %660 = vmatprep.subr.mxu0 %v659
        %v661 = vand.u32 %v326, 4294901760
        %v662 = vsub.f32 %v326, %v661
        %v663 = vand.u32 %v662, 4294901760
        %v664 = vsub.f32 %v662, %v663
        %v665 = vand.u32 %v664, 4294901760
        %666 = vmatpush1.msra.mxu0 %v665
        %v667 = vand.u32 %v329, 4294901760
        %v668 = vsub.f32 %v329, %v667
        %v669 = vand.u32 %v668, 4294901760
        %v670 = vsub.f32 %v668, %v669
        %v671 = vand.u32 %v670, 4294901760
        %672 = vmatprep.subr.mxu0 %v671
        %v673 = vand.u32 %v328, 4294901760
        %v674 = vsub.f32 %v328, %v673
        %v675 = vand.u32 %v674, 4294901760
        %v676 = vsub.f32 %v674, %v675
        %v677 = vand.u32 %v676, 4294901760
        %678 = vmatpush1.msra.mxu0 %v677
        %v679 = vand.u32 %v331, 4294901760
        %v680 = vsub.f32 %v331, %v679
        %v681 = vand.u32 %v680, 4294901760
        %v682 = vsub.f32 %v680, %v681
        %v683 = vand.u32 %v682, 4294901760
        %684 = vmatprep.subr.mxu0 %v683
        %v685 = vand.u32 %v330, 4294901760
        %v686 = vsub.f32 %v330, %v685
        %v687 = vand.u32 %v686, 4294901760
        %v688 = vsub.f32 %v686, %v687
        %v689 = vand.u32 %v688, 4294901760
        %690 = vmatpush1.msra.mxu0 %v689
        %v691 = vand.u32 %v333, 4294901760
        %v692 = vsub.f32 %v333, %v691
        %v693 = vand.u32 %v692, 4294901760
        %v694 = vsub.f32 %v692, %v693
        %v695 = vand.u32 %v694, 4294901760
        %696 = vmatprep.subr.mxu0 %v695
        %v697 = vand.u32 %v332, 4294901760
        %v698 = vsub.f32 %v332, %v697
        %v699 = vand.u32 %v698, 4294901760
        %v700 = vsub.f32 %v698, %v699
        %v701 = vand.u32 %v700, 4294901760
        %702 = vmatpush1.msra.mxu0 %v701
        %v703 = vand.u32 %v335, 4294901760
        %v704 = vsub.f32 %v335, %v703
        %v705 = vand.u32 %v704, 4294901760
        %v706 = vsub.f32 %v704, %v705
        %v707 = vand.u32 %v706, 4294901760
        %708 = vmatprep.subr.mxu0 %v707
        %v709 = vand.u32 %v334, 4294901760
        %v710 = vsub.f32 %v334, %v709
        %v711 = vand.u32 %v710, 4294901760
        %v712 = vsub.f32 %v710, %v711
        %v713 = vand.u32 %v712, 4294901760
        %714 = vmatpush1.msra.mxu0 %v713
        %v715 = vand.u32 %v337, 4294901760
        %v716 = vsub.f32 %v337, %v715
        %v717 = vand.u32 %v716, 4294901760
        %v718 = vsub.f32 %v716, %v717
        %v719 = vand.u32 %v718, 4294901760
        %720 = vmatprep.subr.mxu0 %v719
        %v721 = vand.u32 %v336, 4294901760
        %v722 = vsub.f32 %v336, %v721
        %v723 = vand.u32 %v722, 4294901760
        %v724 = vsub.f32 %v722, %v723
        %v725 = vand.u32 %v724, 4294901760
        %726 = vmatpush1.msra.mxu0 %v725
        %v727 = vand.u32 %v339, 4294901760
        %v728 = vsub.f32 %v339, %v727
        %v729 = vand.u32 %v728, 4294901760
        %v730 = vsub.f32 %v728, %v729
        %v731 = vand.u32 %v730, 4294901760
        %732 = vmatprep.subr.mxu0 %v731
        %v733 = vand.u32 %v338, 4294901760
        %v734 = vsub.f32 %v338, %v733
        %v735 = vand.u32 %v734, 4294901760
        %v736 = vsub.f32 %v734, %v735
        %v737 = vand.u32 %v736, 4294901760
        %738 = vmatpush1.msra.mxu0 %v737
        %v739 = vand.u32 %v341, 4294901760
        %v740 = vsub.f32 %v341, %v739
        %v741 = vand.u32 %v740, 4294901760
        %v742 = vsub.f32 %v740, %v741
        %v743 = vand.u32 %v742, 4294901760
        %744 = vmatprep.subr.mxu0 %v743
        %v745 = vand.u32 %v340, 4294901760
        %v746 = vsub.f32 %v340, %v745
        %v747 = vand.u32 %v746, 4294901760
        %v748 = vsub.f32 %v746, %v747
        %v749 = vand.u32 %v748, 4294901760
        %750 = vmatpush1.msra.mxu0 %v749
        %v751 = vand.u32 %v343, 4294901760
        %v752 = vsub.f32 %v343, %v751
        %v753 = vand.u32 %v752, 4294901760
        %v754 = vsub.f32 %v752, %v753
        %v755 = vand.u32 %v754, 4294901760
        %756 = vmatprep.subr.mxu0 %v755
        %v757 = vand.u32 %v342, 4294901760
        %v758 = vsub.f32 %v342, %v757
        %v759 = vand.u32 %v758, 4294901760
        %v760 = vsub.f32 %v758, %v759
        %v761 = vand.u32 %v760, 4294901760
        %762 = vmatpush1.msra.mxu0 %v761
        %v763 = vand.u32 %v345, 4294901760
        %v764 = vsub.f32 %v345, %v763
        %v765 = vand.u32 %v764, 4294901760
        %v766 = vsub.f32 %v764, %v765
        %v767 = vand.u32 %v766, 4294901760
        %768 = vmatprep.subr.mxu0 %v767
        %v769 = vand.u32 %v344, 4294901760
        %v770 = vsub.f32 %v344, %v769
        %v771 = vand.u32 %v770, 4294901760
        %v772 = vsub.f32 %v770, %v771
        %v773 = vand.u32 %v772, 4294901760
        %774 = vmatpush1.msra.mxu0 %v773
        %v775 = vand.u32 %v347, 4294901760
        %v776 = vsub.f32 %v347, %v775
        %v777 = vand.u32 %v776, 4294901760
        %v778 = vsub.f32 %v776, %v777
        %v779 = vand.u32 %v778, 4294901760
        %780 = vmatprep.subr.mxu0 %v779
        %v781 = vand.u32 %v346, 4294901760
        %v782 = vsub.f32 %v346, %v781
        %v783 = vand.u32 %v782, 4294901760
        %v784 = vsub.f32 %v782, %v783
        %v785 = vand.u32 %v784, 4294901760
        %786 = vmatpush1.msra.mxu0 %v785
        %v787 = vand.u32 %v349, 4294901760
        %v788 = vsub.f32 %v349, %v787
        %v789 = vand.u32 %v788, 4294901760
        %v790 = vsub.f32 %v788, %v789
        %v791 = vand.u32 %v790, 4294901760
        %792 = vmatprep.subr.mxu0 %v791
        %v793 = vand.u32 %v348, 4294901760
        %v794 = vsub.f32 %v348, %v793
        %v795 = vand.u32 %v794, 4294901760
        %v796 = vsub.f32 %v794, %v795
        %v797 = vand.u32 %v796, 4294901760
        %798 = vmatpush1.msra.mxu0 %v797
        %v799 = vand.u32 %v351, 4294901760
        %v800 = vsub.f32 %v351, %v799
        %v801 = vand.u32 %v800, 4294901760
        %v802 = vsub.f32 %v800, %v801
        %v803 = vand.u32 %v802, 4294901760
        %804 = vmatprep.subr.mxu0 %v803
        %v805 = vand.u32 %v350, 4294901760
        %v806 = vsub.f32 %v350, %v805
        %v807 = vand.u32 %v806, 4294901760
        %v808 = vsub.f32 %v806, %v807
        %v809 = vand.u32 %v808, 4294901760
        %810 = vmatpush1.msra.mxu0 %v809
        %v811 = vand.u32 %v353, 4294901760
        %v812 = vsub.f32 %v353, %v811
        %v813 = vand.u32 %v812, 4294901760
        %v814 = vsub.f32 %v812, %v813
        %v815 = vand.u32 %v814, 4294901760
        %816 = vmatprep.subr.mxu0 %v815
        %v817 = vand.u32 %v352, 4294901760
        %v818 = vsub.f32 %v352, %v817
        %v819 = vand.u32 %v818, 4294901760
        %v820 = vsub.f32 %v818, %v819
        %v821 = vand.u32 %v820, 4294901760
        %822 = vmatpush1.msra.mxu0 %v821
        %v823 = vand.u32 %v355, 4294901760
        %v824 = vsub.f32 %v355, %v823
        %v825 = vand.u32 %v824, 4294901760
        %v826 = vsub.f32 %v824, %v825
        %v827 = vand.u32 %v826, 4294901760
        %828 = vmatprep.subr.mxu0 %v827
        %v829 = vand.u32 %v354, 4294901760
        %v830 = vsub.f32 %v354, %v829
        %v831 = vand.u32 %v830, 4294901760
        %v832 = vsub.f32 %v830, %v831
        %v833 = vand.u32 %v832, 4294901760
        %834 = vmatpush1.msra.mxu0 %v833
        %v835 = vand.u32 %v357, 4294901760
        %v836 = vsub.f32 %v357, %v835
        %v837 = vand.u32 %v836, 4294901760
        %v838 = vsub.f32 %v836, %v837
        %v839 = vand.u32 %v838, 4294901760
        %840 = vmatprep.subr.mxu0 %v839
        %v841 = vand.u32 %v356, 4294901760
        %v842 = vsub.f32 %v356, %v841
        %v843 = vand.u32 %v842, 4294901760
        %v844 = vsub.f32 %v842, %v843
        %v845 = vand.u32 %v844, 4294901760
        %846 = vmatpush1.msra.mxu0 %v845
        %v847 = vand.u32 %v359, 4294901760
        %v848 = vsub.f32 %v359, %v847
        %v849 = vand.u32 %v848, 4294901760
        %v850 = vsub.f32 %v848, %v849
        %v851 = vand.u32 %v850, 4294901760
        %852 = vmatprep.subr.mxu0 %v851
        %v853 = vand.u32 %v358, 4294901760
        %v854 = vsub.f32 %v358, %v853
        %v855 = vand.u32 %v854, 4294901760
        %v856 = vsub.f32 %v854, %v855
        %v857 = vand.u32 %v856, 4294901760
        %858 = vmatpush1.msra.mxu0 %v857
        %v859 = vand.u32 %v361, 4294901760
        %v860 = vsub.f32 %v361, %v859
        %v861 = vand.u32 %v860, 4294901760
        %v862 = vsub.f32 %v860, %v861
        %v863 = vand.u32 %v862, 4294901760
        %864 = vmatprep.subr.mxu0 %v863
        %v865 = vand.u32 %v360, 4294901760
        %v866 = vsub.f32 %v360, %v865
        %v867 = vand.u32 %v866, 4294901760
        %v868 = vsub.f32 %v866, %v867
        %v869 = vand.u32 %v868, 4294901760
        %870 = vmatpush1.msra.mxu0 %v869
        %v871 = vand.u32 %v363, 4294901760
        %v872 = vsub.f32 %v363, %v871
        %v873 = vand.u32 %v872, 4294901760
        %v874 = vsub.f32 %v872, %v873
        %v875 = vand.u32 %v874, 4294901760
        %876 = vmatprep.subr.mxu0 %v875
        %v877 = vand.u32 %v362, 4294901760
        %v878 = vsub.f32 %v362, %v877
        %v879 = vand.u32 %v878, 4294901760
        %v880 = vsub.f32 %v878, %v879
        %v881 = vand.u32 %v880, 4294901760
        %882 = vmatpush1.msra.mxu0 %v881
        %v883 = vand.u32 %v365, 4294901760
        %v884 = vsub.f32 %v365, %v883
        %v885 = vand.u32 %v884, 4294901760
        %v886 = vsub.f32 %v884, %v885
        %v887 = vand.u32 %v886, 4294901760
        %888 = vmatprep.subr.mxu0 %v887
        %v889 = vand.u32 %v364, 4294901760
        %v890 = vsub.f32 %v364, %v889
        %v891 = vand.u32 %v890, 4294901760
        %v892 = vsub.f32 %v890, %v891
        %v893 = vand.u32 %v892, 4294901760
        %894 = vmatpush1.msra.mxu0 %v893
        %v895 = vand.u32 %v367, 4294901760
        %v896 = vsub.f32 %v367, %v895
        %v897 = vand.u32 %v896, 4294901760
        %v898 = vsub.f32 %v896, %v897
        %v899 = vand.u32 %v898, 4294901760
        %900 = vmatprep.subr.mxu0 %v899
        %v901 = vand.u32 %v366, 4294901760
        %v902 = vsub.f32 %v366, %v901
        %v903 = vand.u32 %v902, 4294901760
        %v904 = vsub.f32 %v902, %v903
        %v905 = vand.u32 %v904, 4294901760
        %906 = vmatpush1.msra.mxu0 %v905
        %v907 = vand.u32 %v369, 4294901760
        %v908 = vsub.f32 %v369, %v907
        %v909 = vand.u32 %v908, 4294901760
        %v910 = vsub.f32 %v908, %v909
        %v911 = vand.u32 %v910, 4294901760
        %912 = vmatprep.subr.mxu0 %v911
        %v913 = vand.u32 %v368, 4294901760
        %v914 = vsub.f32 %v368, %v913
        %v915 = vand.u32 %v914, 4294901760
        %v916 = vsub.f32 %v914, %v915
        %v917 = vand.u32 %v916, 4294901760
        %918 = vmatpush1.msra.mxu0 %v917
        %v919 = vand.u32 %v371, 4294901760
        %v920 = vsub.f32 %v371, %v919
        %v921 = vand.u32 %v920, 4294901760
        %v922 = vsub.f32 %v920, %v921
        %v923 = vand.u32 %v922, 4294901760
        %924 = vmatprep.subr.mxu0 %v923
        %v925 = vand.u32 %v370, 4294901760
        %v926 = vsub.f32 %v370, %v925
        %v927 = vand.u32 %v926, 4294901760
        %v928 = vsub.f32 %v926, %v927
        %v929 = vand.u32 %v928, 4294901760
        %930 = vmatpush1.msra.mxu0 %v929
        %v931 = vand.u32 %v373, 4294901760
        %v932 = vsub.f32 %v373, %v931
        %v933 = vand.u32 %v932, 4294901760
        %v934 = vsub.f32 %v932, %v933
        %v935 = vand.u32 %v934, 4294901760
        %936 = vmatprep.subr.mxu0 %v935
        %v937 = vand.u32 %v372, 4294901760
        %v938 = vsub.f32 %v372, %v937
        %v939 = vand.u32 %v938, 4294901760
        %v940 = vsub.f32 %v938, %v939
        %v941 = vand.u32 %v940, 4294901760
        %942 = vmatpush1.msra.mxu0 %v941
        %v943 = vand.u32 %v375, 4294901760
        %v944 = vsub.f32 %v375, %v943
        %v945 = vand.u32 %v944, 4294901760
        %v946 = vsub.f32 %v944, %v945
        %v947 = vand.u32 %v946, 4294901760
        %948 = vmatprep.subr.mxu0 %v947
        %v949 = vand.u32 %v374, 4294901760
        %v950 = vsub.f32 %v374, %v949
        %v951 = vand.u32 %v950, 4294901760
        %v952 = vsub.f32 %v950, %v951
        %v953 = vand.u32 %v952, 4294901760
        %954 = vmatpush1.msra.mxu0 %v953
        %v955 = vand.u32 %v377, 4294901760
        %v956 = vsub.f32 %v377, %v955
        %v957 = vand.u32 %v956, 4294901760
        %v958 = vsub.f32 %v956, %v957
        %v959 = vand.u32 %v958, 4294901760
        %960 = vmatprep.subr.mxu0 %v959
        %v961 = vand.u32 %v376, 4294901760
        %v962 = vsub.f32 %v376, %v961
        %v963 = vand.u32 %v962, 4294901760
        %v964 = vsub.f32 %v962, %v963
        %v965 = vand.u32 %v964, 4294901760
        %966 = vmatpush1.msra.mxu0 %v965
        %v967 = vand.u32 %v379, 4294901760
        %v968 = vsub.f32 %v379, %v967
        %v969 = vand.u32 %v968, 4294901760
        %v970 = vsub.f32 %v968, %v969
        %v971 = vand.u32 %v970, 4294901760
        %972 = vmatprep.subr.mxu0 %v971
        %v973 = vand.u32 %v378, 4294901760
        %v974 = vsub.f32 %v378, %v973
        %v975 = vand.u32 %v974, 4294901760
        %v976 = vsub.f32 %v974, %v975
        %v977 = vand.u32 %v976, 4294901760
        %978 = vmatpush1.msra.mxu0 %v977
        %v979 = vand.u32 %v381, 4294901760
        %v980 = vsub.f32 %v381, %v979
        %v981 = vand.u32 %v980, 4294901760
        %v982 = vsub.f32 %v980, %v981
        %v983 = vand.u32 %v982, 4294901760
        %984 = vmatprep.subr.mxu0 %v983
        %v985 = vand.u32 %v380, 4294901760
        %v986 = vsub.f32 %v380, %v985
        %v987 = vand.u32 %v986, 4294901760
        %v988 = vsub.f32 %v986, %v987
        %v989 = vand.u32 %v988, 4294901760
        %990 = vmatpush1.msra.mxu0 %v989
        %v991 = vand.u32 %v311, 4294901760
        %992 = vmatprep.mubr.f32.mxu0 %v991
        %v993 = vand.u32 %v310, 4294901760
        %994 = vmatmul.mubr.f32.gmra.mrb[0].mxu0 %v993
        %v995 = vpop.f32.mrb[0].mxu0
        %v996 = vadd.f32 %v587, %v995
        %v997 = vpop.f32.mrb[0].mxu0
        %v998 = vadd.f32 %v589, %v997
        %v999 = vand.u32 %v315, 4294901760
        %1000 = vmatprep.mubr.f32.mxu0 %v999
        %v1001 = vand.u32 %v314, 4294901760
        %1002 = vmatmul.mubr.f32.gmra.mrb[0].mxu0 %v1001
        %v1003 = vpop.f32.mrb[0].mxu0
        %v1004 = vadd.f32 %v603, %v1003
        %v1005 = vpop.f32.mrb[0].mxu0
        %v1006 = vadd.f32 %v605, %v1005
        %1007 = vdwg.mxu0
        %v1008 = vand.u32 %v319, 4294901760
        %v1009 = vsub.f32 %v319, %v1008
        %1010 = vmatprep.subr.mxu0 %v1009
        %v1011 = vand.u32 %v318, 4294901760
        %v1012 = vsub.f32 %v318, %v1011
        %1013 = vmatpush1.msra.mxu0 %v1012
        %v1014 = vand.u32 %v321, 4294901760
        %v1015 = vsub.f32 %v321, %v1014
        %1016 = vmatprep.subr.mxu0 %v1015
        %v1017 = vand.u32 %v320, 4294901760
        %v1018 = vsub.f32 %v320, %v1017
        %1019 = vmatpush1.msra.mxu0 %v1018
        %v1020 = vand.u32 %v323, 4294901760
        %v1021 = vsub.f32 %v323, %v1020
        %1022 = vmatprep.subr.mxu0 %v1021
        %v1023 = vand.u32 %v322, 4294901760
        %v1024 = vsub.f32 %v322, %v1023
        %1025 = vmatpush1.msra.mxu0 %v1024
        %v1026 = vand.u32 %v325, 4294901760
        %v1027 = vsub.f32 %v325, %v1026
        %1028 = vmatprep.subr.mxu0 %v1027
        %v1029 = vand.u32 %v324, 4294901760
        %v1030 = vsub.f32 %v324, %v1029
        %1031 = vmatpush1.msra.mxu0 %v1030
        %v1032 = vand.u32 %v327, 4294901760
        %v1033 = vsub.f32 %v327, %v1032
        %1034 = vmatprep.subr.mxu0 %v1033
        %v1035 = vand.u32 %v326, 4294901760
        %v1036 = vsub.f32 %v326, %v1035
        %1037 = vmatpush1.msra.mxu0 %v1036
        %v1038 = vand.u32 %v329, 4294901760
        %v1039 = vsub.f32 %v329, %v1038
        %1040 = vmatprep.subr.mxu0 %v1039
        %v1041 = vand.u32 %v328, 4294901760
        %v1042 = vsub.f32 %v328, %v1041
        %1043 = vmatpush1.msra.mxu0 %v1042
        %v1044 = vand.u32 %v331, 4294901760
        %v1045 = vsub.f32 %v331, %v1044
        %1046 = vmatprep.subr.mxu0 %v1045
        %v1047 = vand.u32 %v330, 4294901760
        %v1048 = vsub.f32 %v330, %v1047
        %1049 = vmatpush1.msra.mxu0 %v1048
        %v1050 = vand.u32 %v333, 4294901760
        %v1051 = vsub.f32 %v333, %v1050
        %1052 = vmatprep.subr.mxu0 %v1051
        %v1053 = vand.u32 %v332, 4294901760
        %v1054 = vsub.f32 %v332, %v1053
        %1055 = vmatpush1.msra.mxu0 %v1054
        %v1056 = vand.u32 %v335, 4294901760
        %v1057 = vsub.f32 %v335, %v1056
        %1058 = vmatprep.subr.mxu0 %v1057
        %v1059 = vand.u32 %v334, 4294901760
        %v1060 = vsub.f32 %v334, %v1059
        %1061 = vmatpush1.msra.mxu0 %v1060
        %v1062 = vand.u32 %v337, 4294901760
        %v1063 = vsub.f32 %v337, %v1062
        %1064 = vmatprep.subr.mxu0 %v1063
        %v1065 = vand.u32 %v336, 4294901760
        %v1066 = vsub.f32 %v336, %v1065
        %1067 = vmatpush1.msra.mxu0 %v1066
        %v1068 = vand.u32 %v339, 4294901760
        %v1069 = vsub.f32 %v339, %v1068
        %1070 = vmatprep.subr.mxu0 %v1069
        %v1071 = vand.u32 %v338, 4294901760
        %v1072 = vsub.f32 %v338, %v1071
        %1073 = vmatpush1.msra.mxu0 %v1072
        %v1074 = vand.u32 %v341, 4294901760
        %v1075 = vsub.f32 %v341, %v1074
        %1076 = vmatprep.subr.mxu0 %v1075
        %v1077 = vand.u32 %v340, 4294901760
        %v1078 = vsub.f32 %v340, %v1077
        %1079 = vmatpush1.msra.mxu0 %v1078
        %v1080 = vand.u32 %v343, 4294901760
        %v1081 = vsub.f32 %v343, %v1080
        %1082 = vmatprep.subr.mxu0 %v1081
        %v1083 = vand.u32 %v342, 4294901760
        %v1084 = vsub.f32 %v342, %v1083
        %1085 = vmatpush1.msra.mxu0 %v1084
        %v1086 = vand.u32 %v345, 4294901760
        %v1087 = vsub.f32 %v345, %v1086
        %1088 = vmatprep.subr.mxu0 %v1087
        %v1089 = vand.u32 %v344, 4294901760
        %v1090 = vsub.f32 %v344, %v1089
        %1091 = vmatpush1.msra.mxu0 %v1090
        %v1092 = vand.u32 %v347, 4294901760
        %v1093 = vsub.f32 %v347, %v1092
        %1094 = vmatprep.subr.mxu0 %v1093
        %v1095 = vand.u32 %v346, 4294901760
        %v1096 = vsub.f32 %v346, %v1095
        %1097 = vmatpush1.msra.mxu0 %v1096
        %v1098 = vand.u32 %v349, 4294901760
        %v1099 = vsub.f32 %v349, %v1098
        %1100 = vmatprep.subr.mxu0 %v1099
        %v1101 = vand.u32 %v348, 4294901760
        %v1102 = vsub.f32 %v348, %v1101
        %1103 = vmatpush1.msra.mxu0 %v1102
        %v1104 = vand.u32 %v351, 4294901760
        %v1105 = vsub.f32 %v351, %v1104
        %1106 = vmatprep.subr.mxu0 %v1105
        %v1107 = vand.u32 %v350, 4294901760
        %v1108 = vsub.f32 %v350, %v1107
        %1109 = vmatpush1.msra.mxu0 %v1108
        %v1110 = vand.u32 %v353, 4294901760
        %v1111 = vsub.f32 %v353, %v1110
        %1112 = vmatprep.subr.mxu0 %v1111
        %v1113 = vand.u32 %v352, 4294901760
        %v1114 = vsub.f32 %v352, %v1113
        %1115 = vmatpush1.msra.mxu0 %v1114
        %v1116 = vand.u32 %v355, 4294901760
        %v1117 = vsub.f32 %v355, %v1116
        %1118 = vmatprep.subr.mxu0 %v1117
        %v1119 = vand.u32 %v354, 4294901760
        %v1120 = vsub.f32 %v354, %v1119
        %1121 = vmatpush1.msra.mxu0 %v1120
        %v1122 = vand.u32 %v357, 4294901760
        %v1123 = vsub.f32 %v357, %v1122
        %1124 = vmatprep.subr.mxu0 %v1123
        %v1125 = vand.u32 %v356, 4294901760
        %v1126 = vsub.f32 %v356, %v1125
        %1127 = vmatpush1.msra.mxu0 %v1126
        %v1128 = vand.u32 %v359, 4294901760
        %v1129 = vsub.f32 %v359, %v1128
        %1130 = vmatprep.subr.mxu0 %v1129
        %v1131 = vand.u32 %v358, 4294901760
        %v1132 = vsub.f32 %v358, %v1131
        %1133 = vmatpush1.msra.mxu0 %v1132
        %v1134 = vand.u32 %v361, 4294901760
        %v1135 = vsub.f32 %v361, %v1134
        %1136 = vmatprep.subr.mxu0 %v1135
        %v1137 = vand.u32 %v360, 4294901760
        %v1138 = vsub.f32 %v360, %v1137
        %1139 = vmatpush1.msra.mxu0 %v1138
        %v1140 = vand.u32 %v363, 4294901760
        %v1141 = vsub.f32 %v363, %v1140
        %1142 = vmatprep.subr.mxu0 %v1141
        %v1143 = vand.u32 %v362, 4294901760
        %v1144 = vsub.f32 %v362, %v1143
        %1145 = vmatpush1.msra.mxu0 %v1144
        %v1146 = vand.u32 %v365, 4294901760
        %v1147 = vsub.f32 %v365, %v1146
        %1148 = vmatprep.subr.mxu0 %v1147
        %v1149 = vand.u32 %v364, 4294901760
        %v1150 = vsub.f32 %v364, %v1149
        %1151 = vmatpush1.msra.mxu0 %v1150
        %v1152 = vand.u32 %v367, 4294901760
        %v1153 = vsub.f32 %v367, %v1152
        %1154 = vmatprep.subr.mxu0 %v1153
        %v1155 = vand.u32 %v366, 4294901760
        %v1156 = vsub.f32 %v366, %v1155
        %1157 = vmatpush1.msra.mxu0 %v1156
        %v1158 = vand.u32 %v369, 4294901760
        %v1159 = vsub.f32 %v369, %v1158
        %1160 = vmatprep.subr.mxu0 %v1159
        %v1161 = vand.u32 %v368, 4294901760
        %v1162 = vsub.f32 %v368, %v1161
        %1163 = vmatpush1.msra.mxu0 %v1162
        %v1164 = vand.u32 %v371, 4294901760
        %v1165 = vsub.f32 %v371, %v1164
        %1166 = vmatprep.subr.mxu0 %v1165
        %v1167 = vand.u32 %v370, 4294901760
        %v1168 = vsub.f32 %v370, %v1167
        %1169 = vmatpush1.msra.mxu0 %v1168
        %v1170 = vand.u32 %v373, 4294901760
        %v1171 = vsub.f32 %v373, %v1170
        %1172 = vmatprep.subr.mxu0 %v1171
        %v1173 = vand.u32 %v372, 4294901760
        %v1174 = vsub.f32 %v372, %v1173
        %1175 = vmatpush1.msra.mxu0 %v1174
        %v1176 = vand.u32 %v375, 4294901760
        %v1177 = vsub.f32 %v375, %v1176
        %1178 = vmatprep.subr.mxu0 %v1177
        %v1179 = vand.u32 %v374, 4294901760
        %v1180 = vsub.f32 %v374, %v1179
        %1181 = vmatpush1.msra.mxu0 %v1180
        %v1182 = vand.u32 %v377, 4294901760
        %v1183 = vsub.f32 %v377, %v1182
        %1184 = vmatprep.subr.mxu0 %v1183
        %v1185 = vand.u32 %v376, 4294901760
        %v1186 = vsub.f32 %v376, %v1185
        %1187 = vmatpush1.msra.mxu0 %v1186
        %v1188 = vand.u32 %v379, 4294901760
        %v1189 = vsub.f32 %v379, %v1188
        %1190 = vmatprep.subr.mxu0 %v1189
        %v1191 = vand.u32 %v378, 4294901760
        %v1192 = vsub.f32 %v378, %v1191
        %1193 = vmatpush1.msra.mxu0 %v1192
        %v1194 = vand.u32 %v381, 4294901760
        %v1195 = vsub.f32 %v381, %v1194
        %1196 = vmatprep.subr.mxu0 %v1195
        %v1197 = vand.u32 %v380, 4294901760
        %v1198 = vsub.f32 %v380, %v1197
        %1199 = vmatpush1.msra.mxu0 %v1198
        %v1200 = vand.u32 %v311, 4294901760
        %v1201 = vsub.f32 %v311, %v1200
        %1202 = vmatprep.mubr.f32.mxu0 %v1201
        %v1203 = vand.u32 %v310, 4294901760
        %v1204 = vsub.f32 %v310, %v1203
        %1205 = vmatmul.mubr.f32.gmra.mrb[0].mxu0 %v1204
        %v1206 = vpop.f32.mrb[0].mxu0
        %v1207 = vadd.f32 %v996, %v1206
        %v1208 = vpop.f32.mrb[0].mxu0
        %v1209 = vadd.f32 %v998, %v1208
        %v1210 = vand.u32 %v315, 4294901760
        %v1211 = vsub.f32 %v315, %v1210
        %1212 = vmatprep.mubr.f32.mxu0 %v1211
        %v1213 = vand.u32 %v314, 4294901760
        %v1214 = vsub.f32 %v314, %v1213
        %1215 = vmatmul.mubr.f32.gmra.mrb[0].mxu0 %v1214
        %v1216 = vpop.f32.mrb[0].mxu0
        %v1217 = vadd.f32 %v1004, %v1216
        %v1218 = vpop.f32.mrb[0].mxu0
        %v1219 = vadd.f32 %v1006, %v1218
        %1220 = vdwg.mxu0
        %v1221 = vand.u32 %v319, 4294901760
        %1222 = vmatprep.subr.mxu0 %v1221
        %v1223 = vand.u32 %v318, 4294901760
        %1224 = vmatpush1.msra.mxu0 %v1223
        %v1225 = vand.u32 %v321, 4294901760
        %1226 = vmatprep.subr.mxu0 %v1225
        %v1227 = vand.u32 %v320, 4294901760
        %1228 = vmatpush1.msra.mxu0 %v1227
        %v1229 = vand.u32 %v323, 4294901760
        %1230 = vmatprep.subr.mxu0 %v1229
        %v1231 = vand.u32 %v322, 4294901760
        %1232 = vmatpush1.msra.mxu0 %v1231
        %v1233 = vand.u32 %v325, 4294901760
        %1234 = vmatprep.subr.mxu0 %v1233
        %v1235 = vand.u32 %v324, 4294901760
        %1236 = vmatpush1.msra.mxu0 %v1235
        %v1237 = vand.u32 %v327, 4294901760
        %1238 = vmatprep.subr.mxu0 %v1237
        %v1239 = vand.u32 %v326, 4294901760
        %1240 = vmatpush1.msra.mxu0 %v1239
        %v1241 = vand.u32 %v329, 4294901760
        %1242 = vmatprep.subr.mxu0 %v1241
        %v1243 = vand.u32 %v328, 4294901760
        %1244 = vmatpush1.msra.mxu0 %v1243
        %v1245 = vand.u32 %v331, 4294901760
        %1246 = vmatprep.subr.mxu0 %v1245
        %v1247 = vand.u32 %v330, 4294901760
        %1248 = vmatpush1.msra.mxu0 %v1247
        %v1249 = vand.u32 %v333, 4294901760
        %1250 = vmatprep.subr.mxu0 %v1249
        %v1251 = vand.u32 %v332, 4294901760
        %1252 = vmatpush1.msra.mxu0 %v1251
        %v1253 = vand.u32 %v335, 4294901760
        %1254 = vmatprep.subr.mxu0 %v1253
        %v1255 = vand.u32 %v334, 4294901760
        %1256 = vmatpush1.msra.mxu0 %v1255
        %v1257 = vand.u32 %v337, 4294901760
        %1258 = vmatprep.subr.mxu0 %v1257
        %v1259 = vand.u32 %v336, 4294901760
        %1260 = vmatpush1.msra.mxu0 %v1259
        %v1261 = vand.u32 %v339, 4294901760
        %1262 = vmatprep.subr.mxu0 %v1261
        %v1263 = vand.u32 %v338, 4294901760
        %1264 = vmatpush1.msra.mxu0 %v1263
        %v1265 = vand.u32 %v341, 4294901760
        %1266 = vmatprep.subr.mxu0 %v1265
        %v1267 = vand.u32 %v340, 4294901760
        %1268 = vmatpush1.msra.mxu0 %v1267
        %v1269 = vand.u32 %v343, 4294901760
        %1270 = vmatprep.subr.mxu0 %v1269
        %v1271 = vand.u32 %v342, 4294901760
        %1272 = vmatpush1.msra.mxu0 %v1271
        %v1273 = vand.u32 %v345, 4294901760
        %1274 = vmatprep.subr.mxu0 %v1273
        %v1275 = vand.u32 %v344, 4294901760
        %1276 = vmatpush1.msra.mxu0 %v1275
        %v1277 = vand.u32 %v347, 4294901760
        %1278 = vmatprep.subr.mxu0 %v1277
        %v1279 = vand.u32 %v346, 4294901760
        %1280 = vmatpush1.msra.mxu0 %v1279
        %v1281 = vand.u32 %v349, 4294901760
        %1282 = vmatprep.subr.mxu0 %v1281
        %v1283 = vand.u32 %v348, 4294901760
        %1284 = vmatpush1.msra.mxu0 %v1283
        %v1285 = vand.u32 %v351, 4294901760
        %1286 = vmatprep.subr.mxu0 %v1285
        %v1287 = vand.u32 %v350, 4294901760
        %1288 = vmatpush1.msra.mxu0 %v1287
        %v1289 = vand.u32 %v353, 4294901760
        %1290 = vmatprep.subr.mxu0 %v1289
        %v1291 = vand.u32 %v352, 4294901760
        %1292 = vmatpush1.msra.mxu0 %v1291
        %v1293 = vand.u32 %v355, 4294901760
        %1294 = vmatprep.subr.mxu0 %v1293
        %v1295 = vand.u32 %v354, 4294901760
        %1296 = vmatpush1.msra.mxu0 %v1295
        %v1297 = vand.u32 %v357, 4294901760
        %1298 = vmatprep.subr.mxu0 %v1297
        %v1299 = vand.u32 %v356, 4294901760
        %1300 = vmatpush1.msra.mxu0 %v1299
        %v1301 = vand.u32 %v359, 4294901760
        %1302 = vmatprep.subr.mxu0 %v1301
        %v1303 = vand.u32 %v358, 4294901760
        %1304 = vmatpush1.msra.mxu0 %v1303
        %v1305 = vand.u32 %v361, 4294901760
        %1306 = vmatprep.subr.mxu0 %v1305
        %v1307 = vand.u32 %v360, 4294901760
        %1308 = vmatpush1.msra.mxu0 %v1307
        %v1309 = vand.u32 %v363, 4294901760
        %1310 = vmatprep.subr.mxu0 %v1309
        %v1311 = vand.u32 %v362, 4294901760
        %1312 = vmatpush1.msra.mxu0 %v1311
        %v1313 = vand.u32 %v365, 4294901760
        %1314 = vmatprep.subr.mxu0 %v1313
        %v1315 = vand.u32 %v364, 4294901760
        %1316 = vmatpush1.msra.mxu0 %v1315
        %v1317 = vand.u32 %v367, 4294901760
        %1318 = vmatprep.subr.mxu0 %v1317
        %v1319 = vand.u32 %v366, 4294901760
        %1320 = vmatpush1.msra.mxu0 %v1319
        %v1321 = vand.u32 %v369, 4294901760
        %1322 = vmatprep.subr.mxu0 %v1321
        %v1323 = vand.u32 %v368, 4294901760
        %1324 = vmatpush1.msra.mxu0 %v1323
        %v1325 = vand.u32 %v371, 4294901760
        %1326 = vmatprep.subr.mxu0 %v1325
        %v1327 = vand.u32 %v370, 4294901760
        %1328 = vmatpush1.msra.mxu0 %v1327
        %v1329 = vand.u32 %v373, 4294901760
        %1330 = vmatprep.subr.mxu0 %v1329
        %v1331 = vand.u32 %v372, 4294901760
        %1332 = vmatpush1.msra.mxu0 %v1331
        %v1333 = vand.u32 %v375, 4294901760
        %1334 = vmatprep.subr.mxu0 %v1333
        %v1335 = vand.u32 %v374, 4294901760
        %1336 = vmatpush1.msra.mxu0 %v1335
        %v1337 = vand.u32 %v377, 4294901760
        %1338 = vmatprep.subr.mxu0 %v1337
        %v1339 = vand.u32 %v376, 4294901760
        %1340 = vmatpush1.msra.mxu0 %v1339
        %v1341 = vand.u32 %v379, 4294901760
        %1342 = vmatprep.subr.mxu0 %v1341
        %v1343 = vand.u32 %v378, 4294901760
        %1344 = vmatpush1.msra.mxu0 %v1343
        %v1345 = vand.u32 %v381, 4294901760
        %1346 = vmatprep.subr.mxu0 %v1345
        %v1347 = vand.u32 %v380, 4294901760
        %1348 = vmatpush1.msra.mxu0 %v1347
        %v1349 = vand.u32 %v311, 4294901760
        %v1350 = vsub.f32 %v311, %v1349
        %v1351 = vand.u32 %v1350, 4294901760
        %1352 = vmatprep.mubr.f32.mxu0 %v1351
        %v1353 = vand.u32 %v310, 4294901760
        %v1354 = vsub.f32 %v310, %v1353
        %v1355 = vand.u32 %v1354, 4294901760
        %1356 = vmatmul.mubr.f32.gmra.mrb[0].mxu0 %v1355
        %v1357 = vpop.f32.mrb[0].mxu0
        %v1358 = vadd.f32 %v1207, %v1357
        %v1359 = vpop.f32.mrb[0].mxu0
        %v1360 = vadd.f32 %v1209, %v1359
        %v1361 = vand.u32 %v315, 4294901760
        %v1362 = vsub.f32 %v315, %v1361
        %v1363 = vand.u32 %v1362, 4294901760
        %1364 = vmatprep.mubr.f32.mxu0 %v1363
        %v1365 = vand.u32 %v314, 4294901760
        %v1366 = vsub.f32 %v314, %v1365
        %v1367 = vand.u32 %v1366, 4294901760
        %1368 = vmatmul.mubr.f32.gmra.mrb[0].mxu0 %v1367
        %v1369 = vpop.f32.mrb[0].mxu0
        %v1370 = vadd.f32 %v1217, %v1369
        %v1371 = vpop.f32.mrb[0].mxu0
        %v1372 = vadd.f32 %v1219, %v1371
        %1373 = vdwg.mxu0
        %v1374 = vand.u32 %v319, 4294901760
        %v1375 = vsub.f32 %v319, %v1374
        %v1376 = vand.u32 %v1375, 4294901760
        %1377 = vmatprep.subr.mxu0 %v1376
        %v1378 = vand.u32 %v318, 4294901760
        %v1379 = vsub.f32 %v318, %v1378
        %v1380 = vand.u32 %v1379, 4294901760
        %1381 = vmatpush1.msra.mxu0 %v1380
        %v1382 = vand.u32 %v321, 4294901760
        %v1383 = vsub.f32 %v321, %v1382
        %v1384 = vand.u32 %v1383, 4294901760
        %1385 = vmatprep.subr.mxu0 %v1384
        %v1386 = vand.u32 %v320, 4294901760
        %v1387 = vsub.f32 %v320, %v1386
        %v1388 = vand.u32 %v1387, 4294901760
        %1389 = vmatpush1.msra.mxu0 %v1388
        %v1390 = vand.u32 %v323, 4294901760
        %v1391 = vsub.f32 %v323, %v1390
        %v1392 = vand.u32 %v1391, 4294901760
        %1393 = vmatprep.subr.mxu0 %v1392
        %v1394 = vand.u32 %v322, 4294901760
        %v1395 = vsub.f32 %v322, %v1394
        %v1396 = vand.u32 %v1395, 4294901760
        %1397 = vmatpush1.msra.mxu0 %v1396
        %v1398 = vand.u32 %v325, 4294901760
        %v1399 = vsub.f32 %v325, %v1398
        %v1400 = vand.u32 %v1399, 4294901760
        %1401 = vmatprep.subr.mxu0 %v1400
        %v1402 = vand.u32 %v324, 4294901760
        %v1403 = vsub.f32 %v324, %v1402
        %v1404 = vand.u32 %v1403, 4294901760
        %1405 = vmatpush1.msra.mxu0 %v1404
        %v1406 = vand.u32 %v327, 4294901760
        %v1407 = vsub.f32 %v327, %v1406
        %v1408 = vand.u32 %v1407, 4294901760
        %1409 = vmatprep.subr.mxu0 %v1408
        %v1410 = vand.u32 %v326, 4294901760
        %v1411 = vsub.f32 %v326, %v1410
        %v1412 = vand.u32 %v1411, 4294901760
        %1413 = vmatpush1.msra.mxu0 %v1412
        %v1414 = vand.u32 %v329, 4294901760
        %v1415 = vsub.f32 %v329, %v1414
        %v1416 = vand.u32 %v1415, 4294901760
        %1417 = vmatprep.subr.mxu0 %v1416
        %v1418 = vand.u32 %v328, 4294901760
        %v1419 = vsub.f32 %v328, %v1418
        %v1420 = vand.u32 %v1419, 4294901760
        %1421 = vmatpush1.msra.mxu0 %v1420
        %v1422 = vand.u32 %v331, 4294901760
        %v1423 = vsub.f32 %v331, %v1422
        %v1424 = vand.u32 %v1423, 4294901760
        %1425 = vmatprep.subr.mxu0 %v1424
        %v1426 = vand.u32 %v330, 4294901760
        %v1427 = vsub.f32 %v330, %v1426
        %v1428 = vand.u32 %v1427, 4294901760
        %1429 = vmatpush1.msra.mxu0 %v1428
        %v1430 = vand.u32 %v333, 4294901760
        %v1431 = vsub.f32 %v333, %v1430
        %v1432 = vand.u32 %v1431, 4294901760
        %1433 = vmatprep.subr.mxu0 %v1432
        %v1434 = vand.u32 %v332, 4294901760
        %v1435 = vsub.f32 %v332, %v1434
        %v1436 = vand.u32 %v1435, 4294901760
        %1437 = vmatpush1.msra.mxu0 %v1436
        %v1438 = vand.u32 %v335, 4294901760
        %v1439 = vsub.f32 %v335, %v1438
        %v1440 = vand.u32 %v1439, 4294901760
        %1441 = vmatprep.subr.mxu0 %v1440
        %v1442 = vand.u32 %v334, 4294901760
        %v1443 = vsub.f32 %v334, %v1442
        %v1444 = vand.u32 %v1443, 4294901760
        %1445 = vmatpush1.msra.mxu0 %v1444
        %v1446 = vand.u32 %v337, 4294901760
        %v1447 = vsub.f32 %v337, %v1446
        %v1448 = vand.u32 %v1447, 4294901760
        %1449 = vmatprep.subr.mxu0 %v1448
        %v1450 = vand.u32 %v336, 4294901760
        %v1451 = vsub.f32 %v336, %v1450
        %v1452 = vand.u32 %v1451, 4294901760
        %1453 = vmatpush1.msra.mxu0 %v1452
        %v1454 = vand.u32 %v339, 4294901760
        %v1455 = vsub.f32 %v339, %v1454
        %v1456 = vand.u32 %v1455, 4294901760
        %1457 = vmatprep.subr.mxu0 %v1456
        %v1458 = vand.u32 %v338, 4294901760
        %v1459 = vsub.f32 %v338, %v1458
        %v1460 = vand.u32 %v1459, 4294901760
        %1461 = vmatpush1.msra.mxu0 %v1460
        %v1462 = vand.u32 %v341, 4294901760
        %v1463 = vsub.f32 %v341, %v1462
        %v1464 = vand.u32 %v1463, 4294901760
        %1465 = vmatprep.subr.mxu0 %v1464
        %v1466 = vand.u32 %v340, 4294901760
        %v1467 = vsub.f32 %v340, %v1466
        %v1468 = vand.u32 %v1467, 4294901760
        %1469 = vmatpush1.msra.mxu0 %v1468
        %v1470 = vand.u32 %v343, 4294901760
        %v1471 = vsub.f32 %v343, %v1470
        %v1472 = vand.u32 %v1471, 4294901760
        %1473 = vmatprep.subr.mxu0 %v1472
        %v1474 = vand.u32 %v342, 4294901760
        %v1475 = vsub.f32 %v342, %v1474
        %v1476 = vand.u32 %v1475, 4294901760
        %1477 = vmatpush1.msra.mxu0 %v1476
        %v1478 = vand.u32 %v345, 4294901760
        %v1479 = vsub.f32 %v345, %v1478
        %v1480 = vand.u32 %v1479, 4294901760
        %1481 = vmatprep.subr.mxu0 %v1480
        %v1482 = vand.u32 %v344, 4294901760
        %v1483 = vsub.f32 %v344, %v1482
        %v1484 = vand.u32 %v1483, 4294901760
        %1485 = vmatpush1.msra.mxu0 %v1484
        %v1486 = vand.u32 %v347, 4294901760
        %v1487 = vsub.f32 %v347, %v1486
        %v1488 = vand.u32 %v1487, 4294901760
        %1489 = vmatprep.subr.mxu0 %v1488
        %v1490 = vand.u32 %v346, 4294901760
        %v1491 = vsub.f32 %v346, %v1490
        %v1492 = vand.u32 %v1491, 4294901760
        %1493 = vmatpush1.msra.mxu0 %v1492
        %v1494 = vand.u32 %v349, 4294901760
        %v1495 = vsub.f32 %v349, %v1494
        %v1496 = vand.u32 %v1495, 4294901760
        %1497 = vmatprep.subr.mxu0 %v1496
        %v1498 = vand.u32 %v348, 4294901760
        %v1499 = vsub.f32 %v348, %v1498
        %v1500 = vand.u32 %v1499, 4294901760
        %1501 = vmatpush1.msra.mxu0 %v1500
        %v1502 = vand.u32 %v351, 4294901760
        %v1503 = vsub.f32 %v351, %v1502
        %v1504 = vand.u32 %v1503, 4294901760
        %1505 = vmatprep.subr.mxu0 %v1504
        %v1506 = vand.u32 %v350, 4294901760
        %v1507 = vsub.f32 %v350, %v1506
        %v1508 = vand.u32 %v1507, 4294901760
        %1509 = vmatpush1.msra.mxu0 %v1508
        %v1510 = vand.u32 %v353, 4294901760
        %v1511 = vsub.f32 %v353, %v1510
        %v1512 = vand.u32 %v1511, 4294901760
        %1513 = vmatprep.subr.mxu0 %v1512
        %v1514 = vand.u32 %v352, 4294901760
        %v1515 = vsub.f32 %v352, %v1514
        %v1516 = vand.u32 %v1515, 4294901760
        %1517 = vmatpush1.msra.mxu0 %v1516
        %v1518 = vand.u32 %v355, 4294901760
        %v1519 = vsub.f32 %v355, %v1518
        %v1520 = vand.u32 %v1519, 4294901760
        %1521 = vmatprep.subr.mxu0 %v1520
        %v1522 = vand.u32 %v354, 4294901760
        %v1523 = vsub.f32 %v354, %v1522
        %v1524 = vand.u32 %v1523, 4294901760
        %1525 = vmatpush1.msra.mxu0 %v1524
        %v1526 = vand.u32 %v357, 4294901760
        %v1527 = vsub.f32 %v357, %v1526
        %v1528 = vand.u32 %v1527, 4294901760
        %1529 = vmatprep.subr.mxu0 %v1528
        %v1530 = vand.u32 %v356, 4294901760
        %v1531 = vsub.f32 %v356, %v1530
        %v1532 = vand.u32 %v1531, 4294901760
        %1533 = vmatpush1.msra.mxu0 %v1532
        %v1534 = vand.u32 %v359, 4294901760
        %v1535 = vsub.f32 %v359, %v1534
        %v1536 = vand.u32 %v1535, 4294901760
        %1537 = vmatprep.subr.mxu0 %v1536
        %v1538 = vand.u32 %v358, 4294901760
        %v1539 = vsub.f32 %v358, %v1538
        %v1540 = vand.u32 %v1539, 4294901760
        %1541 = vmatpush1.msra.mxu0 %v1540
        %v1542 = vand.u32 %v361, 4294901760
        %v1543 = vsub.f32 %v361, %v1542
        %v1544 = vand.u32 %v1543, 4294901760
        %1545 = vmatprep.subr.mxu0 %v1544
        %v1546 = vand.u32 %v360, 4294901760
        %v1547 = vsub.f32 %v360, %v1546
        %v1548 = vand.u32 %v1547, 4294901760
        %1549 = vmatpush1.msra.mxu0 %v1548
        %v1550 = vand.u32 %v363, 4294901760
        %v1551 = vsub.f32 %v363, %v1550
        %v1552 = vand.u32 %v1551, 4294901760
        %1553 = vmatprep.subr.mxu0 %v1552
        %v1554 = vand.u32 %v362, 4294901760
        %v1555 = vsub.f32 %v362, %v1554
        %v1556 = vand.u32 %v1555, 4294901760
        %1557 = vmatpush1.msra.mxu0 %v1556
        %v1558 = vand.u32 %v365, 4294901760
        %v1559 = vsub.f32 %v365, %v1558
        %v1560 = vand.u32 %v1559, 4294901760
        %1561 = vmatprep.subr.mxu0 %v1560
        %v1562 = vand.u32 %v364, 4294901760
        %v1563 = vsub.f32 %v364, %v1562
        %v1564 = vand.u32 %v1563, 4294901760
        %1565 = vmatpush1.msra.mxu0 %v1564
        %v1566 = vand.u32 %v367, 4294901760
        %v1567 = vsub.f32 %v367, %v1566
        %v1568 = vand.u32 %v1567, 4294901760
        %1569 = vmatprep.subr.mxu0 %v1568
        %v1570 = vand.u32 %v366, 4294901760
        %v1571 = vsub.f32 %v366, %v1570
        %v1572 = vand.u32 %v1571, 4294901760
        %1573 = vmatpush1.msra.mxu0 %v1572
        %v1574 = vand.u32 %v369, 4294901760
        %v1575 = vsub.f32 %v369, %v1574
        %v1576 = vand.u32 %v1575, 4294901760
        %1577 = vmatprep.subr.mxu0 %v1576
        %v1578 = vand.u32 %v368, 4294901760
        %v1579 = vsub.f32 %v368, %v1578
        %v1580 = vand.u32 %v1579, 4294901760
        %1581 = vmatpush1.msra.mxu0 %v1580
        %v1582 = vand.u32 %v371, 4294901760
        %v1583 = vsub.f32 %v371, %v1582
        %v1584 = vand.u32 %v1583, 4294901760
        %1585 = vmatprep.subr.mxu0 %v1584
        %v1586 = vand.u32 %v370, 4294901760
        %v1587 = vsub.f32 %v370, %v1586
        %v1588 = vand.u32 %v1587, 4294901760
        %1589 = vmatpush1.msra.mxu0 %v1588
        %v1590 = vand.u32 %v373, 4294901760
        %v1591 = vsub.f32 %v373, %v1590
        %v1592 = vand.u32 %v1591, 4294901760
        %1593 = vmatprep.subr.mxu0 %v1592
        %v1594 = vand.u32 %v372, 4294901760
        %v1595 = vsub.f32 %v372, %v1594
        %v1596 = vand.u32 %v1595, 4294901760
        %1597 = vmatpush1.msra.mxu0 %v1596
        %v1598 = vand.u32 %v375, 4294901760
        %v1599 = vsub.f32 %v375, %v1598
        %v1600 = vand.u32 %v1599, 4294901760
        %1601 = vmatprep.subr.mxu0 %v1600
        %v1602 = vand.u32 %v374, 4294901760
        %v1603 = vsub.f32 %v374, %v1602
        %v1604 = vand.u32 %v1603, 4294901760
        %1605 = vmatpush1.msra.mxu0 %v1604
        %v1606 = vand.u32 %v377, 4294901760
        %v1607 = vsub.f32 %v377, %v1606
        %v1608 = vand.u32 %v1607, 4294901760
        %1609 = vmatprep.subr.mxu0 %v1608
        %v1610 = vand.u32 %v376, 4294901760
        %v1611 = vsub.f32 %v376, %v1610
        %v1612 = vand.u32 %v1611, 4294901760
        %1613 = vmatpush1.msra.mxu0 %v1612
        %v1614 = vand.u32 %v379, 4294901760
        %v1615 = vsub.f32 %v379, %v1614
        %v1616 = vand.u32 %v1615, 4294901760
        %1617 = vmatprep.subr.mxu0 %v1616
        %v1618 = vand.u32 %v378, 4294901760
        %v1619 = vsub.f32 %v378, %v1618
        %v1620 = vand.u32 %v1619, 4294901760
        %1621 = vmatpush1.msra.mxu0 %v1620
        %v1622 = vand.u32 %v381, 4294901760
        %v1623 = vsub.f32 %v381, %v1622
        %v1624 = vand.u32 %v1623, 4294901760
        %1625 = vmatprep.subr.mxu0 %v1624
        %v1626 = vand.u32 %v380, 4294901760
        %v1627 = vsub.f32 %v380, %v1626
        %v1628 = vand.u32 %v1627, 4294901760
        %1629 = vmatpush1.msra.mxu0 %v1628
        %v1630 = vand.u32 %v311, 4294901760
        %1631 = vmatprep.mubr.f32.mxu0 %v1630
        %v1632 = vand.u32 %v310, 4294901760
        %1633 = vmatmul.mubr.f32.gmra.mrb[0].mxu0 %v1632
        %v1634 = vpop.f32.mrb[0].mxu0
        %v1635 = vadd.f32 %v1358, %v1634
        %v1636 = vpop.f32.mrb[0].mxu0
        %v1637 = vadd.f32 %v1360, %v1636
        %v1638 = vand.u32 %v315, 4294901760
        %1639 = vmatprep.mubr.f32.mxu0 %v1638
        %v1640 = vand.u32 %v314, 4294901760
        %1641 = vmatmul.mubr.f32.gmra.mrb[0].mxu0 %v1640
        %v1642 = vpop.f32.mrb[0].mxu0
        %v1643 = vadd.f32 %v1370, %v1642
        %v1644 = vpop.f32.mrb[0].mxu0
        %v1645 = vadd.f32 %v1372, %v1644
        %1646 = vdwg.mxu0
        %v1647 = vand.u32 %v319, 4294901760
        %1648 = vmatprep.subr.mxu0 %v1647
        %v1649 = vand.u32 %v318, 4294901760
        %1650 = vmatpush1.msra.mxu0 %v1649
        %v1651 = vand.u32 %v321, 4294901760
        %1652 = vmatprep.subr.mxu0 %v1651
        %v1653 = vand.u32 %v320, 4294901760
        %1654 = vmatpush1.msra.mxu0 %v1653
        %v1655 = vand.u32 %v323, 4294901760
        %1656 = vmatprep.subr.mxu0 %v1655
        %v1657 = vand.u32 %v322, 4294901760
        %1658 = vmatpush1.msra.mxu0 %v1657
        %v1659 = vand.u32 %v325, 4294901760
        %1660 = vmatprep.subr.mxu0 %v1659
        %v1661 = vand.u32 %v324, 4294901760
        %1662 = vmatpush1.msra.mxu0 %v1661
        %v1663 = vand.u32 %v327, 4294901760
        %1664 = vmatprep.subr.mxu0 %v1663
        %v1665 = vand.u32 %v326, 4294901760
        %1666 = vmatpush1.msra.mxu0 %v1665
        %v1667 = vand.u32 %v329, 4294901760
        %1668 = vmatprep.subr.mxu0 %v1667
        %v1669 = vand.u32 %v328, 4294901760
        %1670 = vmatpush1.msra.mxu0 %v1669
        %v1671 = vand.u32 %v331, 4294901760
        %1672 = vmatprep.subr.mxu0 %v1671
        %v1673 = vand.u32 %v330, 4294901760
        %1674 = vmatpush1.msra.mxu0 %v1673
        %v1675 = vand.u32 %v333, 4294901760
        %1676 = vmatprep.subr.mxu0 %v1675
        %v1677 = vand.u32 %v332, 4294901760
        %1678 = vmatpush1.msra.mxu0 %v1677
        %v1679 = vand.u32 %v335, 4294901760
        %1680 = vmatprep.subr.mxu0 %v1679
        %v1681 = vand.u32 %v334, 4294901760
        %1682 = vmatpush1.msra.mxu0 %v1681
        %v1683 = vand.u32 %v337, 4294901760
        %1684 = vmatprep.subr.mxu0 %v1683
        %v1685 = vand.u32 %v336, 4294901760
        %1686 = vmatpush1.msra.mxu0 %v1685
        %v1687 = vand.u32 %v339, 4294901760
        %1688 = vmatprep.subr.mxu0 %v1687
        %v1689 = vand.u32 %v338, 4294901760
        %1690 = vmatpush1.msra.mxu0 %v1689
        %v1691 = vand.u32 %v341, 4294901760
        %1692 = vmatprep.subr.mxu0 %v1691
        %v1693 = vand.u32 %v340, 4294901760
        %1694 = vmatpush1.msra.mxu0 %v1693
        %v1695 = vand.u32 %v343, 4294901760
        %1696 = vmatprep.subr.mxu0 %v1695
        %v1697 = vand.u32 %v342, 4294901760
        %1698 = vmatpush1.msra.mxu0 %v1697
        %v1699 = vand.u32 %v345, 4294901760
        %1700 = vmatprep.subr.mxu0 %v1699
        %v1701 = vand.u32 %v344, 4294901760
        %1702 = vmatpush1.msra.mxu0 %v1701
        %v1703 = vand.u32 %v347, 4294901760
        %1704 = vmatprep.subr.mxu0 %v1703
        %v1705 = vand.u32 %v346, 4294901760
        %1706 = vmatpush1.msra.mxu0 %v1705
        %v1707 = vand.u32 %v349, 4294901760
        %1708 = vmatprep.subr.mxu0 %v1707
        %v1709 = vand.u32 %v348, 4294901760
        %1710 = vmatpush1.msra.mxu0 %v1709
        %v1711 = vand.u32 %v351, 4294901760
        %1712 = vmatprep.subr.mxu0 %v1711
        %v1713 = vand.u32 %v350, 4294901760
        %1714 = vmatpush1.msra.mxu0 %v1713
        %v1715 = vand.u32 %v353, 4294901760
        %1716 = vmatprep.subr.mxu0 %v1715
        %v1717 = vand.u32 %v352, 4294901760
        %1718 = vmatpush1.msra.mxu0 %v1717
        %v1719 = vand.u32 %v355, 4294901760
        %1720 = vmatprep.subr.mxu0 %v1719
        %v1721 = vand.u32 %v354, 4294901760
        %1722 = vmatpush1.msra.mxu0 %v1721
        %v1723 = vand.u32 %v357, 4294901760
        %1724 = vmatprep.subr.mxu0 %v1723
        %v1725 = vand.u32 %v356, 4294901760
        %1726 = vmatpush1.msra.mxu0 %v1725
        %v1727 = vand.u32 %v359, 4294901760
        %1728 = vmatprep.subr.mxu0 %v1727
        %v1729 = vand.u32 %v358, 4294901760
        %1730 = vmatpush1.msra.mxu0 %v1729
        %v1731 = vand.u32 %v361, 4294901760
        %1732 = vmatprep.subr.mxu0 %v1731
        %v1733 = vand.u32 %v360, 4294901760
        %1734 = vmatpush1.msra.mxu0 %v1733
        %v1735 = vand.u32 %v363, 4294901760
        %1736 = vmatprep.subr.mxu0 %v1735
        %v1737 = vand.u32 %v362, 4294901760
        %1738 = vmatpush1.msra.mxu0 %v1737
        %v1739 = vand.u32 %v365, 4294901760
        %1740 = vmatprep.subr.mxu0 %v1739
        %v1741 = vand.u32 %v364, 4294901760
        %1742 = vmatpush1.msra.mxu0 %v1741
        %v1743 = vand.u32 %v367, 4294901760
        %1744 = vmatprep.subr.mxu0 %v1743
        %v1745 = vand.u32 %v366, 4294901760
        %1746 = vmatpush1.msra.mxu0 %v1745
        %v1747 = vand.u32 %v369, 4294901760
        %1748 = vmatprep.subr.mxu0 %v1747
        %v1749 = vand.u32 %v368, 4294901760
        %1750 = vmatpush1.msra.mxu0 %v1749
        %v1751 = vand.u32 %v371, 4294901760
        %1752 = vmatprep.subr.mxu0 %v1751
        %v1753 = vand.u32 %v370, 4294901760
        %1754 = vmatpush1.msra.mxu0 %v1753
        %v1755 = vand.u32 %v373, 4294901760
        %1756 = vmatprep.subr.mxu0 %v1755
        %v1757 = vand.u32 %v372, 4294901760
        %1758 = vmatpush1.msra.mxu0 %v1757
        %v1759 = vand.u32 %v375, 4294901760
        %1760 = vmatprep.subr.mxu0 %v1759
        %v1761 = vand.u32 %v374, 4294901760
        %1762 = vmatpush1.msra.mxu0 %v1761
        %v1763 = vand.u32 %v377, 4294901760
        %1764 = vmatprep.subr.mxu0 %v1763
        %v1765 = vand.u32 %v376, 4294901760
        %1766 = vmatpush1.msra.mxu0 %v1765
        %v1767 = vand.u32 %v379, 4294901760
        %1768 = vmatprep.subr.mxu0 %v1767
        %v1769 = vand.u32 %v378, 4294901760
        %1770 = vmatpush1.msra.mxu0 %v1769
        %v1771 = vand.u32 %v381, 4294901760
        %1772 = vmatprep.subr.mxu0 %v1771
        %v1773 = vand.u32 %v380, 4294901760
        %1774 = vmatpush1.msra.mxu0 %v1773
        %v1775 = vand.u32 %v311, 4294901760
        %1776 = vmatprep.mubr.f32.mxu0 %v1775
        %v1777 = vand.u32 %v310, 4294901760
        %1778 = vmatmul.mubr.f32.gmra.mrb[0].mxu0 %v1777
        %v1779 = vpop.f32.mrb[0].mxu0
        %v1780 = vadd.f32 %v1635, %v1779
        %v1781 = vpop.f32.mrb[0].mxu0
        %v1782 = vadd.f32 %v1637, %v1781
        %v1783 = vand.u32 %v315, 4294901760
        %1784 = vmatprep.mubr.f32.mxu0 %v1783
        %v1785 = vand.u32 %v314, 4294901760
        %1786 = vmatmul.mubr.f32.gmra.mrb[0].mxu0 %v1785
        %v1787 = vpop.f32.mrb[0].mxu0
        %v1788 = vadd.f32 %v1643, %v1787
        %v1789 = vpop.f32.mrb[0].mxu0
        %v1790 = vadd.f32 %v1645, %v1789
        %1791 = vdwg.mxu0
        %v1792 = vand.u32 %v383, 4294901760
        %1793 = vmatprep.subr.mxu0 %v1792
        %v1794 = vand.u32 %v382, 4294901760
        %1795 = vmatpush1.msra.mxu0 %v1794
        %v1796 = vand.u32 %v385, 4294901760
        %1797 = vmatprep.subr.mxu0 %v1796
        %v1798 = vand.u32 %v384, 4294901760
        %1799 = vmatpush1.msra.mxu0 %v1798
        %v1800 = vand.u32 %v387, 4294901760
        %1801 = vmatprep.subr.mxu0 %v1800
        %v1802 = vand.u32 %v386, 4294901760
        %1803 = vmatpush1.msra.mxu0 %v1802
        %v1804 = vand.u32 %v389, 4294901760
        %1805 = vmatprep.subr.mxu0 %v1804
        %v1806 = vand.u32 %v388, 4294901760
        %1807 = vmatpush1.msra.mxu0 %v1806
        %v1808 = vand.u32 %v391, 4294901760
        %1809 = vmatprep.subr.mxu0 %v1808
        %v1810 = vand.u32 %v390, 4294901760
        %1811 = vmatpush1.msra.mxu0 %v1810
        %v1812 = vand.u32 %v393, 4294901760
        %1813 = vmatprep.subr.mxu0 %v1812
        %v1814 = vand.u32 %v392, 4294901760
        %1815 = vmatpush1.msra.mxu0 %v1814
        %v1816 = vand.u32 %v395, 4294901760
        %1817 = vmatprep.subr.mxu0 %v1816
        %v1818 = vand.u32 %v394, 4294901760
        %1819 = vmatpush1.msra.mxu0 %v1818
        %v1820 = vand.u32 %v397, 4294901760
        %1821 = vmatprep.subr.mxu0 %v1820
        %v1822 = vand.u32 %v396, 4294901760
        %1823 = vmatpush1.msra.mxu0 %v1822
        %v1824 = vand.u32 %v399, 4294901760
        %1825 = vmatprep.subr.mxu0 %v1824
        %v1826 = vand.u32 %v398, 4294901760
        %1827 = vmatpush1.msra.mxu0 %v1826
        %v1828 = vand.u32 %v401, 4294901760
        %1829 = vmatprep.subr.mxu0 %v1828
        %v1830 = vand.u32 %v400, 4294901760
        %1831 = vmatpush1.msra.mxu0 %v1830
        %v1832 = vand.u32 %v403, 4294901760
        %1833 = vmatprep.subr.mxu0 %v1832
        %v1834 = vand.u32 %v402, 4294901760
        %1835 = vmatpush1.msra.mxu0 %v1834
        %v1836 = vand.u32 %v405, 4294901760
        %1837 = vmatprep.subr.mxu0 %v1836
        %v1838 = vand.u32 %v404, 4294901760
        %1839 = vmatpush1.msra.mxu0 %v1838
        %v1840 = vand.u32 %v407, 4294901760
        %1841 = vmatprep.subr.mxu0 %v1840
        %v1842 = vand.u32 %v406, 4294901760
        %1843 = vmatpush1.msra.mxu0 %v1842
        %v1844 = vand.u32 %v409, 4294901760
        %1845 = vmatprep.subr.mxu0 %v1844
        %v1846 = vand.u32 %v408, 4294901760
        %1847 = vmatpush1.msra.mxu0 %v1846
        %v1848 = vand.u32 %v411, 4294901760
        %1849 = vmatprep.subr.mxu0 %v1848
        %v1850 = vand.u32 %v410, 4294901760
        %1851 = vmatpush1.msra.mxu0 %v1850
        %v1852 = vand.u32 %v413, 4294901760
        %1853 = vmatprep.subr.mxu0 %v1852
        %v1854 = vand.u32 %v412, 4294901760
        %1855 = vmatpush1.msra.mxu0 %v1854
        %v1856 = vand.u32 %v415, 4294901760
        %1857 = vmatprep.subr.mxu0 %v1856
        %v1858 = vand.u32 %v414, 4294901760
        %1859 = vmatpush1.msra.mxu0 %v1858
        %v1860 = vand.u32 %v417, 4294901760
        %1861 = vmatprep.subr.mxu0 %v1860
        %v1862 = vand.u32 %v416, 4294901760
        %1863 = vmatpush1.msra.mxu0 %v1862
        %v1864 = vand.u32 %v419, 4294901760
        %1865 = vmatprep.subr.mxu0 %v1864
        %v1866 = vand.u32 %v418, 4294901760
        %1867 = vmatpush1.msra.mxu0 %v1866
        %v1868 = vand.u32 %v421, 4294901760
        %1869 = vmatprep.subr.mxu0 %v1868
        %v1870 = vand.u32 %v420, 4294901760
        %1871 = vmatpush1.msra.mxu0 %v1870
        %v1872 = vand.u32 %v423, 4294901760
        %1873 = vmatprep.subr.mxu0 %v1872
        %v1874 = vand.u32 %v422, 4294901760
        %1875 = vmatpush1.msra.mxu0 %v1874
        %v1876 = vand.u32 %v425, 4294901760
        %1877 = vmatprep.subr.mxu0 %v1876
        %v1878 = vand.u32 %v424, 4294901760
        %1879 = vmatpush1.msra.mxu0 %v1878
        %v1880 = vand.u32 %v427, 4294901760
        %1881 = vmatprep.subr.mxu0 %v1880
        %v1882 = vand.u32 %v426, 4294901760
        %1883 = vmatpush1.msra.mxu0 %v1882
        %v1884 = vand.u32 %v429, 4294901760
        %1885 = vmatprep.subr.mxu0 %v1884
        %v1886 = vand.u32 %v428, 4294901760
        %1887 = vmatpush1.msra.mxu0 %v1886
        %v1888 = vand.u32 %v431, 4294901760
        %1889 = vmatprep.subr.mxu0 %v1888
        %v1890 = vand.u32 %v430, 4294901760
        %1891 = vmatpush1.msra.mxu0 %v1890
        %v1892 = vand.u32 %v433, 4294901760
        %1893 = vmatprep.subr.mxu0 %v1892
        %v1894 = vand.u32 %v432, 4294901760
        %1895 = vmatpush1.msra.mxu0 %v1894
        %v1896 = vand.u32 %v435, 4294901760
        %1897 = vmatprep.subr.mxu0 %v1896
        %v1898 = vand.u32 %v434, 4294901760
        %1899 = vmatpush1.msra.mxu0 %v1898
        %v1900 = vand.u32 %v437, 4294901760
        %1901 = vmatprep.subr.mxu0 %v1900
        %v1902 = vand.u32 %v436, 4294901760
        %1903 = vmatpush1.msra.mxu0 %v1902
        %v1904 = vand.u32 %v439, 4294901760
        %1905 = vmatprep.subr.mxu0 %v1904
        %v1906 = vand.u32 %v438, 4294901760
        %1907 = vmatpush1.msra.mxu0 %v1906
        %v1908 = vand.u32 %v441, 4294901760
        %1909 = vmatprep.subr.mxu0 %v1908
        %v1910 = vand.u32 %v440, 4294901760
        %1911 = vmatpush1.msra.mxu0 %v1910
        %v1912 = vand.u32 %v443, 4294901760
        %1913 = vmatprep.subr.mxu0 %v1912
        %v1914 = vand.u32 %v442, 4294901760
        %1915 = vmatpush1.msra.mxu0 %v1914
        %v1916 = vand.u32 %v445, 4294901760
        %1917 = vmatprep.subr.mxu0 %v1916
        %v1918 = vand.u32 %v444, 4294901760
        %1919 = vmatpush1.msra.mxu0 %v1918
        %v1920 = vand.u32 %v313, 4294901760
        %v1921 = vsub.f32 %v313, %v1920
        %v1922 = vand.u32 %v1921, 4294901760
        %v1923 = vsub.f32 %v1921, %v1922
        %v1924 = vand.u32 %v1923, 4294901760
        %1925 = vmatprep.mubr.f32.mxu0 %v1924
        %v1926 = vand.u32 %v312, 4294901760
        %v1927 = vsub.f32 %v312, %v1926
        %v1928 = vand.u32 %v1927, 4294901760
        %v1929 = vsub.f32 %v1927, %v1928
        %v1930 = vand.u32 %v1929, 4294901760
        %1931 = vmatmul.mubr.f32.gmra.mrb[0].mxu0 %v1930
        %v1932 = vpop.f32.mrb[0].mxu0
        %v1933 = vadd.f32 %v1780, %v1932
        %v1934 = vpop.f32.mrb[0].mxu0
        %v1935 = vadd.f32 %v1782, %v1934
        %v1936 = vand.u32 %v317, 4294901760
        %v1937 = vsub.f32 %v317, %v1936
        %v1938 = vand.u32 %v1937, 4294901760
        %v1939 = vsub.f32 %v1937, %v1938
        %v1940 = vand.u32 %v1939, 4294901760
        %1941 = vmatprep.mubr.f32.mxu0 %v1940
        %v1942 = vand.u32 %v316, 4294901760
        %v1943 = vsub.f32 %v316, %v1942
        %v1944 = vand.u32 %v1943, 4294901760
        %v1945 = vsub.f32 %v1943, %v1944
        %v1946 = vand.u32 %v1945, 4294901760
        %1947 = vmatmul.mubr.f32.gmra.mrb[0].mxu0 %v1946
        %v1948 = vpop.f32.mrb[0].mxu0
        %v1949 = vadd.f32 %v1788, %v1948
        %v1950 = vpop.f32.mrb[0].mxu0
        %v1951 = vadd.f32 %v1790, %v1950
        %1952 = vdwg.mxu0
        %v1953 = vand.u32 %v383, 4294901760
        %v1954 = vsub.f32 %v383, %v1953
        %v1955 = vand.u32 %v1954, 4294901760
        %v1956 = vsub.f32 %v1954, %v1955
        %v1957 = vand.u32 %v1956, 4294901760
        %1958 = vmatprep.subr.mxu0 %v1957
        %v1959 = vand.u32 %v382, 4294901760
        %v1960 = vsub.f32 %v382, %v1959
        %v1961 = vand.u32 %v1960, 4294901760
        %v1962 = vsub.f32 %v1960, %v1961
        %v1963 = vand.u32 %v1962, 4294901760
        %1964 = vmatpush1.msra.mxu0 %v1963
        %v1965 = vand.u32 %v385, 4294901760
        %v1966 = vsub.f32 %v385, %v1965
        %v1967 = vand.u32 %v1966, 4294901760
        %v1968 = vsub.f32 %v1966, %v1967
        %v1969 = vand.u32 %v1968, 4294901760
        %1970 = vmatprep.subr.mxu0 %v1969
        %v1971 = vand.u32 %v384, 4294901760
        %v1972 = vsub.f32 %v384, %v1971
        %v1973 = vand.u32 %v1972, 4294901760
        %v1974 = vsub.f32 %v1972, %v1973
        %v1975 = vand.u32 %v1974, 4294901760
        %1976 = vmatpush1.msra.mxu0 %v1975
        %v1977 = vand.u32 %v387, 4294901760
        %v1978 = vsub.f32 %v387, %v1977
        %v1979 = vand.u32 %v1978, 4294901760
        %v1980 = vsub.f32 %v1978, %v1979
        %v1981 = vand.u32 %v1980, 4294901760
        %1982 = vmatprep.subr.mxu0 %v1981
        %v1983 = vand.u32 %v386, 4294901760
        %v1984 = vsub.f32 %v386, %v1983
        %v1985 = vand.u32 %v1984, 4294901760
        %v1986 = vsub.f32 %v1984, %v1985
        %v1987 = vand.u32 %v1986, 4294901760
        %1988 = vmatpush1.msra.mxu0 %v1987
        %v1989 = vand.u32 %v389, 4294901760
        %v1990 = vsub.f32 %v389, %v1989
        %v1991 = vand.u32 %v1990, 4294901760
        %v1992 = vsub.f32 %v1990, %v1991
        %v1993 = vand.u32 %v1992, 4294901760
        %1994 = vmatprep.subr.mxu0 %v1993
        %v1995 = vand.u32 %v388, 4294901760
        %v1996 = vsub.f32 %v388, %v1995
        %v1997 = vand.u32 %v1996, 4294901760
        %v1998 = vsub.f32 %v1996, %v1997
        %v1999 = vand.u32 %v1998, 4294901760
        %2000 = vmatpush1.msra.mxu0 %v1999
        %v2001 = vand.u32 %v391, 4294901760
        %v2002 = vsub.f32 %v391, %v2001
        %v2003 = vand.u32 %v2002, 4294901760
        %v2004 = vsub.f32 %v2002, %v2003
        %v2005 = vand.u32 %v2004, 4294901760
        %2006 = vmatprep.subr.mxu0 %v2005
        %v2007 = vand.u32 %v390, 4294901760
        %v2008 = vsub.f32 %v390, %v2007
        %v2009 = vand.u32 %v2008, 4294901760
        %v2010 = vsub.f32 %v2008, %v2009
        %v2011 = vand.u32 %v2010, 4294901760
        %2012 = vmatpush1.msra.mxu0 %v2011
        %v2013 = vand.u32 %v393, 4294901760
        %v2014 = vsub.f32 %v393, %v2013
        %v2015 = vand.u32 %v2014, 4294901760
        %v2016 = vsub.f32 %v2014, %v2015
        %v2017 = vand.u32 %v2016, 4294901760
        %2018 = vmatprep.subr.mxu0 %v2017
        %v2019 = vand.u32 %v392, 4294901760
        %v2020 = vsub.f32 %v392, %v2019
        %v2021 = vand.u32 %v2020, 4294901760
        %v2022 = vsub.f32 %v2020, %v2021
        %v2023 = vand.u32 %v2022, 4294901760
        %2024 = vmatpush1.msra.mxu0 %v2023
        %v2025 = vand.u32 %v395, 4294901760
        %v2026 = vsub.f32 %v395, %v2025
        %v2027 = vand.u32 %v2026, 4294901760
        %v2028 = vsub.f32 %v2026, %v2027
        %v2029 = vand.u32 %v2028, 4294901760
        %2030 = vmatprep.subr.mxu0 %v2029
        %v2031 = vand.u32 %v394, 4294901760
        %v2032 = vsub.f32 %v394, %v2031
        %v2033 = vand.u32 %v2032, 4294901760
        %v2034 = vsub.f32 %v2032, %v2033
        %v2035 = vand.u32 %v2034, 4294901760
        %2036 = vmatpush1.msra.mxu0 %v2035
        %v2037 = vand.u32 %v397, 4294901760
        %v2038 = vsub.f32 %v397, %v2037
        %v2039 = vand.u32 %v2038, 4294901760
        %v2040 = vsub.f32 %v2038, %v2039
        %v2041 = vand.u32 %v2040, 4294901760
        %2042 = vmatprep.subr.mxu0 %v2041
        %v2043 = vand.u32 %v396, 4294901760
        %v2044 = vsub.f32 %v396, %v2043
        %v2045 = vand.u32 %v2044, 4294901760
        %v2046 = vsub.f32 %v2044, %v2045
        %v2047 = vand.u32 %v2046, 4294901760
        %2048 = vmatpush1.msra.mxu0 %v2047
        %v2049 = vand.u32 %v399, 4294901760
        %v2050 = vsub.f32 %v399, %v2049
        %v2051 = vand.u32 %v2050, 4294901760
        %v2052 = vsub.f32 %v2050, %v2051
        %v2053 = vand.u32 %v2052, 4294901760
        %2054 = vmatprep.subr.mxu0 %v2053
        %v2055 = vand.u32 %v398, 4294901760
        %v2056 = vsub.f32 %v398, %v2055
        %v2057 = vand.u32 %v2056, 4294901760
        %v2058 = vsub.f32 %v2056, %v2057
        %v2059 = vand.u32 %v2058, 4294901760
        %2060 = vmatpush1.msra.mxu0 %v2059
        %v2061 = vand.u32 %v401, 4294901760
        %v2062 = vsub.f32 %v401, %v2061
        %v2063 = vand.u32 %v2062, 4294901760
        %v2064 = vsub.f32 %v2062, %v2063
        %v2065 = vand.u32 %v2064, 4294901760
        %2066 = vmatprep.subr.mxu0 %v2065
        %v2067 = vand.u32 %v400, 4294901760
        %v2068 = vsub.f32 %v400, %v2067
        %v2069 = vand.u32 %v2068, 4294901760
        %v2070 = vsub.f32 %v2068, %v2069
        %v2071 = vand.u32 %v2070, 4294901760
        %2072 = vmatpush1.msra.mxu0 %v2071
        %v2073 = vand.u32 %v403, 4294901760
        %v2074 = vsub.f32 %v403, %v2073
        %v2075 = vand.u32 %v2074, 4294901760
        %v2076 = vsub.f32 %v2074, %v2075
        %v2077 = vand.u32 %v2076, 4294901760
        %2078 = vmatprep.subr.mxu0 %v2077
        %v2079 = vand.u32 %v402, 4294901760
        %v2080 = vsub.f32 %v402, %v2079
        %v2081 = vand.u32 %v2080, 4294901760
        %v2082 = vsub.f32 %v2080, %v2081
        %v2083 = vand.u32 %v2082, 4294901760
        %2084 = vmatpush1.msra.mxu0 %v2083
        %v2085 = vand.u32 %v405, 4294901760
        %v2086 = vsub.f32 %v405, %v2085
        %v2087 = vand.u32 %v2086, 4294901760
        %v2088 = vsub.f32 %v2086, %v2087
        %v2089 = vand.u32 %v2088, 4294901760
        %2090 = vmatprep.subr.mxu0 %v2089
        %v2091 = vand.u32 %v404, 4294901760
        %v2092 = vsub.f32 %v404, %v2091
        %v2093 = vand.u32 %v2092, 4294901760
        %v2094 = vsub.f32 %v2092, %v2093
        %v2095 = vand.u32 %v2094, 4294901760
        %2096 = vmatpush1.msra.mxu0 %v2095
        %v2097 = vand.u32 %v407, 4294901760
        %v2098 = vsub.f32 %v407, %v2097
        %v2099 = vand.u32 %v2098, 4294901760
        %v2100 = vsub.f32 %v2098, %v2099
        %v2101 = vand.u32 %v2100, 4294901760
        %2102 = vmatprep.subr.mxu0 %v2101
        %v2103 = vand.u32 %v406, 4294901760
        %v2104 = vsub.f32 %v406, %v2103
        %v2105 = vand.u32 %v2104, 4294901760
        %v2106 = vsub.f32 %v2104, %v2105
        %v2107 = vand.u32 %v2106, 4294901760
        %2108 = vmatpush1.msra.mxu0 %v2107
        %v2109 = vand.u32 %v409, 4294901760
        %v2110 = vsub.f32 %v409, %v2109
        %v2111 = vand.u32 %v2110, 4294901760
        %v2112 = vsub.f32 %v2110, %v2111
        %v2113 = vand.u32 %v2112, 4294901760
        %2114 = vmatprep.subr.mxu0 %v2113
        %v2115 = vand.u32 %v408, 4294901760
        %v2116 = vsub.f32 %v408, %v2115
        %v2117 = vand.u32 %v2116, 4294901760
        %v2118 = vsub.f32 %v2116, %v2117
        %v2119 = vand.u32 %v2118, 4294901760
        %2120 = vmatpush1.msra.mxu0 %v2119
        %v2121 = vand.u32 %v411, 4294901760
        %v2122 = vsub.f32 %v411, %v2121
        %v2123 = vand.u32 %v2122, 4294901760
        %v2124 = vsub.f32 %v2122, %v2123
        %v2125 = vand.u32 %v2124, 4294901760
        %2126 = vmatprep.subr.mxu0 %v2125
        %v2127 = vand.u32 %v410, 4294901760
        %v2128 = vsub.f32 %v410, %v2127
        %v2129 = vand.u32 %v2128, 4294901760
        %v2130 = vsub.f32 %v2128, %v2129
        %v2131 = vand.u32 %v2130, 4294901760
        %2132 = vmatpush1.msra.mxu0 %v2131
        %v2133 = vand.u32 %v413, 4294901760
        %v2134 = vsub.f32 %v413, %v2133
        %v2135 = vand.u32 %v2134, 4294901760
        %v2136 = vsub.f32 %v2134, %v2135
        %v2137 = vand.u32 %v2136, 4294901760
        %2138 = vmatprep.subr.mxu0 %v2137
        %v2139 = vand.u32 %v412, 4294901760
        %v2140 = vsub.f32 %v412, %v2139
        %v2141 = vand.u32 %v2140, 4294901760
        %v2142 = vsub.f32 %v2140, %v2141
        %v2143 = vand.u32 %v2142, 4294901760
        %2144 = vmatpush1.msra.mxu0 %v2143
        %v2145 = vand.u32 %v415, 4294901760
        %v2146 = vsub.f32 %v415, %v2145
        %v2147 = vand.u32 %v2146, 4294901760
        %v2148 = vsub.f32 %v2146, %v2147
        %v2149 = vand.u32 %v2148, 4294901760
        %2150 = vmatprep.subr.mxu0 %v2149
        %v2151 = vand.u32 %v414, 4294901760
        %v2152 = vsub.f32 %v414, %v2151
        %v2153 = vand.u32 %v2152, 4294901760
        %v2154 = vsub.f32 %v2152, %v2153
        %v2155 = vand.u32 %v2154, 4294901760
        %2156 = vmatpush1.msra.mxu0 %v2155
        %v2157 = vand.u32 %v417, 4294901760
        %v2158 = vsub.f32 %v417, %v2157
        %v2159 = vand.u32 %v2158, 4294901760
        %v2160 = vsub.f32 %v2158, %v2159
        %v2161 = vand.u32 %v2160, 4294901760
        %2162 = vmatprep.subr.mxu0 %v2161
        %v2163 = vand.u32 %v416, 4294901760
        %v2164 = vsub.f32 %v416, %v2163
        %v2165 = vand.u32 %v2164, 4294901760
        %v2166 = vsub.f32 %v2164, %v2165
        %v2167 = vand.u32 %v2166, 4294901760
        %2168 = vmatpush1.msra.mxu0 %v2167
        %v2169 = vand.u32 %v419, 4294901760
        %v2170 = vsub.f32 %v419, %v2169
        %v2171 = vand.u32 %v2170, 4294901760
        %v2172 = vsub.f32 %v2170, %v2171
        %v2173 = vand.u32 %v2172, 4294901760
        %2174 = vmatprep.subr.mxu0 %v2173
        %v2175 = vand.u32 %v418, 4294901760
        %v2176 = vsub.f32 %v418, %v2175
        %v2177 = vand.u32 %v2176, 4294901760
        %v2178 = vsub.f32 %v2176, %v2177
        %v2179 = vand.u32 %v2178, 4294901760
        %2180 = vmatpush1.msra.mxu0 %v2179
        %v2181 = vand.u32 %v421, 4294901760
        %v2182 = vsub.f32 %v421, %v2181
        %v2183 = vand.u32 %v2182, 4294901760
        %v2184 = vsub.f32 %v2182, %v2183
        %v2185 = vand.u32 %v2184, 4294901760
        %2186 = vmatprep.subr.mxu0 %v2185
        %v2187 = vand.u32 %v420, 4294901760
        %v2188 = vsub.f32 %v420, %v2187
        %v2189 = vand.u32 %v2188, 4294901760
        %v2190 = vsub.f32 %v2188, %v2189
        %v2191 = vand.u32 %v2190, 4294901760
        %2192 = vmatpush1.msra.mxu0 %v2191
        %v2193 = vand.u32 %v423, 4294901760
        %v2194 = vsub.f32 %v423, %v2193
        %v2195 = vand.u32 %v2194, 4294901760
        %v2196 = vsub.f32 %v2194, %v2195
        %v2197 = vand.u32 %v2196, 4294901760
        %2198 = vmatprep.subr.mxu0 %v2197
        %v2199 = vand.u32 %v422, 4294901760
        %v2200 = vsub.f32 %v422, %v2199
        %v2201 = vand.u32 %v2200, 4294901760
        %v2202 = vsub.f32 %v2200, %v2201
        %v2203 = vand.u32 %v2202, 4294901760
        %2204 = vmatpush1.msra.mxu0 %v2203
        %v2205 = vand.u32 %v425, 4294901760
        %v2206 = vsub.f32 %v425, %v2205
        %v2207 = vand.u32 %v2206, 4294901760
        %v2208 = vsub.f32 %v2206, %v2207
        %v2209 = vand.u32 %v2208, 4294901760
        %2210 = vmatprep.subr.mxu0 %v2209
        %v2211 = vand.u32 %v424, 4294901760
        %v2212 = vsub.f32 %v424, %v2211
        %v2213 = vand.u32 %v2212, 4294901760
        %v2214 = vsub.f32 %v2212, %v2213
        %v2215 = vand.u32 %v2214, 4294901760
        %2216 = vmatpush1.msra.mxu0 %v2215
        %v2217 = vand.u32 %v427, 4294901760
        %v2218 = vsub.f32 %v427, %v2217
        %v2219 = vand.u32 %v2218, 4294901760
        %v2220 = vsub.f32 %v2218, %v2219
        %v2221 = vand.u32 %v2220, 4294901760
        %2222 = vmatprep.subr.mxu0 %v2221
        %v2223 = vand.u32 %v426, 4294901760
        %v2224 = vsub.f32 %v426, %v2223
        %v2225 = vand.u32 %v2224, 4294901760
        %v2226 = vsub.f32 %v2224, %v2225
        %v2227 = vand.u32 %v2226, 4294901760
        %2228 = vmatpush1.msra.mxu0 %v2227
        %v2229 = vand.u32 %v429, 4294901760
        %v2230 = vsub.f32 %v429, %v2229
        %v2231 = vand.u32 %v2230, 4294901760
        %v2232 = vsub.f32 %v2230, %v2231
        %v2233 = vand.u32 %v2232, 4294901760
        %2234 = vmatprep.subr.mxu0 %v2233
        %v2235 = vand.u32 %v428, 4294901760
        %v2236 = vsub.f32 %v428, %v2235
        %v2237 = vand.u32 %v2236, 4294901760
        %v2238 = vsub.f32 %v2236, %v2237
        %v2239 = vand.u32 %v2238, 4294901760
        %2240 = vmatpush1.msra.mxu0 %v2239
        %v2241 = vand.u32 %v431, 4294901760
        %v2242 = vsub.f32 %v431, %v2241
        %v2243 = vand.u32 %v2242, 4294901760
        %v2244 = vsub.f32 %v2242, %v2243
        %v2245 = vand.u32 %v2244, 4294901760
        %2246 = vmatprep.subr.mxu0 %v2245
        %v2247 = vand.u32 %v430, 4294901760
        %v2248 = vsub.f32 %v430, %v2247
        %v2249 = vand.u32 %v2248, 4294901760
        %v2250 = vsub.f32 %v2248, %v2249
        %v2251 = vand.u32 %v2250, 4294901760
        %2252 = vmatpush1.msra.mxu0 %v2251
        %v2253 = vand.u32 %v433, 4294901760
        %v2254 = vsub.f32 %v433, %v2253
        %v2255 = vand.u32 %v2254, 4294901760
        %v2256 = vsub.f32 %v2254, %v2255
        %v2257 = vand.u32 %v2256, 4294901760
        %2258 = vmatprep.subr.mxu0 %v2257
        %v2259 = vand.u32 %v432, 4294901760
        %v2260 = vsub.f32 %v432, %v2259
        %v2261 = vand.u32 %v2260, 4294901760
        %v2262 = vsub.f32 %v2260, %v2261
        %v2263 = vand.u32 %v2262, 4294901760
        %2264 = vmatpush1.msra.mxu0 %v2263
        %v2265 = vand.u32 %v435, 4294901760
        %v2266 = vsub.f32 %v435, %v2265
        %v2267 = vand.u32 %v2266, 4294901760
        %v2268 = vsub.f32 %v2266, %v2267
        %v2269 = vand.u32 %v2268, 4294901760
        %2270 = vmatprep.subr.mxu0 %v2269
        %v2271 = vand.u32 %v434, 4294901760
        %v2272 = vsub.f32 %v434, %v2271
        %v2273 = vand.u32 %v2272, 4294901760
        %v2274 = vsub.f32 %v2272, %v2273
        %v2275 = vand.u32 %v2274, 4294901760
        %2276 = vmatpush1.msra.mxu0 %v2275
        %v2277 = vand.u32 %v437, 4294901760
        %v2278 = vsub.f32 %v437, %v2277
        %v2279 = vand.u32 %v2278, 4294901760
        %v2280 = vsub.f32 %v2278, %v2279
        %v2281 = vand.u32 %v2280, 4294901760
        %2282 = vmatprep.subr.mxu0 %v2281
        %v2283 = vand.u32 %v436, 4294901760
        %v2284 = vsub.f32 %v436, %v2283
        %v2285 = vand.u32 %v2284, 4294901760
        %v2286 = vsub.f32 %v2284, %v2285
        %v2287 = vand.u32 %v2286, 4294901760
        %2288 = vmatpush1.msra.mxu0 %v2287
        %v2289 = vand.u32 %v439, 4294901760
        %v2290 = vsub.f32 %v439, %v2289
        %v2291 = vand.u32 %v2290, 4294901760
        %v2292 = vsub.f32 %v2290, %v2291
        %v2293 = vand.u32 %v2292, 4294901760
        %2294 = vmatprep.subr.mxu0 %v2293
        %v2295 = vand.u32 %v438, 4294901760
        %v2296 = vsub.f32 %v438, %v2295
        %v2297 = vand.u32 %v2296, 4294901760
        %v2298 = vsub.f32 %v2296, %v2297
        %v2299 = vand.u32 %v2298, 4294901760
        %2300 = vmatpush1.msra.mxu0 %v2299
        %v2301 = vand.u32 %v441, 4294901760
        %v2302 = vsub.f32 %v441, %v2301
        %v2303 = vand.u32 %v2302, 4294901760
        %v2304 = vsub.f32 %v2302, %v2303
        %v2305 = vand.u32 %v2304, 4294901760
        %2306 = vmatprep.subr.mxu0 %v2305
        %v2307 = vand.u32 %v440, 4294901760
        %v2308 = vsub.f32 %v440, %v2307
        %v2309 = vand.u32 %v2308, 4294901760
        %v2310 = vsub.f32 %v2308, %v2309
        %v2311 = vand.u32 %v2310, 4294901760
        %2312 = vmatpush1.msra.mxu0 %v2311
        %v2313 = vand.u32 %v443, 4294901760
        %v2314 = vsub.f32 %v443, %v2313
        %v2315 = vand.u32 %v2314, 4294901760
        %v2316 = vsub.f32 %v2314, %v2315
        %v2317 = vand.u32 %v2316, 4294901760
        %2318 = vmatprep.subr.mxu0 %v2317
        %v2319 = vand.u32 %v442, 4294901760
        %v2320 = vsub.f32 %v442, %v2319
        %v2321 = vand.u32 %v2320, 4294901760
        %v2322 = vsub.f32 %v2320, %v2321
        %v2323 = vand.u32 %v2322, 4294901760
        %2324 = vmatpush1.msra.mxu0 %v2323
        %v2325 = vand.u32 %v445, 4294901760
        %v2326 = vsub.f32 %v445, %v2325
        %v2327 = vand.u32 %v2326, 4294901760
        %v2328 = vsub.f32 %v2326, %v2327
        %v2329 = vand.u32 %v2328, 4294901760
        %2330 = vmatprep.subr.mxu0 %v2329
        %v2331 = vand.u32 %v444, 4294901760
        %v2332 = vsub.f32 %v444, %v2331
        %v2333 = vand.u32 %v2332, 4294901760
        %v2334 = vsub.f32 %v2332, %v2333
        %v2335 = vand.u32 %v2334, 4294901760
        %2336 = vmatpush1.msra.mxu0 %v2335
        %v2337 = vand.u32 %v313, 4294901760
        %2338 = vmatprep.mubr.f32.mxu0 %v2337
        %v2339 = vand.u32 %v312, 4294901760
        %2340 = vmatmul.mubr.f32.gmra.mrb[0].mxu0 %v2339
        %v2341 = vpop.f32.mrb[0].mxu0
        %v2342 = vadd.f32 %v1933, %v2341
        %v2343 = vpop.f32.mrb[0].mxu0
        %v2344 = vadd.f32 %v1935, %v2343
        %v2345 = vand.u32 %v317, 4294901760
        %2346 = vmatprep.mubr.f32.mxu0 %v2345
        %v2347 = vand.u32 %v316, 4294901760
        %2348 = vmatmul.mubr.f32.gmra.mrb[0].mxu0 %v2347
        %v2349 = vpop.f32.mrb[0].mxu0
        %v2350 = vadd.f32 %v1949, %v2349
        %v2351 = vpop.f32.mrb[0].mxu0
        %v2352 = vadd.f32 %v1951, %v2351
        %2353 = vdwg.mxu0
        %v2354 = vand.u32 %v383, 4294901760
        %v2355 = vsub.f32 %v383, %v2354
        %2356 = vmatprep.subr.mxu0 %v2355
        %v2357 = vand.u32 %v382, 4294901760
        %v2358 = vsub.f32 %v382, %v2357
        %2359 = vmatpush1.msra.mxu0 %v2358
        %v2360 = vand.u32 %v385, 4294901760
        %v2361 = vsub.f32 %v385, %v2360
        %2362 = vmatprep.subr.mxu0 %v2361
        %v2363 = vand.u32 %v384, 4294901760
        %v2364 = vsub.f32 %v384, %v2363
        %2365 = vmatpush1.msra.mxu0 %v2364
        %v2366 = vand.u32 %v387, 4294901760
        %v2367 = vsub.f32 %v387, %v2366
        %2368 = vmatprep.subr.mxu0 %v2367
        %v2369 = vand.u32 %v386, 4294901760
        %v2370 = vsub.f32 %v386, %v2369
        %2371 = vmatpush1.msra.mxu0 %v2370
        %v2372 = vand.u32 %v389, 4294901760
        %v2373 = vsub.f32 %v389, %v2372
        %2374 = vmatprep.subr.mxu0 %v2373
        %v2375 = vand.u32 %v388, 4294901760
        %v2376 = vsub.f32 %v388, %v2375
        %2377 = vmatpush1.msra.mxu0 %v2376
        %v2378 = vand.u32 %v391, 4294901760
        %v2379 = vsub.f32 %v391, %v2378
        %2380 = vmatprep.subr.mxu0 %v2379
        %v2381 = vand.u32 %v390, 4294901760
        %v2382 = vsub.f32 %v390, %v2381
        %2383 = vmatpush1.msra.mxu0 %v2382
        %v2384 = vand.u32 %v393, 4294901760
        %v2385 = vsub.f32 %v393, %v2384
        %2386 = vmatprep.subr.mxu0 %v2385
        %v2387 = vand.u32 %v392, 4294901760
        %v2388 = vsub.f32 %v392, %v2387
        %2389 = vmatpush1.msra.mxu0 %v2388
        %v2390 = vand.u32 %v395, 4294901760
        %v2391 = vsub.f32 %v395, %v2390
        %2392 = vmatprep.subr.mxu0 %v2391
        %v2393 = vand.u32 %v394, 4294901760
        %v2394 = vsub.f32 %v394, %v2393
        %2395 = vmatpush1.msra.mxu0 %v2394
        %v2396 = vand.u32 %v397, 4294901760
        %v2397 = vsub.f32 %v397, %v2396
        %2398 = vmatprep.subr.mxu0 %v2397
        %v2399 = vand.u32 %v396, 4294901760
        %v2400 = vsub.f32 %v396, %v2399
        %2401 = vmatpush1.msra.mxu0 %v2400
        %v2402 = vand.u32 %v399, 4294901760
        %v2403 = vsub.f32 %v399, %v2402
        %2404 = vmatprep.subr.mxu0 %v2403
        %v2405 = vand.u32 %v398, 4294901760
        %v2406 = vsub.f32 %v398, %v2405
        %2407 = vmatpush1.msra.mxu0 %v2406
        %v2408 = vand.u32 %v401, 4294901760
        %v2409 = vsub.f32 %v401, %v2408
        %2410 = vmatprep.subr.mxu0 %v2409
        %v2411 = vand.u32 %v400, 4294901760
        %v2412 = vsub.f32 %v400, %v2411
        %2413 = vmatpush1.msra.mxu0 %v2412
        %v2414 = vand.u32 %v403, 4294901760
        %v2415 = vsub.f32 %v403, %v2414
        %2416 = vmatprep.subr.mxu0 %v2415
        %v2417 = vand.u32 %v402, 4294901760
        %v2418 = vsub.f32 %v402, %v2417
        %2419 = vmatpush1.msra.mxu0 %v2418
        %v2420 = vand.u32 %v405, 4294901760
        %v2421 = vsub.f32 %v405, %v2420
        %2422 = vmatprep.subr.mxu0 %v2421
        %v2423 = vand.u32 %v404, 4294901760
        %v2424 = vsub.f32 %v404, %v2423
        %2425 = vmatpush1.msra.mxu0 %v2424
        %v2426 = vand.u32 %v407, 4294901760
        %v2427 = vsub.f32 %v407, %v2426
        %2428 = vmatprep.subr.mxu0 %v2427
        %v2429 = vand.u32 %v406, 4294901760
        %v2430 = vsub.f32 %v406, %v2429
        %2431 = vmatpush1.msra.mxu0 %v2430
        %v2432 = vand.u32 %v409, 4294901760
        %v2433 = vsub.f32 %v409, %v2432
        %2434 = vmatprep.subr.mxu0 %v2433
        %v2435 = vand.u32 %v408, 4294901760
        %v2436 = vsub.f32 %v408, %v2435
        %2437 = vmatpush1.msra.mxu0 %v2436
        %v2438 = vand.u32 %v411, 4294901760
        %v2439 = vsub.f32 %v411, %v2438
        %2440 = vmatprep.subr.mxu0 %v2439
        %v2441 = vand.u32 %v410, 4294901760
        %v2442 = vsub.f32 %v410, %v2441
        %2443 = vmatpush1.msra.mxu0 %v2442
        %v2444 = vand.u32 %v413, 4294901760
        %v2445 = vsub.f32 %v413, %v2444
        %2446 = vmatprep.subr.mxu0 %v2445
        %v2447 = vand.u32 %v412, 4294901760
        %v2448 = vsub.f32 %v412, %v2447
        %2449 = vmatpush1.msra.mxu0 %v2448
        %v2450 = vand.u32 %v415, 4294901760
        %v2451 = vsub.f32 %v415, %v2450
        %2452 = vmatprep.subr.mxu0 %v2451
        %v2453 = vand.u32 %v414, 4294901760
        %v2454 = vsub.f32 %v414, %v2453
        %2455 = vmatpush1.msra.mxu0 %v2454
        %v2456 = vand.u32 %v417, 4294901760
        %v2457 = vsub.f32 %v417, %v2456
        %2458 = vmatprep.subr.mxu0 %v2457
        %v2459 = vand.u32 %v416, 4294901760
        %v2460 = vsub.f32 %v416, %v2459
        %2461 = vmatpush1.msra.mxu0 %v2460
        %v2462 = vand.u32 %v419, 4294901760
        %v2463 = vsub.f32 %v419, %v2462
        %2464 = vmatprep.subr.mxu0 %v2463
        %v2465 = vand.u32 %v418, 4294901760
        %v2466 = vsub.f32 %v418, %v2465
        %2467 = vmatpush1.msra.mxu0 %v2466
        %v2468 = vand.u32 %v421, 4294901760
        %v2469 = vsub.f32 %v421, %v2468
        %2470 = vmatprep.subr.mxu0 %v2469
        %v2471 = vand.u32 %v420, 4294901760
        %v2472 = vsub.f32 %v420, %v2471
        %2473 = vmatpush1.msra.mxu0 %v2472
        %v2474 = vand.u32 %v423, 4294901760
        %v2475 = vsub.f32 %v423, %v2474
        %2476 = vmatprep.subr.mxu0 %v2475
        %v2477 = vand.u32 %v422, 4294901760
        %v2478 = vsub.f32 %v422, %v2477
        %2479 = vmatpush1.msra.mxu0 %v2478
        %v2480 = vand.u32 %v425, 4294901760
        %v2481 = vsub.f32 %v425, %v2480
        %2482 = vmatprep.subr.mxu0 %v2481
        %v2483 = vand.u32 %v424, 4294901760
        %v2484 = vsub.f32 %v424, %v2483
        %2485 = vmatpush1.msra.mxu0 %v2484
        %v2486 = vand.u32 %v427, 4294901760
        %v2487 = vsub.f32 %v427, %v2486
        %2488 = vmatprep.subr.mxu0 %v2487
        %v2489 = vand.u32 %v426, 4294901760
        %v2490 = vsub.f32 %v426, %v2489
        %2491 = vmatpush1.msra.mxu0 %v2490
        %v2492 = vand.u32 %v429, 4294901760
        %v2493 = vsub.f32 %v429, %v2492
        %2494 = vmatprep.subr.mxu0 %v2493
        %v2495 = vand.u32 %v428, 4294901760
        %v2496 = vsub.f32 %v428, %v2495
        %2497 = vmatpush1.msra.mxu0 %v2496
        %v2498 = vand.u32 %v431, 4294901760
        %v2499 = vsub.f32 %v431, %v2498
        %2500 = vmatprep.subr.mxu0 %v2499
        %v2501 = vand.u32 %v430, 4294901760
        %v2502 = vsub.f32 %v430, %v2501
        %2503 = vmatpush1.msra.mxu0 %v2502
        %v2504 = vand.u32 %v433, 4294901760
        %v2505 = vsub.f32 %v433, %v2504
        %2506 = vmatprep.subr.mxu0 %v2505
        %v2507 = vand.u32 %v432, 4294901760
        %v2508 = vsub.f32 %v432, %v2507
        %2509 = vmatpush1.msra.mxu0 %v2508
        %v2510 = vand.u32 %v435, 4294901760
        %v2511 = vsub.f32 %v435, %v2510
        %2512 = vmatprep.subr.mxu0 %v2511
        %v2513 = vand.u32 %v434, 4294901760
        %v2514 = vsub.f32 %v434, %v2513
        %2515 = vmatpush1.msra.mxu0 %v2514
        %v2516 = vand.u32 %v437, 4294901760
        %v2517 = vsub.f32 %v437, %v2516
        %2518 = vmatprep.subr.mxu0 %v2517
        %v2519 = vand.u32 %v436, 4294901760
        %v2520 = vsub.f32 %v436, %v2519
        %2521 = vmatpush1.msra.mxu0 %v2520
        %v2522 = vand.u32 %v439, 4294901760
        %v2523 = vsub.f32 %v439, %v2522
        %2524 = vmatprep.subr.mxu0 %v2523
        %v2525 = vand.u32 %v438, 4294901760
        %v2526 = vsub.f32 %v438, %v2525
        %2527 = vmatpush1.msra.mxu0 %v2526
        %v2528 = vand.u32 %v441, 4294901760
        %v2529 = vsub.f32 %v441, %v2528
        %2530 = vmatprep.subr.mxu0 %v2529
        %v2531 = vand.u32 %v440, 4294901760
        %v2532 = vsub.f32 %v440, %v2531
        %2533 = vmatpush1.msra.mxu0 %v2532
        %v2534 = vand.u32 %v443, 4294901760
        %v2535 = vsub.f32 %v443, %v2534
        %2536 = vmatprep.subr.mxu0 %v2535
        %v2537 = vand.u32 %v442, 4294901760
        %v2538 = vsub.f32 %v442, %v2537
        %2539 = vmatpush1.msra.mxu0 %v2538
        %v2540 = vand.u32 %v445, 4294901760
        %v2541 = vsub.f32 %v445, %v2540
        %2542 = vmatprep.subr.mxu0 %v2541
        %v2543 = vand.u32 %v444, 4294901760
        %v2544 = vsub.f32 %v444, %v2543
        %2545 = vmatpush1.msra.mxu0 %v2544
        %v2546 = vand.u32 %v313, 4294901760
        %v2547 = vsub.f32 %v313, %v2546
        %2548 = vmatprep.mubr.f32.mxu0 %v2547
        %v2549 = vand.u32 %v312, 4294901760
        %v2550 = vsub.f32 %v312, %v2549
        %2551 = vmatmul.mubr.f32.gmra.mrb[0].mxu0 %v2550
        %v2552 = vpop.f32.mrb[0].mxu0
        %v2553 = vadd.f32 %v2342, %v2552
        %v2554 = vpop.f32.mrb[0].mxu0
        %v2555 = vadd.f32 %v2344, %v2554
        %v2556 = vand.u32 %v317, 4294901760
        %v2557 = vsub.f32 %v317, %v2556
        %2558 = vmatprep.mubr.f32.mxu0 %v2557
        %v2559 = vand.u32 %v316, 4294901760
        %v2560 = vsub.f32 %v316, %v2559
        %2561 = vmatmul.mubr.f32.gmra.mrb[0].mxu0 %v2560
        %v2562 = vpop.f32.mrb[0].mxu0
        %v2563 = vadd.f32 %v2350, %v2562
        %v2564 = vpop.f32.mrb[0].mxu0
        %v2565 = vadd.f32 %v2352, %v2564
        %2566 = vdwg.mxu0
        %v2567 = vand.u32 %v383, 4294901760
        %2568 = vmatprep.subr.mxu0 %v2567
        %v2569 = vand.u32 %v382, 4294901760
        %2570 = vmatpush1.msra.mxu0 %v2569
        %v2571 = vand.u32 %v385, 4294901760
        %2572 = vmatprep.subr.mxu0 %v2571
        %v2573 = vand.u32 %v384, 4294901760
        %2574 = vmatpush1.msra.mxu0 %v2573
        %v2575 = vand.u32 %v387, 4294901760
        %2576 = vmatprep.subr.mxu0 %v2575
        %v2577 = vand.u32 %v386, 4294901760
        %2578 = vmatpush1.msra.mxu0 %v2577
        %v2579 = vand.u32 %v389, 4294901760
        %2580 = vmatprep.subr.mxu0 %v2579
        %v2581 = vand.u32 %v388, 4294901760
        %2582 = vmatpush1.msra.mxu0 %v2581
        %v2583 = vand.u32 %v391, 4294901760
        %2584 = vmatprep.subr.mxu0 %v2583
        %v2585 = vand.u32 %v390, 4294901760
        %2586 = vmatpush1.msra.mxu0 %v2585
        %v2587 = vand.u32 %v393, 4294901760
        %2588 = vmatprep.subr.mxu0 %v2587
        %v2589 = vand.u32 %v392, 4294901760
        %2590 = vmatpush1.msra.mxu0 %v2589
        %v2591 = vand.u32 %v395, 4294901760
        %2592 = vmatprep.subr.mxu0 %v2591
        %v2593 = vand.u32 %v394, 4294901760
        %2594 = vmatpush1.msra.mxu0 %v2593
        %v2595 = vand.u32 %v397, 4294901760
        %2596 = vmatprep.subr.mxu0 %v2595
        %v2597 = vand.u32 %v396, 4294901760
        %2598 = vmatpush1.msra.mxu0 %v2597
        %v2599 = vand.u32 %v399, 4294901760
        %2600 = vmatprep.subr.mxu0 %v2599
        %v2601 = vand.u32 %v398, 4294901760
        %2602 = vmatpush1.msra.mxu0 %v2601
        %v2603 = vand.u32 %v401, 4294901760
        %2604 = vmatprep.subr.mxu0 %v2603
        %v2605 = vand.u32 %v400, 4294901760
        %2606 = vmatpush1.msra.mxu0 %v2605
        %v2607 = vand.u32 %v403, 4294901760
        %2608 = vmatprep.subr.mxu0 %v2607
        %v2609 = vand.u32 %v402, 4294901760
        %2610 = vmatpush1.msra.mxu0 %v2609
        %v2611 = vand.u32 %v405, 4294901760
        %2612 = vmatprep.subr.mxu0 %v2611
        %v2613 = vand.u32 %v404, 4294901760
        %2614 = vmatpush1.msra.mxu0 %v2613
        %v2615 = vand.u32 %v407, 4294901760
        %2616 = vmatprep.subr.mxu0 %v2615
        %v2617 = vand.u32 %v406, 4294901760
        %2618 = vmatpush1.msra.mxu0 %v2617
        %v2619 = vand.u32 %v409, 4294901760
        %2620 = vmatprep.subr.mxu0 %v2619
        %v2621 = vand.u32 %v408, 4294901760
        %2622 = vmatpush1.msra.mxu0 %v2621
        %v2623 = vand.u32 %v411, 4294901760
        %2624 = vmatprep.subr.mxu0 %v2623
        %v2625 = vand.u32 %v410, 4294901760
        %2626 = vmatpush1.msra.mxu0 %v2625
        %v2627 = vand.u32 %v413, 4294901760
        %2628 = vmatprep.subr.mxu0 %v2627
        %v2629 = vand.u32 %v412, 4294901760
        %2630 = vmatpush1.msra.mxu0 %v2629
        %v2631 = vand.u32 %v415, 4294901760
        %2632 = vmatprep.subr.mxu0 %v2631
        %v2633 = vand.u32 %v414, 4294901760
        %2634 = vmatpush1.msra.mxu0 %v2633
        %v2635 = vand.u32 %v417, 4294901760
        %2636 = vmatprep.subr.mxu0 %v2635
        %v2637 = vand.u32 %v416, 4294901760
        %2638 = vmatpush1.msra.mxu0 %v2637
        %v2639 = vand.u32 %v419, 4294901760
        %2640 = vmatprep.subr.mxu0 %v2639
        %v2641 = vand.u32 %v418, 4294901760
        %2642 = vmatpush1.msra.mxu0 %v2641
        %v2643 = vand.u32 %v421, 4294901760
        %2644 = vmatprep.subr.mxu0 %v2643
        %v2645 = vand.u32 %v420, 4294901760
        %2646 = vmatpush1.msra.mxu0 %v2645
        %v2647 = vand.u32 %v423, 4294901760
        %2648 = vmatprep.subr.mxu0 %v2647
        %v2649 = vand.u32 %v422, 4294901760
        %2650 = vmatpush1.msra.mxu0 %v2649
        %v2651 = vand.u32 %v425, 4294901760
        %2652 = vmatprep.subr.mxu0 %v2651
        %v2653 = vand.u32 %v424, 4294901760
        %2654 = vmatpush1.msra.mxu0 %v2653
        %v2655 = vand.u32 %v427, 4294901760
        %2656 = vmatprep.subr.mxu0 %v2655
        %v2657 = vand.u32 %v426, 4294901760
        %2658 = vmatpush1.msra.mxu0 %v2657
        %v2659 = vand.u32 %v429, 4294901760
        %2660 = vmatprep.subr.mxu0 %v2659
        %v2661 = vand.u32 %v428, 4294901760
        %2662 = vmatpush1.msra.mxu0 %v2661
        %v2663 = vand.u32 %v431, 4294901760
        %2664 = vmatprep.subr.mxu0 %v2663
        %v2665 = vand.u32 %v430, 4294901760
        %2666 = vmatpush1.msra.mxu0 %v2665
        %v2667 = vand.u32 %v433, 4294901760
        %2668 = vmatprep.subr.mxu0 %v2667
        %v2669 = vand.u32 %v432, 4294901760
        %2670 = vmatpush1.msra.mxu0 %v2669
        %v2671 = vand.u32 %v435, 4294901760
        %2672 = vmatprep.subr.mxu0 %v2671
        %v2673 = vand.u32 %v434, 4294901760
        %2674 = vmatpush1.msra.mxu0 %v2673
        %v2675 = vand.u32 %v437, 4294901760
        %2676 = vmatprep.subr.mxu0 %v2675
        %v2677 = vand.u32 %v436, 4294901760
        %2678 = vmatpush1.msra.mxu0 %v2677
        %v2679 = vand.u32 %v439, 4294901760
        %2680 = vmatprep.subr.mxu0 %v2679
        %v2681 = vand.u32 %v438, 4294901760
        %2682 = vmatpush1.msra.mxu0 %v2681
        %v2683 = vand.u32 %v441, 4294901760
        %2684 = vmatprep.subr.mxu0 %v2683
        %v2685 = vand.u32 %v440, 4294901760
        %2686 = vmatpush1.msra.mxu0 %v2685
        %v2687 = vand.u32 %v443, 4294901760
        %2688 = vmatprep.subr.mxu0 %v2687
        %v2689 = vand.u32 %v442, 4294901760
        %2690 = vmatpush1.msra.mxu0 %v2689
        %v2691 = vand.u32 %v445, 4294901760
        %2692 = vmatprep.subr.mxu0 %v2691
        %v2693 = vand.u32 %v444, 4294901760
        %2694 = vmatpush1.msra.mxu0 %v2693
        %v2695 = vand.u32 %v313, 4294901760
        %v2696 = vsub.f32 %v313, %v2695
        %v2697 = vand.u32 %v2696, 4294901760
        %2698 = vmatprep.mubr.f32.mxu0 %v2697
        %v2699 = vand.u32 %v312, 4294901760
        %v2700 = vsub.f32 %v312, %v2699
        %v2701 = vand.u32 %v2700, 4294901760
        %2702 = vmatmul.mubr.f32.gmra.mrb[0].mxu0 %v2701
        %v2703 = vpop.f32.mrb[0].mxu0
        %v2704 = vadd.f32 %v2553, %v2703
        %v2705 = vpop.f32.mrb[0].mxu0
        %v2706 = vadd.f32 %v2555, %v2705
        %v2707 = vand.u32 %v317, 4294901760
        %v2708 = vsub.f32 %v317, %v2707
        %v2709 = vand.u32 %v2708, 4294901760
        %2710 = vmatprep.mubr.f32.mxu0 %v2709
        %v2711 = vand.u32 %v316, 4294901760
        %v2712 = vsub.f32 %v316, %v2711
        %v2713 = vand.u32 %v2712, 4294901760
        %2714 = vmatmul.mubr.f32.gmra.mrb[0].mxu0 %v2713
        %v2715 = vpop.f32.mrb[0].mxu0
        %v2716 = vadd.f32 %v2563, %v2715
        %v2717 = vpop.f32.mrb[0].mxu0
        %v2718 = vadd.f32 %v2565, %v2717
        %2719 = vdwg.mxu0
        %v2720 = vand.u32 %v383, 4294901760
        %v2721 = vsub.f32 %v383, %v2720
        %v2722 = vand.u32 %v2721, 4294901760
        %2723 = vmatprep.subr.mxu0 %v2722
        %v2724 = vand.u32 %v382, 4294901760
        %v2725 = vsub.f32 %v382, %v2724
        %v2726 = vand.u32 %v2725, 4294901760
        %2727 = vmatpush1.msra.mxu0 %v2726
        %v2728 = vand.u32 %v385, 4294901760
        %v2729 = vsub.f32 %v385, %v2728
        %v2730 = vand.u32 %v2729, 4294901760
        %2731 = vmatprep.subr.mxu0 %v2730
        %v2732 = vand.u32 %v384, 4294901760
        %v2733 = vsub.f32 %v384, %v2732
        %v2734 = vand.u32 %v2733, 4294901760
        %2735 = vmatpush1.msra.mxu0 %v2734
        %v2736 = vand.u32 %v387, 4294901760
        %v2737 = vsub.f32 %v387, %v2736
        %v2738 = vand.u32 %v2737, 4294901760
        %2739 = vmatprep.subr.mxu0 %v2738
        %v2740 = vand.u32 %v386, 4294901760
        %v2741 = vsub.f32 %v386, %v2740
        %v2742 = vand.u32 %v2741, 4294901760
        %2743 = vmatpush1.msra.mxu0 %v2742
        %v2744 = vand.u32 %v389, 4294901760
        %v2745 = vsub.f32 %v389, %v2744
        %v2746 = vand.u32 %v2745, 4294901760
        %2747 = vmatprep.subr.mxu0 %v2746
        %v2748 = vand.u32 %v388, 4294901760
        %v2749 = vsub.f32 %v388, %v2748
        %v2750 = vand.u32 %v2749, 4294901760
        %2751 = vmatpush1.msra.mxu0 %v2750
        %v2752 = vand.u32 %v391, 4294901760
        %v2753 = vsub.f32 %v391, %v2752
        %v2754 = vand.u32 %v2753, 4294901760
        %2755 = vmatprep.subr.mxu0 %v2754
        %v2756 = vand.u32 %v390, 4294901760
        %v2757 = vsub.f32 %v390, %v2756
        %v2758 = vand.u32 %v2757, 4294901760
        %2759 = vmatpush1.msra.mxu0 %v2758
        %v2760 = vand.u32 %v393, 4294901760
        %v2761 = vsub.f32 %v393, %v2760
        %v2762 = vand.u32 %v2761, 4294901760
        %2763 = vmatprep.subr.mxu0 %v2762
        %v2764 = vand.u32 %v392, 4294901760
        %v2765 = vsub.f32 %v392, %v2764
        %v2766 = vand.u32 %v2765, 4294901760
        %2767 = vmatpush1.msra.mxu0 %v2766
        %v2768 = vand.u32 %v395, 4294901760
        %v2769 = vsub.f32 %v395, %v2768
        %v2770 = vand.u32 %v2769, 4294901760
        %2771 = vmatprep.subr.mxu0 %v2770
        %v2772 = vand.u32 %v394, 4294901760
        %v2773 = vsub.f32 %v394, %v2772
        %v2774 = vand.u32 %v2773, 4294901760
        %2775 = vmatpush1.msra.mxu0 %v2774
        %v2776 = vand.u32 %v397, 4294901760
        %v2777 = vsub.f32 %v397, %v2776
        %v2778 = vand.u32 %v2777, 4294901760
        %2779 = vmatprep.subr.mxu0 %v2778
        %v2780 = vand.u32 %v396, 4294901760
        %v2781 = vsub.f32 %v396, %v2780
        %v2782 = vand.u32 %v2781, 4294901760
        %2783 = vmatpush1.msra.mxu0 %v2782
        %v2784 = vand.u32 %v399, 4294901760
        %v2785 = vsub.f32 %v399, %v2784
        %v2786 = vand.u32 %v2785, 4294901760
        %2787 = vmatprep.subr.mxu0 %v2786
        %v2788 = vand.u32 %v398, 4294901760
        %v2789 = vsub.f32 %v398, %v2788
        %v2790 = vand.u32 %v2789, 4294901760
        %2791 = vmatpush1.msra.mxu0 %v2790
        %v2792 = vand.u32 %v401, 4294901760
        %v2793 = vsub.f32 %v401, %v2792
        %v2794 = vand.u32 %v2793, 4294901760
        %2795 = vmatprep.subr.mxu0 %v2794
        %v2796 = vand.u32 %v400, 4294901760
        %v2797 = vsub.f32 %v400, %v2796
        %v2798 = vand.u32 %v2797, 4294901760
        %2799 = vmatpush1.msra.mxu0 %v2798
        %v2800 = vand.u32 %v403, 4294901760
        %v2801 = vsub.f32 %v403, %v2800
        %v2802 = vand.u32 %v2801, 4294901760
        %2803 = vmatprep.subr.mxu0 %v2802
        %v2804 = vand.u32 %v402, 4294901760
        %v2805 = vsub.f32 %v402, %v2804
        %v2806 = vand.u32 %v2805, 4294901760
        %2807 = vmatpush1.msra.mxu0 %v2806
        %v2808 = vand.u32 %v405, 4294901760
        %v2809 = vsub.f32 %v405, %v2808
        %v2810 = vand.u32 %v2809, 4294901760
        %2811 = vmatprep.subr.mxu0 %v2810
        %v2812 = vand.u32 %v404, 4294901760
        %v2813 = vsub.f32 %v404, %v2812
        %v2814 = vand.u32 %v2813, 4294901760
        %2815 = vmatpush1.msra.mxu0 %v2814
        %v2816 = vand.u32 %v407, 4294901760
        %v2817 = vsub.f32 %v407, %v2816
        %v2818 = vand.u32 %v2817, 4294901760
        %2819 = vmatprep.subr.mxu0 %v2818
        %v2820 = vand.u32 %v406, 4294901760
        %v2821 = vsub.f32 %v406, %v2820
        %v2822 = vand.u32 %v2821, 4294901760
        %2823 = vmatpush1.msra.mxu0 %v2822
        %v2824 = vand.u32 %v409, 4294901760
        %v2825 = vsub.f32 %v409, %v2824
        %v2826 = vand.u32 %v2825, 4294901760
        %2827 = vmatprep.subr.mxu0 %v2826
        %v2828 = vand.u32 %v408, 4294901760
        %v2829 = vsub.f32 %v408, %v2828
        %v2830 = vand.u32 %v2829, 4294901760
        %2831 = vmatpush1.msra.mxu0 %v2830
        %v2832 = vand.u32 %v411, 4294901760
        %v2833 = vsub.f32 %v411, %v2832
        %v2834 = vand.u32 %v2833, 4294901760
        %2835 = vmatprep.subr.mxu0 %v2834
        %v2836 = vand.u32 %v410, 4294901760
        %v2837 = vsub.f32 %v410, %v2836
        %v2838 = vand.u32 %v2837, 4294901760
        %2839 = vmatpush1.msra.mxu0 %v2838
        %v2840 = vand.u32 %v413, 4294901760
        %v2841 = vsub.f32 %v413, %v2840
        %v2842 = vand.u32 %v2841, 4294901760
        %2843 = vmatprep.subr.mxu0 %v2842
        %v2844 = vand.u32 %v412, 4294901760
        %v2845 = vsub.f32 %v412, %v2844
        %v2846 = vand.u32 %v2845, 4294901760
        %2847 = vmatpush1.msra.mxu0 %v2846
        %v2848 = vand.u32 %v415, 4294901760
        %v2849 = vsub.f32 %v415, %v2848
        %v2850 = vand.u32 %v2849, 4294901760
        %2851 = vmatprep.subr.mxu0 %v2850
        %v2852 = vand.u32 %v414, 4294901760
        %v2853 = vsub.f32 %v414, %v2852
        %v2854 = vand.u32 %v2853, 4294901760
        %2855 = vmatpush1.msra.mxu0 %v2854
        %v2856 = vand.u32 %v417, 4294901760
        %v2857 = vsub.f32 %v417, %v2856
        %v2858 = vand.u32 %v2857, 4294901760
        %2859 = vmatprep.subr.mxu0 %v2858
        %v2860 = vand.u32 %v416, 4294901760
        %v2861 = vsub.f32 %v416, %v2860
        %v2862 = vand.u32 %v2861, 4294901760
        %2863 = vmatpush1.msra.mxu0 %v2862
        %v2864 = vand.u32 %v419, 4294901760
        %v2865 = vsub.f32 %v419, %v2864
        %v2866 = vand.u32 %v2865, 4294901760
        %2867 = vmatprep.subr.mxu0 %v2866
        %v2868 = vand.u32 %v418, 4294901760
        %v2869 = vsub.f32 %v418, %v2868
        %v2870 = vand.u32 %v2869, 4294901760
        %2871 = vmatpush1.msra.mxu0 %v2870
        %v2872 = vand.u32 %v421, 4294901760
        %v2873 = vsub.f32 %v421, %v2872
        %v2874 = vand.u32 %v2873, 4294901760
        %2875 = vmatprep.subr.mxu0 %v2874
        %v2876 = vand.u32 %v420, 4294901760
        %v2877 = vsub.f32 %v420, %v2876
        %v2878 = vand.u32 %v2877, 4294901760
        %2879 = vmatpush1.msra.mxu0 %v2878
        %v2880 = vand.u32 %v423, 4294901760
        %v2881 = vsub.f32 %v423, %v2880
        %v2882 = vand.u32 %v2881, 4294901760
        %2883 = vmatprep.subr.mxu0 %v2882
        %v2884 = vand.u32 %v422, 4294901760
        %v2885 = vsub.f32 %v422, %v2884
        %v2886 = vand.u32 %v2885, 4294901760
        %2887 = vmatpush1.msra.mxu0 %v2886
        %v2888 = vand.u32 %v425, 4294901760
        %v2889 = vsub.f32 %v425, %v2888
        %v2890 = vand.u32 %v2889, 4294901760
        %2891 = vmatprep.subr.mxu0 %v2890
        %v2892 = vand.u32 %v424, 4294901760
        %v2893 = vsub.f32 %v424, %v2892
        %v2894 = vand.u32 %v2893, 4294901760
        %2895 = vmatpush1.msra.mxu0 %v2894
        %v2896 = vand.u32 %v427, 4294901760
        %v2897 = vsub.f32 %v427, %v2896
        %v2898 = vand.u32 %v2897, 4294901760
        %2899 = vmatprep.subr.mxu0 %v2898
        %v2900 = vand.u32 %v426, 4294901760
        %v2901 = vsub.f32 %v426, %v2900
        %v2902 = vand.u32 %v2901, 4294901760
        %2903 = vmatpush1.msra.mxu0 %v2902
        %v2904 = vand.u32 %v429, 4294901760
        %v2905 = vsub.f32 %v429, %v2904
        %v2906 = vand.u32 %v2905, 4294901760
        %2907 = vmatprep.subr.mxu0 %v2906
        %v2908 = vand.u32 %v428, 4294901760
        %v2909 = vsub.f32 %v428, %v2908
        %v2910 = vand.u32 %v2909, 4294901760
        %2911 = vmatpush1.msra.mxu0 %v2910
        %v2912 = vand.u32 %v431, 4294901760
        %v2913 = vsub.f32 %v431, %v2912
        %v2914 = vand.u32 %v2913, 4294901760
        %2915 = vmatprep.subr.mxu0 %v2914
        %v2916 = vand.u32 %v430, 4294901760
        %v2917 = vsub.f32 %v430, %v2916
        %v2918 = vand.u32 %v2917, 4294901760
        %2919 = vmatpush1.msra.mxu0 %v2918
        %v2920 = vand.u32 %v433, 4294901760
        %v2921 = vsub.f32 %v433, %v2920
        %v2922 = vand.u32 %v2921, 4294901760
        %2923 = vmatprep.subr.mxu0 %v2922
        %v2924 = vand.u32 %v432, 4294901760
        %v2925 = vsub.f32 %v432, %v2924
        %v2926 = vand.u32 %v2925, 4294901760
        %2927 = vmatpush1.msra.mxu0 %v2926
        %v2928 = vand.u32 %v435, 4294901760
        %v2929 = vsub.f32 %v435, %v2928
        %v2930 = vand.u32 %v2929, 4294901760
        %2931 = vmatprep.subr.mxu0 %v2930
        %v2932 = vand.u32 %v434, 4294901760
        %v2933 = vsub.f32 %v434, %v2932
        %v2934 = vand.u32 %v2933, 4294901760
        %2935 = vmatpush1.msra.mxu0 %v2934
        %v2936 = vand.u32 %v437, 4294901760
        %v2937 = vsub.f32 %v437, %v2936
        %v2938 = vand.u32 %v2937, 4294901760
        %2939 = vmatprep.subr.mxu0 %v2938
        %v2940 = vand.u32 %v436, 4294901760
        %v2941 = vsub.f32 %v436, %v2940
        %v2942 = vand.u32 %v2941, 4294901760
        %2943 = vmatpush1.msra.mxu0 %v2942
        %v2944 = vand.u32 %v439, 4294901760
        %v2945 = vsub.f32 %v439, %v2944
        %v2946 = vand.u32 %v2945, 4294901760
        %2947 = vmatprep.subr.mxu0 %v2946
        %v2948 = vand.u32 %v438, 4294901760
        %v2949 = vsub.f32 %v438, %v2948
        %v2950 = vand.u32 %v2949, 4294901760
        %2951 = vmatpush1.msra.mxu0 %v2950
        %v2952 = vand.u32 %v441, 4294901760
        %v2953 = vsub.f32 %v441, %v2952
        %v2954 = vand.u32 %v2953, 4294901760
        %2955 = vmatprep.subr.mxu0 %v2954
        %v2956 = vand.u32 %v440, 4294901760
        %v2957 = vsub.f32 %v440, %v2956
        %v2958 = vand.u32 %v2957, 4294901760
        %2959 = vmatpush1.msra.mxu0 %v2958
        %v2960 = vand.u32 %v443, 4294901760
        %v2961 = vsub.f32 %v443, %v2960
        %v2962 = vand.u32 %v2961, 4294901760
        %2963 = vmatprep.subr.mxu0 %v2962
        %v2964 = vand.u32 %v442, 4294901760
        %v2965 = vsub.f32 %v442, %v2964
        %v2966 = vand.u32 %v2965, 4294901760
        %2967 = vmatpush1.msra.mxu0 %v2966
        %v2968 = vand.u32 %v445, 4294901760
        %v2969 = vsub.f32 %v445, %v2968
        %v2970 = vand.u32 %v2969, 4294901760
        %2971 = vmatprep.subr.mxu0 %v2970
        %v2972 = vand.u32 %v444, 4294901760
        %v2973 = vsub.f32 %v444, %v2972
        %v2974 = vand.u32 %v2973, 4294901760
        %2975 = vmatpush1.msra.mxu0 %v2974
        %v2976 = vand.u32 %v313, 4294901760
        %2977 = vmatprep.mubr.f32.mxu0 %v2976
        %v2978 = vand.u32 %v312, 4294901760
        %2979 = vmatmul.mubr.f32.gmra.mrb[0].mxu0 %v2978
        %v2980 = vpop.f32.mrb[0].mxu0
        %v2981 = vadd.f32 %v2704, %v2980
        %v2982 = vpop.f32.mrb[0].mxu0
        %v2983 = vadd.f32 %v2706, %v2982
        %v2984 = vand.u32 %v317, 4294901760
        %2985 = vmatprep.mubr.f32.mxu0 %v2984
        %v2986 = vand.u32 %v316, 4294901760
        %2987 = vmatmul.mubr.f32.gmra.mrb[0].mxu0 %v2986
        %v2988 = vpop.f32.mrb[0].mxu0
        %v2989 = vadd.f32 %v2716, %v2988
        %v2990 = vpop.f32.mrb[0].mxu0
        %v2991 = vadd.f32 %v2718, %v2990
        %2992 = vdwg.mxu0
        %v2993 = vand.u32 %v383, 4294901760
        %2994 = vmatprep.subr.mxu0 %v2993
        %v2995 = vand.u32 %v382, 4294901760
        %2996 = vmatpush1.msra.mxu0 %v2995
        %v2997 = vand.u32 %v385, 4294901760
        %2998 = vmatprep.subr.mxu0 %v2997
        %v2999 = vand.u32 %v384, 4294901760
        %3000 = vmatpush1.msra.mxu0 %v2999
        %v3001 = vand.u32 %v387, 4294901760
        %3002 = vmatprep.subr.mxu0 %v3001
        %v3003 = vand.u32 %v386, 4294901760
        %3004 = vmatpush1.msra.mxu0 %v3003
        %v3005 = vand.u32 %v389, 4294901760
        %3006 = vmatprep.subr.mxu0 %v3005
        %v3007 = vand.u32 %v388, 4294901760
        %3008 = vmatpush1.msra.mxu0 %v3007
        %v3009 = vand.u32 %v391, 4294901760
        %3010 = vmatprep.subr.mxu0 %v3009
        %v3011 = vand.u32 %v390, 4294901760
        %3012 = vmatpush1.msra.mxu0 %v3011
        %v3013 = vand.u32 %v393, 4294901760
        %3014 = vmatprep.subr.mxu0 %v3013
        %v3015 = vand.u32 %v392, 4294901760
        %3016 = vmatpush1.msra.mxu0 %v3015
        %v3017 = vand.u32 %v395, 4294901760
        %3018 = vmatprep.subr.mxu0 %v3017
        %v3019 = vand.u32 %v394, 4294901760
        %3020 = vmatpush1.msra.mxu0 %v3019
        %v3021 = vand.u32 %v397, 4294901760
        %3022 = vmatprep.subr.mxu0 %v3021
        %v3023 = vand.u32 %v396, 4294901760
        %3024 = vmatpush1.msra.mxu0 %v3023
        %v3025 = vand.u32 %v399, 4294901760
        %3026 = vmatprep.subr.mxu0 %v3025
        %v3027 = vand.u32 %v398, 4294901760
        %3028 = vmatpush1.msra.mxu0 %v3027
        %v3029 = vand.u32 %v401, 4294901760
        %3030 = vmatprep.subr.mxu0 %v3029
        %v3031 = vand.u32 %v400, 4294901760
        %3032 = vmatpush1.msra.mxu0 %v3031
        %v3033 = vand.u32 %v403, 4294901760
        %3034 = vmatprep.subr.mxu0 %v3033
        %v3035 = vand.u32 %v402, 4294901760
        %3036 = vmatpush1.msra.mxu0 %v3035
        %v3037 = vand.u32 %v405, 4294901760
        %3038 = vmatprep.subr.mxu0 %v3037
        %v3039 = vand.u32 %v404, 4294901760
        %3040 = vmatpush1.msra.mxu0 %v3039
        %v3041 = vand.u32 %v407, 4294901760
        %3042 = vmatprep.subr.mxu0 %v3041
        %v3043 = vand.u32 %v406, 4294901760
        %3044 = vmatpush1.msra.mxu0 %v3043
        %v3045 = vand.u32 %v409, 4294901760
        %3046 = vmatprep.subr.mxu0 %v3045
        %v3047 = vand.u32 %v408, 4294901760
        %3048 = vmatpush1.msra.mxu0 %v3047
        %v3049 = vand.u32 %v411, 4294901760
        %3050 = vmatprep.subr.mxu0 %v3049
        %v3051 = vand.u32 %v410, 4294901760
        %3052 = vmatpush1.msra.mxu0 %v3051
        %v3053 = vand.u32 %v413, 4294901760
        %3054 = vmatprep.subr.mxu0 %v3053
        %v3055 = vand.u32 %v412, 4294901760
        %3056 = vmatpush1.msra.mxu0 %v3055
        %v3057 = vand.u32 %v415, 4294901760
        %3058 = vmatprep.subr.mxu0 %v3057
        %v3059 = vand.u32 %v414, 4294901760
        %3060 = vmatpush1.msra.mxu0 %v3059
        %v3061 = vand.u32 %v417, 4294901760
        %3062 = vmatprep.subr.mxu0 %v3061
        %v3063 = vand.u32 %v416, 4294901760
        %3064 = vmatpush1.msra.mxu0 %v3063
        %v3065 = vand.u32 %v419, 4294901760
        %3066 = vmatprep.subr.mxu0 %v3065
        %v3067 = vand.u32 %v418, 4294901760
        %3068 = vmatpush1.msra.mxu0 %v3067
        %v3069 = vand.u32 %v421, 4294901760
        %3070 = vmatprep.subr.mxu0 %v3069
        %v3071 = vand.u32 %v420, 4294901760
        %3072 = vmatpush1.msra.mxu0 %v3071
        %v3073 = vand.u32 %v423, 4294901760
        %3074 = vmatprep.subr.mxu0 %v3073
        %v3075 = vand.u32 %v422, 4294901760
        %3076 = vmatpush1.msra.mxu0 %v3075
        %v3077 = vand.u32 %v425, 4294901760
        %3078 = vmatprep.subr.mxu0 %v3077
        %v3079 = vand.u32 %v424, 4294901760
        %3080 = vmatpush1.msra.mxu0 %v3079
        %v3081 = vand.u32 %v427, 4294901760
        %3082 = vmatprep.subr.mxu0 %v3081
        %v3083 = vand.u32 %v426, 4294901760
        %3084 = vmatpush1.msra.mxu0 %v3083
        %v3085 = vand.u32 %v429, 4294901760
        %3086 = vmatprep.subr.mxu0 %v3085
        %v3087 = vand.u32 %v428, 4294901760
        %3088 = vmatpush1.msra.mxu0 %v3087
        %v3089 = vand.u32 %v431, 4294901760
        %3090 = vmatprep.subr.mxu0 %v3089
        %v3091 = vand.u32 %v430, 4294901760
        %3092 = vmatpush1.msra.mxu0 %v3091
        %v3093 = vand.u32 %v433, 4294901760
        %3094 = vmatprep.subr.mxu0 %v3093
        %v3095 = vand.u32 %v432, 4294901760
        %3096 = vmatpush1.msra.mxu0 %v3095
        %v3097 = vand.u32 %v435, 4294901760
        %3098 = vmatprep.subr.mxu0 %v3097
        %v3099 = vand.u32 %v434, 4294901760
        %3100 = vmatpush1.msra.mxu0 %v3099
        %v3101 = vand.u32 %v437, 4294901760
        %3102 = vmatprep.subr.mxu0 %v3101
        %v3103 = vand.u32 %v436, 4294901760
        %3104 = vmatpush1.msra.mxu0 %v3103
        %v3105 = vand.u32 %v439, 4294901760
        %3106 = vmatprep.subr.mxu0 %v3105
        %v3107 = vand.u32 %v438, 4294901760
        %3108 = vmatpush1.msra.mxu0 %v3107
        %v3109 = vand.u32 %v441, 4294901760
        %3110 = vmatprep.subr.mxu0 %v3109
        %v3111 = vand.u32 %v440, 4294901760
        %3112 = vmatpush1.msra.mxu0 %v3111
        %v3113 = vand.u32 %v443, 4294901760
        %3114 = vmatprep.subr.mxu0 %v3113
        %v3115 = vand.u32 %v442, 4294901760
        %3116 = vmatpush1.msra.mxu0 %v3115
        %v3117 = vand.u32 %v445, 4294901760
        %3118 = vmatprep.subr.mxu0 %v3117
        %v3119 = vand.u32 %v444, 4294901760
        %3120 = vmatpush1.msra.mxu0 %v3119
        %v3121 = vand.u32 %v313, 4294901760
        %3122 = vmatprep.mubr.f32.mxu0 %v3121
        %v3123 = vand.u32 %v312, 4294901760
        %3124 = vmatmul.mubr.f32.gmra.mrb[0].mxu0 %v3123
        %v3125 = vpop.f32.mrb[0].mxu0
        %v3126 = vadd.f32 %v2981, %v3125
        %v3127 = vpop.f32.mrb[0].mxu0
        %v3128 = vadd.f32 %v2983, %v3127
        %v3129 = vand.u32 %v317, 4294901760
        %3130 = vmatprep.mubr.f32.mxu0 %v3129
        %v3131 = vand.u32 %v316, 4294901760
        %3132 = vmatmul.mubr.f32.gmra.mrb[0].mxu0 %v3131
        %v3133 = vpop.f32.mrb[0].mxu0
        %v3134 = vadd.f32 %v2989, %v3133
        %v3135 = vpop.f32.mrb[0].mxu0
        %v3136 = vadd.f32 %v2991, %v3135
        %3137 = vdwg.mxu0
        %v3138 = vadd.f32 %v306, %v3126
        %v3139 = vadd.f32 %v307, %v3128
        %v3140 = vadd.f32 %v308, %v3134
        %v3141 = vadd.f32 %v309, %v3136
        %3142 = vst [vmem:[%s292] sm:$0xff] %v3138
        %3143 = vst [vmem:[%s292 + $0x8] sm:$0xff] %v3139
        %3144 = vst [vmem:[%s292 + $0x10] sm:$0xff] %v3140
        %3145 = vst [vmem:[%s292 + $0x18] sm:$0xff] %v3141
        // Predicated region
        $region53: #{tpu_custom_call.1} parent=35 // pred_check
          %p3146 = pneg %p298
        $region54: #{tpu_custom_call.1} parent=35 // pred_check_branch
          %3148 = sbr.rel (%p3146) target = $region56
        $region55: #{tpu_custom_call.1} parent=35 // pred_region
          %v3149 = vld [vmem:[%s292] sm:$0xff]
          %v3150 = vld [vmem:[%s292 + $0x8] sm:$0xff]
          %v3151 = vld [vmem:[%s292 + $0x10] sm:$0xff]
          %v3152 = vld [vmem:[%s292 + $0x18] sm:$0xff]
          %v3153 = vld [vmem:[%s254] sm:$0xff]
          %v3154 = vld [vmem:[%s254 + $0x8] sm:$0xff]
          %v3155 = vld [vmem:[%s254 + $0x10] sm:$0xff]
          %v3156 = vld [vmem:[%s254 + $0x18] sm:$0xff]
          %v3157 = vld [vmem:[%s3] sm:$0xff]
          %v3158 = vld [vmem:[%s3 + $0x8] sm:$0xff]
          %3160 = vset.pattern.permute.xlu0 0
          %3161 = vperm.xlu0 %3160, %v3157
          %v3162 = vpop.permute.xlu0 %3161
          %3165 = vset.pattern.permute.xlu0 0
          %3166 = vperm.xlu0 %3165, %v3158
          %v3167 = vpop.permute.xlu0 %3166
          %v3169 = vadd.f32 %v3153, %v3162
          %v3170 = vadd.f32 %v3154, %v3162
          %v3171 = vadd.f32 %v3155, %v3167
          %v3172 = vadd.f32 %v3156, %v3167
          %v3173 = vadd.f32 %v3149, %v3169
          %v3174 = vadd.f32 %v3150, %v3170
          %v3175 = vadd.f32 %v3151, %v3171
          %v3176 = vadd.f32 %v3152, %v3172
          %3177 = vst [vmem:[%s292] sm:$0xff] %v3173
          %3178 = vst [vmem:[%s292 + $0x8] sm:$0xff] %v3174
          %3179 = vst [vmem:[%s292 + $0x10] sm:$0xff] %v3175
          %3180 = vst [vmem:[%s292 + $0x18] sm:$0xff] %v3176
        $region56: #{tpu_custom_call.1} parent=35 // pred_fallthru
          _
        %s3181 = sand.u32 %s143, 1
        %s3182 = scalar_lea.sflag [#allocation4], %s3181
        %s3183 = sand.u32 %s143, 1
        %s3184 = smul.addr %s3183, 32
        %s3185 = scalar_lea.vmem [#allocation8], %s3184
        // Predicated region
        $region57: #{tpu_custom_call.1} parent=35 // pred_check
          %p3186 = pneg %p153
        $region58: #{tpu_custom_call.1} parent=35 // pred_check_branch
          %3188 = sbr.rel (%p3186) target = $region60
        $region59: #{tpu_custom_call.1} parent=35 // pred_region
          %s3189 = smul.u32 2, %s26
          %s3191 = ssub.s32 512, 512
          %3192 = vsyncadd %s3182, %s3191
          %s3193 = smul.addr %s3189, 128
          %s3194 = scalar_lea.hbm %s4, %s3193
          %s3195 = sshll.u32 %s3185, 4
          %s3196 = int_to_ptr.vmem [resolvable:$true] %s3195
          %3201 = dma.vmem_to_hbm [thread:$0]  %s3196, 512, %s3194, %s3182, 256, 512, 16
        $region60: #{tpu_custom_call.1} parent=35 // pred_fallthru
          _
      $region36: #{tpu_custom_call.1} parent=5 // pred_fallthru
        _
      %p3202 = scmp.le.s32.totalorder 2, %s17
      // Predicated region
      $region61: #{tpu_custom_call.1} parent=5 // pred_check
        %p3203 = pneg %p3202
      $region62: #{tpu_custom_call.1} parent=5 // pred_check_branch
        %3205 = sbr.rel (%p3203) target = $region64
      $region63: #{tpu_custom_call.1} parent=5 // pred_region
        %s3206 = ssub.s32 %s17, 2
        // Predicated region
        $region65: #{tpu_custom_call.1} parent=63 // pred_check
          %p3207 = pneg %p159
        $region66: #{tpu_custom_call.1} parent=63 // pred_check_branch
          %3209 = sbr.rel (%p3207) target = $region68
        $region67: #{tpu_custom_call.1} parent=63 // pred_region
          %s3210 = sand.u32 %s144, 1
          %s3211 = scalar_lea.sflag [#allocation4], %s3210
          %s3212 = sand.u32 %s144, 1
          %s3213 = smul.addr %s3212, 32
          %s3214 = scalar_lea.vmem [#allocation8], %s3213
          %3215 = dma.done %s3211, 512
        $region68: #{tpu_custom_call.1} parent=63 // pred_fallthru
          _
      $region64: #{tpu_custom_call.1} parent=5 // pred_fallthru
        _
    $region6: #{tpu_custom_call.1} parent=1 // loop_footer
      %s21 = sadd.s32 1, %s17
    $region7: #{tpu_custom_call.1} parent=1 // loop_footer_branch
      %16 = sbr.rel target = $region3
    $region8: #{tpu_custom_call.1} parent=1 // loop_exit
      _
    %3216 = vsyncpa [#allocation3], 1
    %s3217 = scalar_lea.sflag [#allocation3], 1
    %3218 = vsyncpa %s3217, 1
    %3219 = vsyncpa [#allocation6], 1
    %s3220 = scalar_lea.sflag [#allocation6], 1
    %3221 = vsyncpa %s3220, 1
    %3222 = vsyncpa [#allocation4], 1
    %s3223 = scalar_lea.sflag [#allocation4], 1
    %3224 = vsyncpa %s3223, 1

</llo_original>
